<compile_context>
chip_gen: v5e
topology: v5e:2x2
jax: 0.10.0
libtpu: 0.0.40
codegen_flags: <defaults>
</compile_context>

<pallas_src>
import functools

import jax
import jax.numpy as jnp
from jax.experimental import pallas as pl
from jax.experimental.pallas import tpu as pltpu


# ----------------------------------------------------------------------------------
# Fused kernel: one batch element per grid step, all G groups at once.
# ----------------------------------------------------------------------------------
def _maf_fused_kernel(xy_ref, smat_ref, wc_ref, bnsc_ref, bnbi_ref,
                      w1f_ref, b1f_ref, ph_ref, bh_ref, pw_ref, bw_ref,
                      gng_ref, gnb_ref, w3f_ref, b3f_ref, gsum_ref, o_ref):
    f32 = jnp.float32
    Cout, HW = o_ref.shape[1], o_ref.shape[2]

    # ---------------- stage 1: ReLU -> 3x3 conv (pad=1, no bias) -> folded BN -------
    xr = jnp.maximum(xy_ref[0], 0.0)                                # (Cin, HW), ReLU first
    conv = jnp.zeros((Cout, HW), f32)
    for k in range(9):                                              # 9 taps, all on the MXU
        shifted = jnp.dot(xr, smat_ref[k], preferred_element_type=f32)        # (Cin, HW)
        conv = conv + jnp.dot(wc_ref[k], shifted, preferred_element_type=f32)
    conv = conv * bnsc_ref[...] + bnbi_ref[...]                     # inference BatchNorm

    # ---------------- stage 2: MAF attention (all groups via block-diag matmuls) ----
    # adaptive avg-pool over W / over H, per-group 1x1 conv, sigmoid gates
    x_h = jnp.dot(conv, ph_ref[...], preferred_element_type=f32)              # (Cout, H)
    x_w = jnp.dot(conv, pw_ref[...], preferred_element_type=f32)              # (Cout, W)
    s_h = jax.nn.sigmoid(jnp.dot(w1f_ref[...], x_h, preferred_element_type=f32)
                         + b1f_ref[...])
    s_w = jax.nn.sigmoid(jnp.dot(w1f_ref[...], x_w, preferred_element_type=f32)
                         + b1f_ref[...])
    t = (conv
         * jnp.dot(s_h, bh_ref[...], preferred_element_type=f32)    # broadcast over W
         * jnp.dot(s_w, bw_ref[...], preferred_element_type=f32))   # broadcast over H

    # GroupNorm(num_groups == channels-per-group) == per-channel normalization over HW
    mu = jnp.mean(t, axis=1, keepdims=True)
    var = jnp.mean(jnp.square(t - mu), axis=1, keepdims=True)
    x1 = (t - mu) * jax.lax.rsqrt(var + 1e-5) * gng_ref[...] + gnb_ref[...]

    # grouped 3x3 conv (pad=1, with bias) on the conv output, block-diag weights
    x2 = jnp.zeros((Cout, HW), f32) + b3f_ref[...]
    for k in range(9):
        shifted = jnp.dot(conv, smat_ref[k], preferred_element_type=f32)      # (Cout, HW)
        x2 = x2 + jnp.dot(w3f_ref[k], shifted, preferred_element_type=f32)

    # channel attention: softmax over the CG channels of each group's GAP.  A softmax
    # within a group is invariant to subtracting the *global* max, so the group
    # structure is handled entirely by the block-diagonal "group sum" matmul.
    gap1 = jnp.mean(x1, axis=1, keepdims=True)                      # (Cout, 1)
    gap2 = jnp.mean(x2, axis=1, keepdims=True)
    e1 = jnp.exp(gap1 - jnp.max(gap1, axis=0, keepdims=True))
    e2 = jnp.exp(gap2 - jnp.max(gap2, axis=0, keepdims=True))
    a1 = e1 / jnp.dot(gsum_ref[...], e1, preferred_element_type=f32)
    a2 = e2 / jnp.dot(gsum_ref[...], e2, preferred_element_type=f32)
    # weights[g, hw] = sum_k a1[g,k]*x2[g*CG+k, hw] + a2[g,k]*x1[g*CG+k, hw],
    # replicated to all CG channels of the group by the same block-diag matmul.
    wmap = jnp.dot(gsum_ref[...], a1 * x2 + a2 * x1, preferred_element_type=f32)
    o_ref[0] = conv * jax.nn.sigmoid(wmap)


# ----------------------------------------------------------------------------------
# Host-side constant builders (constant-folded under jit).
# ----------------------------------------------------------------------------------
def _make_shift_mats(H, W):
    """S_k (HW, HW): (x @ S_k)[:, h*W+w] = x[:, (h+dy-1)*W + (w+dx-1)] with zero padding,
    for the 9 taps k = dy*3 + dx of a 3x3, padding-1 convolution."""
    HW = H * W
    hh, ww = jnp.meshgrid(jnp.arange(H), jnp.arange(W), indexing="ij")
    q_h = hh.reshape(-1)
    q_w = ww.reshape(-1)
    mats = []
    for dy in range(3):
        for dx in range(3):
            src_h = q_h + dy - 1
            src_w = q_w + dx - 1
            valid = ((src_h >= 0) & (src_h < H) & (src_w >= 0) & (src_w < W))
            src = jnp.clip(src_h, 0, H - 1) * W + jnp.clip(src_w, 0, W - 1)
            sel = jax.nn.one_hot(src, HW, dtype=jnp.float32) * valid[:, None].astype(jnp.float32)
            mats.append(sel.T)                      # S_k[p, q] = 1  iff  p == src(q)
    return jnp.stack(mats, axis=0)                  # (9, HW, HW)


def _make_pool_mats(H, W):
    eye_h = jnp.eye(H, dtype=jnp.float32)
    eye_w = jnp.eye(W, dtype=jnp.float32)
    bh = jnp.repeat(eye_h, W, axis=1)               # (H, HW): Bh[h, h*W+w] = 1
    bw = jnp.tile(eye_w, (1, H))                    # (W, HW): Bw[w, h*W+w] = 1
    ph = bh.T / float(W)                            # (HW, H): mean over w
    pw = bw.T / float(H)                            # (HW, W): mean over h
    return ph, bh, pw, bw


# ----------------------------------------------------------------------------------
# Wrapper
# ----------------------------------------------------------------------------------
def maf_forward(x, y, params, *, groups=8):
    """x, y: NCHW float32 (as in the PyTorch module).  Returns NCHW float32."""
    B, Cx, H, W = x.shape
    Cy = y.shape[1]
    Cin = Cx + Cy
    HW = H * W
    conv_w = params["conv_w"]                        # (Cout, Cin, 3, 3), torch layout
    Cout = conv_w.shape[0]
    G = groups
    CG = Cout // G
    assert CG > 0

    # NCHW -> (B, C, H*W) is a pure reshape: no transposes, no pads.
    xy = jnp.concatenate([x, y], axis=1).reshape(B, Cin, HW).astype(jnp.float32)

    # first conv: one (Cout, Cin) weight per 3x3 tap
    wc = jnp.transpose(conv_w, (2, 3, 0, 1)).reshape(9, Cout, Cin).astype(jnp.float32)

    # TODO(synk): BatchNorm is implemented in inference mode (folded running stats);
    # training-mode batch statistics are not modeled.
    bn_scale = params["bn_gamma"] / jnp.sqrt(params["bn_var"] + 1e-5)
    bn_bias = params["bn_beta"] - params["bn_mean"] * bn_scale
    bn_scale = bn_scale.reshape(Cout, 1).astype(jnp.float32)
    bn_bias = bn_bias.reshape(Cout, 1).astype(jnp.float32)

    # per-group ops -> block-diagonal full-channel ops (weights shared across groups)
    eye_g = jnp.eye(G, dtype=jnp.float32)
    w1f = jnp.kron(eye_g, params["w1x1"][:, :, 0, 0].astype(jnp.float32))   # (Cout, Cout)
    b1f = jnp.tile(params["b1x1"].astype(jnp.float32), G).reshape(Cout, 1)
    gng = jnp.tile(params["gn_gamma"].astype(jnp.float32), G).reshape(Cout, 1)
    gnb = jnp.tile(params["gn_beta"].astype(jnp.float32), G).reshape(Cout, 1)
    w3 = params["w3x3"].astype(jnp.float32)                                  # (CG, CG, 3, 3)
    w3f = jnp.stack([jnp.kron(eye_g, w3[:, :, dy, dx])
                     for dy in range(3) for dx in range(3)], axis=0)         # (9, Cout, Cout)
    b3f = jnp.tile(params["b3x3"].astype(jnp.float32), G).reshape(Cout, 1)
    gsum = jnp.kron(eye_g, jnp.ones((CG, CG), jnp.float32))                  # group-sum matrix

    smat = _make_shift_mats(H, W)                                            # (9, HW, HW)
    ph, bh, pw, bw = _make_pool_mats(H, W)

    const2 = lambda b: (0, 0)
    const3 = lambda b: (0, 0, 0)
    out_flat = pl.pallas_call(
        _maf_fused_kernel,
        out_shape=jax.ShapeDtypeStruct((B, Cout, HW), jnp.float32),
        grid=(B,),
        in_specs=[
            pl.BlockSpec((1, Cin, HW), lambda b: (b, 0, 0)),   # xy
            pl.BlockSpec((9, HW, HW), const3),                 # shift matrices
            pl.BlockSpec((9, Cout, Cin), const3),              # conv weights per tap
            pl.BlockSpec((Cout, 1), const2),                   # bn scale
            pl.BlockSpec((Cout, 1), const2),                   # bn bias
            pl.BlockSpec((Cout, Cout), const2),                # block-diag 1x1 weight
            pl.BlockSpec((Cout, 1), const2),                   # 1x1 bias
            pl.BlockSpec((HW, H), const2),                     # pool over W
            pl.BlockSpec((H, HW), const2),                     # broadcast over W
            pl.BlockSpec((HW, W), const2),                     # pool over H
            pl.BlockSpec((W, HW), const2),                     # broadcast over H
            pl.BlockSpec((Cout, 1), const2),                   # GroupNorm gamma
            pl.BlockSpec((Cout, 1), const2),                   # GroupNorm beta
            pl.BlockSpec((9, Cout, Cout), const3),             # block-diag 3x3 weights
            pl.BlockSpec((Cout, 1), const2),                   # 3x3 bias
            pl.BlockSpec((Cout, Cout), const2),                # group-sum matrix
        ],
        out_specs=pl.BlockSpec((1, Cout, HW), lambda b: (b, 0, 0)),
        compiler_params=pltpu.CompilerParams(
            dimension_semantics=("parallel",)),                # >=2 steps -> both TCs on v7x
    )(xy, smat, wc, bn_scale, bn_bias, w1f, b1f, ph, bh, pw, bw,
      gng, gnb, w3f, b3f, gsum)

    return out_flat.reshape(B, Cout, H, W)


# ----------------------------------------------------------------------------------
# Plain-JAX reference (mirrors the PyTorch module, BatchNorm in eval mode)
# ----------------------------------------------------------------------------------
def _maf_reference(x, y, params, *, groups):
    eps = 1e-5
    xr = jax.nn.relu(jnp.concatenate([x, y], axis=1))
    conv = jax.lax.conv_general_dilated(
        xr, params["conv_w"], (1, 1), ((1, 1), (1, 1)),
        dimension_numbers=("NCHW", "OIHW", "NCHW"))
    scale = params["bn_gamma"] / jnp.sqrt(params["bn_var"] + eps)
    shift = params["bn_beta"] - params["bn_mean"] * scale
    xbn = conv * scale[None, :, None, None] + shift[None, :, None, None]

    b, c, h, w = xbn.shape
    g = groups
    gx = xbn.reshape(b * g, c // g, h, w)
    x_h = jnp.mean(gx, axis=3, keepdims=True)
    x_w = jnp.mean(gx, axis=2, keepdims=True)
    cat = jnp.concatenate([x_h, jnp.transpose(x_w, (0, 1, 3, 2))], axis=2)
    hw = jax.lax.conv_general_dilated(
        cat, params["w1x1"], (1, 1), ((0, 0), (0, 0)),
        dimension_numbers=("NCHW", "OIHW", "NCHW")) + params["b1x1"][None, :, None, None]
    sh = jax.nn.sigmoid(hw[:, :, :h, :])
    sw = jax.nn.sigmoid(jnp.transpose(hw[:, :, h:, :], (0, 1, 3, 2)))
    t = gx * sh * sw
    mu = jnp.mean(t, axis=(2, 3), keepdims=True)
    var = jnp.mean(jnp.square(t - mu), axis=(2, 3), keepdims=True)
    x1 = (t - mu) / jnp.sqrt(var + eps)
    x1 = x1 * params["gn_gamma"][None, :, None, None] + params["gn_beta"][None, :, None, None]
    x2 = jax.lax.conv_general_dilated(
        gx, params["w3x3"], (1, 1), ((1, 1), (1, 1)),
        dimension_numbers=("NCHW", "OIHW", "NCHW")) + params["b3x3"][None, :, None, None]
    x11 = jax.nn.softmax(jnp.mean(x1, axis=(2, 3)), axis=-1)
    x21 = jax.nn.softmax(jnp.mean(x2, axis=(2, 3)), axis=-1)
    wmap = (jnp.einsum("nc,nchw->nhw", x11, x2)
            + jnp.einsum("nc,nchw->nhw", x21, x1))[:, None]
    return (gx * jax.nn.sigmoid(wmap)).reshape(b, c, h, w)


def init_params(key, cin, cout, cg):
    ks = jax.random.split(key, 11)
    return {
        "conv_w":   0.1 * jax.random.normal(ks[0], (cout, cin, 3, 3), jnp.float32),
        "bn_gamma": 1.0 + 0.1 * jax.random.normal(ks[1], (cout,), jnp.float32),
        "bn_beta":  0.1 * jax.random.normal(ks[2], (cout,), jnp.float32),
        "bn_mean":  0.1 * jax.random.normal(ks[3], (cout,), jnp.float32),
        "bn_var":   jnp.abs(1.0 + 0.1 * jax.random.normal(ks[4], (cout,), jnp.float32)),
        "w1x1":     0.2 * jax.random.normal(ks[5], (cg, cg, 1, 1), jnp.float32),
        "b1x1":     0.1 * jax.random.normal(ks[6], (cg,), jnp.float32),
        "gn_gamma": 1.0 + 0.1 * jax.random.normal(ks[7], (cg,), jnp.float32),
        "gn_beta":  0.1 * jax.random.normal(ks[8], (cg,), jnp.float32),
        "w3x3":     0.1 * jax.random.normal(ks[9], (cg, cg, 3, 3), jnp.float32),
        "b3x3":     0.1 * jax.random.normal(ks[10], (cg,), jnp.float32),
    }


if __name__ == "__main__":
    # MAF(channels=4, channels2=4, outchannels=16, factor=8) on 2x4x16x16 inputs.
    B, CX, CY, COUT, G, H, W = 2, 4, 4, 16, 8, 16, 16
    key = jax.random.PRNGKey(0)
    kx, ky, kp = jax.random.split(key, 3)
    x = jax.random.normal(kx, (B, CX, H, W), jnp.float32)
    y = jax.random.normal(ky, (B, CY, H, W), jnp.float32)
    params = init_params(kp, CX + CY, COUT, COUT // G)

    fwd = jax.jit(functools.partial(maf_forward, groups=G))
    out = jax.block_until_ready(fwd(x, y, params))

    assert out.shape == (B, COUT, H, W), out.shape
    assert bool(jnp.all(jnp.isfinite(out)))
    ref = _maf_reference(x, y, params, groups=G)
    max_err = float(jnp.max(jnp.abs(out - ref)))
    assert max_err < 2e-3, f"mismatch vs reference: {max_err}"
    print("KERNEL_OK")
</pallas_src>

<mosaic_0001>
module attributes {stable_mosaic.version = 11 : i64} {
  func.func @_maf_fused_kernel(%arg0: i32, %arg1: memref<1x8x256xf32, #tpu.memory_space<vmem>>, %arg2: memref<9x256x256xf32, #tpu.memory_space<vmem>>, %arg3: memref<9x16x8xf32, #tpu.memory_space<vmem>>, %arg4: memref<16x1xf32, #tpu.memory_space<vmem>>, %arg5: memref<16x1xf32, #tpu.memory_space<vmem>>, %arg6: memref<16x16xf32, #tpu.memory_space<vmem>>, %arg7: memref<16x1xf32, #tpu.memory_space<vmem>>, %arg8: memref<256x16xf32, #tpu.memory_space<vmem>>, %arg9: memref<16x256xf32, #tpu.memory_space<vmem>>, %arg10: memref<256x16xf32, #tpu.memory_space<vmem>>, %arg11: memref<16x256xf32, #tpu.memory_space<vmem>>, %arg12: memref<16x1xf32, #tpu.memory_space<vmem>>, %arg13: memref<16x1xf32, #tpu.memory_space<vmem>>, %arg14: memref<9x16x16xf32, #tpu.memory_space<vmem>>, %arg15: memref<16x1xf32, #tpu.memory_space<vmem>>, %arg16: memref<16x16xf32, #tpu.memory_space<vmem>>, %arg17: memref<1x16x256xf32, #tpu.memory_space<vmem>>) attributes {dimension_semantics = [#tpu.dimension_semantics<parallel>], iteration_bounds = array<i64: 2>, scalar_prefetch = 0 : i64, scratch_operands = 0 : i64, tpu.core_type = #tpu.core_type<tc>, window_params = [{transform_indices = @transform_0, window_bounds = array<i64: 1, 8, 256>}, {pipeline_mode = #tpu.pipeline_mode<synchronous>, transform_indices = @transform_1, window_bounds = array<i64: 9, 256, 256>}, {pipeline_mode = #tpu.pipeline_mode<synchronous>, transform_indices = @transform_2, window_bounds = array<i64: 9, 16, 8>}, {pipeline_mode = #tpu.pipeline_mode<synchronous>, transform_indices = @transform_3, window_bounds = array<i64: 16, 1>}, {pipeline_mode = #tpu.pipeline_mode<synchronous>, transform_indices = @transform_4, window_bounds = array<i64: 16, 1>}, {pipeline_mode = #tpu.pipeline_mode<synchronous>, transform_indices = @transform_5, window_bounds = array<i64: 16, 16>}, {pipeline_mode = #tpu.pipeline_mode<synchronous>, transform_indices = @transform_6, window_bounds = array<i64: 16, 1>}, {pipeline_mode = #tpu.pipeline_mode<synchronous>, transform_indices = @transform_7, window_bounds = array<i64: 256, 16>}, {pipeline_mode = #tpu.pipeline_mode<synchronous>, transform_indices = @transform_8, window_bounds = array<i64: 16, 256>}, {pipeline_mode = #tpu.pipeline_mode<synchronous>, transform_indices = @transform_9, window_bounds = array<i64: 256, 16>}, {pipeline_mode = #tpu.pipeline_mode<synchronous>, transform_indices = @transform_10, window_bounds = array<i64: 16, 256>}, {pipeline_mode = #tpu.pipeline_mode<synchronous>, transform_indices = @transform_11, window_bounds = array<i64: 16, 1>}, {pipeline_mode = #tpu.pipeline_mode<synchronous>, transform_indices = @transform_12, window_bounds = array<i64: 16, 1>}, {pipeline_mode = #tpu.pipeline_mode<synchronous>, transform_indices = @transform_13, window_bounds = array<i64: 9, 16, 16>}, {pipeline_mode = #tpu.pipeline_mode<synchronous>, transform_indices = @transform_14, window_bounds = array<i64: 16, 1>}, {pipeline_mode = #tpu.pipeline_mode<synchronous>, transform_indices = @transform_15, window_bounds = array<i64: 16, 16>}, {transform_indices = @transform_16, window_bounds = array<i64: 1, 16, 256>}]} {
    %c0 = arith.constant 0 : index
    %c0_0 = arith.constant 0 : index
    %c0_1 = arith.constant 0 : index
    %0 = vector.load %arg1[%c0, %c0_0, %c0_1] : memref<1x8x256xf32, #tpu.memory_space<vmem>>, vector<1x8x256xf32>
    %1 = vector.shape_cast %0 : vector<1x8x256xf32> to vector<8x256xf32>
    %cst = arith.constant 0.000000e+00 : f32
    %2 = vector.broadcast %cst : f32 to vector<8x256xf32>
    %3 = arith.maximumf %1, %2 : vector<8x256xf32>
    %cst_2 = arith.constant 0.000000e+00 : f32
    %4 = vector.broadcast %cst_2 : f32 to vector<16x256xf32>
    %c0_3 = arith.constant 0 : index
    %c0_4 = arith.constant 0 : index
    %c0_5 = arith.constant 0 : index
    %5 = vector.load %arg2[%c0_3, %c0_4, %c0_5] : memref<9x256x256xf32, #tpu.memory_space<vmem>>, vector<1x256x256xf32>
    %6 = vector.shape_cast %5 : vector<1x256x256xf32> to vector<256x256xf32>
    %cst_6 = arith.constant dense<0.000000e+00> : vector<8x256xf32>
    %7 = tpu.matmul %3, %6, %cst_6 {dimension_numbers = #tpu.dot_dimension_numbers<[1], [0], [0], [1], [0, 0, 1, 1], [], []>} : vector<8x256xf32>, vector<256x256xf32>, vector<8x256xf32> -> vector<8x256xf32>
    %c0_7 = arith.constant 0 : index
    %c0_8 = arith.constant 0 : index
    %c0_9 = arith.constant 0 : index
    %8 = vector.load %arg3[%c0_7, %c0_8, %c0_9] : memref<9x16x8xf32, #tpu.memory_space<vmem>>, vector<1x16x8xf32>
    %9 = vector.shape_cast %8 : vector<1x16x8xf32> to vector<16x8xf32>
    %cst_10 = arith.constant dense<0.000000e+00> : vector<16x256xf32>
    %10 = tpu.matmul %9, %7, %cst_10 {dimension_numbers = #tpu.dot_dimension_numbers<[1], [0], [0], [1], [0, 0, 1, 1], [], []>} : vector<16x8xf32>, vector<8x256xf32>, vector<16x256xf32> -> vector<16x256xf32>
    %11 = arith.addf %4, %10 : vector<16x256xf32>
    %c1 = arith.constant 1 : index
    %c0_11 = arith.constant 0 : index
    %c0_12 = arith.constant 0 : index
    %12 = vector.load %arg2[%c1, %c0_11, %c0_12] : memref<9x256x256xf32, #tpu.memory_space<vmem>>, vector<1x256x256xf32>
    %13 = vector.shape_cast %12 : vector<1x256x256xf32> to vector<256x256xf32>
    %cst_13 = arith.constant dense<0.000000e+00> : vector<8x256xf32>
    %14 = tpu.matmul %3, %13, %cst_13 {dimension_numbers = #tpu.dot_dimension_numbers<[1], [0], [0], [1], [0, 0, 1, 1], [], []>} : vector<8x256xf32>, vector<256x256xf32>, vector<8x256xf32> -> vector<8x256xf32>
    %c1_14 = arith.constant 1 : index
    %c0_15 = arith.constant 0 : index
    %c0_16 = arith.constant 0 : index
    %15 = vector.load %arg3[%c1_14, %c0_15, %c0_16] : memref<9x16x8xf32, #tpu.memory_space<vmem>>, vector<1x16x8xf32>
    %16 = vector.shape_cast %15 : vector<1x16x8xf32> to vector<16x8xf32>
    %cst_17 = arith.constant dense<0.000000e+00> : vector<16x256xf32>
    %17 = tpu.matmul %16, %14, %cst_17 {dimension_numbers = #tpu.dot_dimension_numbers<[1], [0], [0], [1], [0, 0, 1, 1], [], []>} : vector<16x8xf32>, vector<8x256xf32>, vector<16x256xf32> -> vector<16x256xf32>
    %18 = arith.addf %11, %17 : vector<16x256xf32>
    %c2 = arith.constant 2 : index
    %c0_18 = arith.constant 0 : index
    %c0_19 = arith.constant 0 : index
    %19 = vector.load %arg2[%c2, %c0_18, %c0_19] : memref<9x256x256xf32, #tpu.memory_space<vmem>>, vector<1x256x256xf32>
    %20 = vector.shape_cast %19 : vector<1x256x256xf32> to vector<256x256xf32>
    %cst_20 = arith.constant dense<0.000000e+00> : vector<8x256xf32>
    %21 = tpu.matmul %3, %20, %cst_20 {dimension_numbers = #tpu.dot_dimension_numbers<[1], [0], [0], [1], [0, 0, 1, 1], [], []>} : vector<8x256xf32>, vector<256x256xf32>, vector<8x256xf32> -> vector<8x256xf32>
    %c2_21 = arith.constant 2 : index
    %c0_22 = arith.constant 0 : index
    %c0_23 = arith.constant 0 : index
    %22 = vector.load %arg3[%c2_21, %c0_22, %c0_23] : memref<9x16x8xf32, #tpu.memory_space<vmem>>, vector<1x16x8xf32>
    %23 = vector.shape_cast %22 : vector<1x16x8xf32> to vector<16x8xf32>
    %cst_24 = arith.constant dense<0.000000e+00> : vector<16x256xf32>
    %24 = tpu.matmul %23, %21, %cst_24 {dimension_numbers = #tpu.dot_dimension_numbers<[1], [0], [0], [1], [0, 0, 1, 1], [], []>} : vector<16x8xf32>, vector<8x256xf32>, vector<16x256xf32> -> vector<16x256xf32>
    %25 = arith.addf %18, %24 : vector<16x256xf32>
    %c3 = arith.constant 3 : index
    %c0_25 = arith.constant 0 : index
    %c0_26 = arith.constant 0 : index
    %26 = vector.load %arg2[%c3, %c0_25, %c0_26] : memref<9x256x256xf32, #tpu.memory_space<vmem>>, vector<1x256x256xf32>
    %27 = vector.shape_cast %26 : vector<1x256x256xf32> to vector<256x256xf32>
    %cst_27 = arith.constant dense<0.000000e+00> : vector<8x256xf32>
    %28 = tpu.matmul %3, %27, %cst_27 {dimension_numbers = #tpu.dot_dimension_numbers<[1], [0], [0], [1], [0, 0, 1, 1], [], []>} : vector<8x256xf32>, vector<256x256xf32>, vector<8x256xf32> -> vector<8x256xf32>
    %c3_28 = arith.constant 3 : index
    %c0_29 = arith.constant 0 : index
    %c0_30 = arith.constant 0 : index
    %29 = vector.load %arg3[%c3_28, %c0_29, %c0_30] : memref<9x16x8xf32, #tpu.memory_space<vmem>>, vector<1x16x8xf32>
    %30 = vector.shape_cast %29 : vector<1x16x8xf32> to vector<16x8xf32>
    %cst_31 = arith.constant dense<0.000000e+00> : vector<16x256xf32>
    %31 = tpu.matmul %30, %28, %cst_31 {dimension_numbers = #tpu.dot_dimension_numbers<[1], [0], [0], [1], [0, 0, 1, 1], [], []>} : vector<16x8xf32>, vector<8x256xf32>, vector<16x256xf32> -> vector<16x256xf32>
    %32 = arith.addf %25, %31 : vector<16x256xf32>
    %c4 = arith.constant 4 : index
    %c0_32 = arith.constant 0 : index
    %c0_33 = arith.constant 0 : index
    %33 = vector.load %arg2[%c4, %c0_32, %c0_33] : memref<9x256x256xf32, #tpu.memory_space<vmem>>, vector<1x256x256xf32>
    %34 = vector.shape_cast %33 : vector<1x256x256xf32> to vector<256x256xf32>
    %cst_34 = arith.constant dense<0.000000e+00> : vector<8x256xf32>
    %35 = tpu.matmul %3, %34, %cst_34 {dimension_numbers = #tpu.dot_dimension_numbers<[1], [0], [0], [1], [0, 0, 1, 1], [], []>} : vector<8x256xf32>, vector<256x256xf32>, vector<8x256xf32> -> vector<8x256xf32>
    %c4_35 = arith.constant 4 : index
    %c0_36 = arith.constant 0 : index
    %c0_37 = arith.constant 0 : index
    %36 = vector.load %arg3[%c4_35, %c0_36, %c0_37] : memref<9x16x8xf32, #tpu.memory_space<vmem>>, vector<1x16x8xf32>
    %37 = vector.shape_cast %36 : vector<1x16x8xf32> to vector<16x8xf32>
    %cst_38 = arith.constant dense<0.000000e+00> : vector<16x256xf32>
    %38 = tpu.matmul %37, %35, %cst_38 {dimension_numbers = #tpu.dot_dimension_numbers<[1], [0], [0], [1], [0, 0, 1, 1], [], []>} : vector<16x8xf32>, vector<8x256xf32>, vector<16x256xf32> -> vector<16x256xf32>
    %39 = arith.addf %32, %38 : vector<16x256xf32>
    %c5 = arith.constant 5 : index
    %c0_39 = arith.constant 0 : index
    %c0_40 = arith.constant 0 : index
    %40 = vector.load %arg2[%c5, %c0_39, %c0_40] : memref<9x256x256xf32, #tpu.memory_space<vmem>>, vector<1x256x256xf32>
    %41 = vector.shape_cast %40 : vector<1x256x256xf32> to vector<256x256xf32>
    %cst_41 = arith.constant dense<0.000000e+00> : vector<8x256xf32>
    %42 = tpu.matmul %3, %41, %cst_41 {dimension_numbers = #tpu.dot_dimension_numbers<[1], [0], [0], [1], [0, 0, 1, 1], [], []>} : vector<8x256xf32>, vector<256x256xf32>, vector<8x256xf32> -> vector<8x256xf32>
    %c5_42 = arith.constant 5 : index
    %c0_43 = arith.constant 0 : index
    %c0_44 = arith.constant 0 : index
    %43 = vector.load %arg3[%c5_42, %c0_43, %c0_44] : memref<9x16x8xf32, #tpu.memory_space<vmem>>, vector<1x16x8xf32>
    %44 = vector.shape_cast %43 : vector<1x16x8xf32> to vector<16x8xf32>
    %cst_45 = arith.constant dense<0.000000e+00> : vector<16x256xf32>
    %45 = tpu.matmul %44, %42, %cst_45 {dimension_numbers = #tpu.dot_dimension_numbers<[1], [0], [0], [1], [0, 0, 1, 1], [], []>} : vector<16x8xf32>, vector<8x256xf32>, vector<16x256xf32> -> vector<16x256xf32>
    %46 = arith.addf %39, %45 : vector<16x256xf32>
    %c6 = arith.constant 6 : index
    %c0_46 = arith.constant 0 : index
    %c0_47 = arith.constant 0 : index
    %47 = vector.load %arg2[%c6, %c0_46, %c0_47] : memref<9x256x256xf32, #tpu.memory_space<vmem>>, vector<1x256x256xf32>
    %48 = vector.shape_cast %47 : vector<1x256x256xf32> to vector<256x256xf32>
    %cst_48 = arith.constant dense<0.000000e+00> : vector<8x256xf32>
    %49 = tpu.matmul %3, %48, %cst_48 {dimension_numbers = #tpu.dot_dimension_numbers<[1], [0], [0], [1], [0, 0, 1, 1], [], []>} : vector<8x256xf32>, vector<256x256xf32>, vector<8x256xf32> -> vector<8x256xf32>
    %c6_49 = arith.constant 6 : index
    %c0_50 = arith.constant 0 : index
    %c0_51 = arith.constant 0 : index
    %50 = vector.load %arg3[%c6_49, %c0_50, %c0_51] : memref<9x16x8xf32, #tpu.memory_space<vmem>>, vector<1x16x8xf32>
    %51 = vector.shape_cast %50 : vector<1x16x8xf32> to vector<16x8xf32>
    %cst_52 = arith.constant dense<0.000000e+00> : vector<16x256xf32>
    %52 = tpu.matmul %51, %49, %cst_52 {dimension_numbers = #tpu.dot_dimension_numbers<[1], [0], [0], [1], [0, 0, 1, 1], [], []>} : vector<16x8xf32>, vector<8x256xf32>, vector<16x256xf32> -> vector<16x256xf32>
    %53 = arith.addf %46, %52 : vector<16x256xf32>
    %c7 = arith.constant 7 : index
    %c0_53 = arith.constant 0 : index
    %c0_54 = arith.constant 0 : index
    %54 = vector.load %arg2[%c7, %c0_53, %c0_54] : memref<9x256x256xf32, #tpu.memory_space<vmem>>, vector<1x256x256xf32>
    %55 = vector.shape_cast %54 : vector<1x256x256xf32> to vector<256x256xf32>
    %cst_55 = arith.constant dense<0.000000e+00> : vector<8x256xf32>
    %56 = tpu.matmul %3, %55, %cst_55 {dimension_numbers = #tpu.dot_dimension_numbers<[1], [0], [0], [1], [0, 0, 1, 1], [], []>} : vector<8x256xf32>, vector<256x256xf32>, vector<8x256xf32> -> vector<8x256xf32>
    %c7_56 = arith.constant 7 : index
    %c0_57 = arith.constant 0 : index
    %c0_58 = arith.constant 0 : index
    %57 = vector.load %arg3[%c7_56, %c0_57, %c0_58] : memref<9x16x8xf32, #tpu.memory_space<vmem>>, vector<1x16x8xf32>
    %58 = vector.shape_cast %57 : vector<1x16x8xf32> to vector<16x8xf32>
    %cst_59 = arith.constant dense<0.000000e+00> : vector<16x256xf32>
    %59 = tpu.matmul %58, %56, %cst_59 {dimension_numbers = #tpu.dot_dimension_numbers<[1], [0], [0], [1], [0, 0, 1, 1], [], []>} : vector<16x8xf32>, vector<8x256xf32>, vector<16x256xf32> -> vector<16x256xf32>
    %60 = arith.addf %53, %59 : vector<16x256xf32>
    %c8 = arith.constant 8 : index
    %c0_60 = arith.constant 0 : index
    %c0_61 = arith.constant 0 : index
    %61 = vector.load %arg2[%c8, %c0_60, %c0_61] : memref<9x256x256xf32, #tpu.memory_space<vmem>>, vector<1x256x256xf32>
    %62 = vector.shape_cast %61 : vector<1x256x256xf32> to vector<256x256xf32>
    %cst_62 = arith.constant dense<0.000000e+00> : vector<8x256xf32>
    %63 = tpu.matmul %3, %62, %cst_62 {dimension_numbers = #tpu.dot_dimension_numbers<[1], [0], [0], [1], [0, 0, 1, 1], [], []>} : vector<8x256xf32>, vector<256x256xf32>, vector<8x256xf32> -> vector<8x256xf32>
    %c8_63 = arith.constant 8 : index
    %c0_64 = arith.constant 0 : index
    %c0_65 = arith.constant 0 : index
    %64 = vector.load %arg3[%c8_63, %c0_64, %c0_65] : memref<9x16x8xf32, #tpu.memory_space<vmem>>, vector<1x16x8xf32>
    %65 = vector.shape_cast %64 : vector<1x16x8xf32> to vector<16x8xf32>
    %cst_66 = arith.constant dense<0.000000e+00> : vector<16x256xf32>
    %66 = tpu.matmul %65, %63, %cst_66 {dimension_numbers = #tpu.dot_dimension_numbers<[1], [0], [0], [1], [0, 0, 1, 1], [], []>} : vector<16x8xf32>, vector<8x256xf32>, vector<16x256xf32> -> vector<16x256xf32>
    %67 = arith.addf %60, %66 : vector<16x256xf32>
    %c0_67 = arith.constant 0 : index
    %c0_68 = arith.constant 0 : index
    %68 = vector.load %arg4[%c0_67, %c0_68] : memref<16x1xf32, #tpu.memory_space<vmem>>, vector<16x1xf32>
    %69 = vector.broadcast %68 : vector<16x1xf32> to vector<16x256xf32>
    %70 = arith.mulf %67, %69 : vector<16x256xf32>
    %c0_69 = arith.constant 0 : index
    %c0_70 = arith.constant 0 : index
    %71 = vector.load %arg5[%c0_69, %c0_70] : memref<16x1xf32, #tpu.memory_space<vmem>>, vector<16x1xf32>
    %72 = vector.broadcast %71 : vector<16x1xf32> to vector<16x256xf32>
    %73 = arith.addf %70, %72 : vector<16x256xf32>
    %c0_71 = arith.constant 0 : index
    %c0_72 = arith.constant 0 : index
    %74 = vector.load %arg8[%c0_71, %c0_72] : memref<256x16xf32, #tpu.memory_space<vmem>>, vector<256x16xf32>
    %cst_73 = arith.constant dense<0.000000e+00> : vector<16x16xf32>
    %75 = tpu.matmul %73, %74, %cst_73 {dimension_numbers = #tpu.dot_dimension_numbers<[1], [0], [0], [1], [0, 0, 1, 1], [], []>} : vector<16x256xf32>, vector<256x16xf32>, vector<16x16xf32> -> vector<16x16xf32>
    %c0_74 = arith.constant 0 : index
    %c0_75 = arith.constant 0 : index
    %76 = vector.load %arg10[%c0_74, %c0_75] : memref<256x16xf32, #tpu.memory_space<vmem>>, vector<256x16xf32>
    %cst_76 = arith.constant dense<0.000000e+00> : vector<16x16xf32>
    %77 = tpu.matmul %73, %76, %cst_76 {dimension_numbers = #tpu.dot_dimension_numbers<[1], [0], [0], [1], [0, 0, 1, 1], [], []>} : vector<16x256xf32>, vector<256x16xf32>, vector<16x16xf32> -> vector<16x16xf32>
    %c0_77 = arith.constant 0 : index
    %c0_78 = arith.constant 0 : index
    %78 = vector.load %arg6[%c0_77, %c0_78] : memref<16x16xf32, #tpu.memory_space<vmem>>, vector<16x16xf32>
    %cst_79 = arith.constant dense<0.000000e+00> : vector<16x16xf32>
    %79 = tpu.matmul %78, %75, %cst_79 {dimension_numbers = #tpu.dot_dimension_numbers<[1], [0], [0], [1], [0, 0, 1, 1], [], []>} : vector<16x16xf32>, vector<16x16xf32>, vector<16x16xf32> -> vector<16x16xf32>
    %c0_80 = arith.constant 0 : index
    %c0_81 = arith.constant 0 : index
    %80 = vector.load %arg7[%c0_80, %c0_81] : memref<16x1xf32, #tpu.memory_space<vmem>>, vector<16x1xf32>
    %81 = vector.broadcast %80 : vector<16x1xf32> to vector<16x16xf32>
    %82 = arith.addf %79, %81 : vector<16x16xf32>
    %83 = arith.negf %82 : vector<16x16xf32>
    %84 = math.exp %83 : vector<16x16xf32>
    %cst_82 = arith.constant 1.000000e+00 : f32
    %85 = vector.broadcast %cst_82 : f32 to vector<16x16xf32>
    %86 = arith.addf %85, %84 : vector<16x16xf32>
    %87 = arith.divf %85, %86 : vector<16x16xf32>
    %c0_83 = arith.constant 0 : index
    %c0_84 = arith.constant 0 : index
    %88 = vector.load %arg6[%c0_83, %c0_84] : memref<16x16xf32, #tpu.memory_space<vmem>>, vector<16x16xf32>
    %cst_85 = arith.constant dense<0.000000e+00> : vector<16x16xf32>
    %89 = tpu.matmul %88, %77, %cst_85 {dimension_numbers = #tpu.dot_dimension_numbers<[1], [0], [0], [1], [0, 0, 1, 1], [], []>} : vector<16x16xf32>, vector<16x16xf32>, vector<16x16xf32> -> vector<16x16xf32>
    %c0_86 = arith.constant 0 : index
    %c0_87 = arith.constant 0 : index
    %90 = vector.load %arg7[%c0_86, %c0_87] : memref<16x1xf32, #tpu.memory_space<vmem>>, vector<16x1xf32>
    %91 = vector.broadcast %90 : vector<16x1xf32> to vector<16x16xf32>
    %92 = arith.addf %89, %91 : vector<16x16xf32>
    %93 = arith.negf %92 : vector<16x16xf32>
    %94 = math.exp %93 : vector<16x16xf32>
    %cst_88 = arith.constant 1.000000e+00 : f32
    %95 = vector.broadcast %cst_88 : f32 to vector<16x16xf32>
    %96 = arith.addf %95, %94 : vector<16x16xf32>
    %97 = arith.divf %95, %96 : vector<16x16xf32>
    %c0_89 = arith.constant 0 : index
    %c0_90 = arith.constant 0 : index
    %98 = vector.load %arg9[%c0_89, %c0_90] : memref<16x256xf32, #tpu.memory_space<vmem>>, vector<16x256xf32>
    %cst_91 = arith.constant dense<0.000000e+00> : vector<16x256xf32>
    %99 = tpu.matmul %87, %98, %cst_91 {dimension_numbers = #tpu.dot_dimension_numbers<[1], [0], [0], [1], [0, 0, 1, 1], [], []>} : vector<16x16xf32>, vector<16x256xf32>, vector<16x256xf32> -> vector<16x256xf32>
    %100 = arith.mulf %73, %99 : vector<16x256xf32>
    %c0_92 = arith.constant 0 : index
    %c0_93 = arith.constant 0 : index
    %101 = vector.load %arg11[%c0_92, %c0_93] : memref<16x256xf32, #tpu.memory_space<vmem>>, vector<16x256xf32>
    %cst_94 = arith.constant dense<0.000000e+00> : vector<16x256xf32>
    %102 = tpu.matmul %97, %101, %cst_94 {dimension_numbers = #tpu.dot_dimension_numbers<[1], [0], [0], [1], [0, 0, 1, 1], [], []>} : vector<16x16xf32>, vector<16x256xf32>, vector<16x256xf32> -> vector<16x256xf32>
    %103 = arith.mulf %100, %102 : vector<16x256xf32>
    %cst_95 = arith.constant dense<0.000000e+00> : vector<16xf32>
    %104 = vector.multi_reduction <add>, %103, %cst_95 [1] : vector<16x256xf32> to vector<16xf32>
    %105 = vector.shape_cast %104 : vector<16xf32> to vector<16x1xf32>
    %cst_96 = arith.constant 2.560000e+02 : f32
    %106 = vector.broadcast %cst_96 : f32 to vector<16x1xf32>
    %107 = arith.divf %105, %106 : vector<16x1xf32>
    %108 = vector.broadcast %107 : vector<16x1xf32> to vector<16x256xf32>
    %109 = arith.subf %103, %108 : vector<16x256xf32>
    %110 = arith.mulf %109, %109 : vector<16x256xf32>
    %cst_97 = arith.constant dense<0.000000e+00> : vector<16xf32>
    %111 = vector.multi_reduction <add>, %110, %cst_97 [1] : vector<16x256xf32> to vector<16xf32>
    %112 = vector.shape_cast %111 : vector<16xf32> to vector<16x1xf32>
    %cst_98 = arith.constant 2.560000e+02 : f32
    %113 = vector.broadcast %cst_98 : f32 to vector<16x1xf32>
    %114 = arith.divf %112, %113 : vector<16x1xf32>
    %115 = vector.broadcast %107 : vector<16x1xf32> to vector<16x256xf32>
    %116 = arith.subf %103, %115 : vector<16x256xf32>
    %cst_99 = arith.constant 9.99999974E-6 : f32
    %117 = vector.broadcast %cst_99 : f32 to vector<16x1xf32>
    %118 = arith.addf %114, %117 : vector<16x1xf32>
    %119 = math.rsqrt %118 : vector<16x1xf32>
    %120 = vector.broadcast %119 : vector<16x1xf32> to vector<16x256xf32>
    %121 = arith.mulf %116, %120 : vector<16x256xf32>
    %c0_100 = arith.constant 0 : index
    %c0_101 = arith.constant 0 : index
    %122 = vector.load %arg12[%c0_100, %c0_101] : memref<16x1xf32, #tpu.memory_space<vmem>>, vector<16x1xf32>
    %123 = vector.broadcast %122 : vector<16x1xf32> to vector<16x256xf32>
    %124 = arith.mulf %121, %123 : vector<16x256xf32>
    %c0_102 = arith.constant 0 : index
    %c0_103 = arith.constant 0 : index
    %125 = vector.load %arg13[%c0_102, %c0_103] : memref<16x1xf32, #tpu.memory_space<vmem>>, vector<16x1xf32>
    %126 = vector.broadcast %125 : vector<16x1xf32> to vector<16x256xf32>
    %127 = arith.addf %124, %126 : vector<16x256xf32>
    %cst_104 = arith.constant 0.000000e+00 : f32
    %128 = vector.broadcast %cst_104 : f32 to vector<16x256xf32>
    %c0_105 = arith.constant 0 : index
    %c0_106 = arith.constant 0 : index
    %129 = vector.load %arg15[%c0_105, %c0_106] : memref<16x1xf32, #tpu.memory_space<vmem>>, vector<16x1xf32>
    %130 = vector.broadcast %129 : vector<16x1xf32> to vector<16x256xf32>
    %131 = arith.addf %128, %130 : vector<16x256xf32>
    %c0_107 = arith.constant 0 : index
    %c0_108 = arith.constant 0 : index
    %c0_109 = arith.constant 0 : index
    %132 = vector.load %arg2[%c0_107, %c0_108, %c0_109] : memref<9x256x256xf32, #tpu.memory_space<vmem>>, vector<1x256x256xf32>
    %133 = vector.shape_cast %132 : vector<1x256x256xf32> to vector<256x256xf32>
    %cst_110 = arith.constant dense<0.000000e+00> : vector<16x256xf32>
    %134 = tpu.matmul %73, %133, %cst_110 {dimension_numbers = #tpu.dot_dimension_numbers<[1], [0], [0], [1], [0, 0, 1, 1], [], []>} : vector<16x256xf32>, vector<256x256xf32>, vector<16x256xf32> -> vector<16x256xf32>
    %c0_111 = arith.constant 0 : index
    %c0_112 = arith.constant 0 : index
    %c0_113 = arith.constant 0 : index
    %135 = vector.load %arg14[%c0_111, %c0_112, %c0_113] : memref<9x16x16xf32, #tpu.memory_space<vmem>>, vector<1x16x16xf32>
    %136 = vector.shape_cast %135 : vector<1x16x16xf32> to vector<16x16xf32>
    %cst_114 = arith.constant dense<0.000000e+00> : vector<16x256xf32>
    %137 = tpu.matmul %136, %134, %cst_114 {dimension_numbers = #tpu.dot_dimension_numbers<[1], [0], [0], [1], [0, 0, 1, 1], [], []>} : vector<16x16xf32>, vector<16x256xf32>, vector<16x256xf32> -> vector<16x256xf32>
    %138 = arith.addf %131, %137 : vector<16x256xf32>
    %c1_115 = arith.constant 1 : index
    %c0_116 = arith.constant 0 : index
    %c0_117 = arith.constant 0 : index
    %139 = vector.load %arg2[%c1_115, %c0_116, %c0_117] : memref<9x256x256xf32, #tpu.memory_space<vmem>>, vector<1x256x256xf32>
    %140 = vector.shape_cast %139 : vector<1x256x256xf32> to vector<256x256xf32>
    %cst_118 = arith.constant dense<0.000000e+00> : vector<16x256xf32>
    %141 = tpu.matmul %73, %140, %cst_118 {dimension_numbers = #tpu.dot_dimension_numbers<[1], [0], [0], [1], [0, 0, 1, 1], [], []>} : vector<16x256xf32>, vector<256x256xf32>, vector<16x256xf32> -> vector<16x256xf32>
    %c1_119 = arith.constant 1 : index
    %c0_120 = arith.constant 0 : index
    %c0_121 = arith.constant 0 : index
    %142 = vector.load %arg14[%c1_119, %c0_120, %c0_121] : memref<9x16x16xf32, #tpu.memory_space<vmem>>, vector<1x16x16xf32>
    %143 = vector.shape_cast %142 : vector<1x16x16xf32> to vector<16x16xf32>
    %cst_122 = arith.constant dense<0.000000e+00> : vector<16x256xf32>
    %144 = tpu.matmul %143, %141, %cst_122 {dimension_numbers = #tpu.dot_dimension_numbers<[1], [0], [0], [1], [0, 0, 1, 1], [], []>} : vector<16x16xf32>, vector<16x256xf32>, vector<16x256xf32> -> vector<16x256xf32>
    %145 = arith.addf %138, %144 : vector<16x256xf32>
    %c2_123 = arith.constant 2 : index
    %c0_124 = arith.constant 0 : index
    %c0_125 = arith.constant 0 : index
    %146 = vector.load %arg2[%c2_123, %c0_124, %c0_125] : memref<9x256x256xf32, #tpu.memory_space<vmem>>, vector<1x256x256xf32>
    %147 = vector.shape_cast %146 : vector<1x256x256xf32> to vector<256x256xf32>
    %cst_126 = arith.constant dense<0.000000e+00> : vector<16x256xf32>
    %148 = tpu.matmul %73, %147, %cst_126 {dimension_numbers = #tpu.dot_dimension_numbers<[1], [0], [0], [1], [0, 0, 1, 1], [], []>} : vector<16x256xf32>, vector<256x256xf32>, vector<16x256xf32> -> vector<16x256xf32>
    %c2_127 = arith.constant 2 : index
    %c0_128 = arith.constant 0 : index
    %c0_129 = arith.constant 0 : index
    %149 = vector.load %arg14[%c2_127, %c0_128, %c0_129] : memref<9x16x16xf32, #tpu.memory_space<vmem>>, vector<1x16x16xf32>
    %150 = vector.shape_cast %149 : vector<1x16x16xf32> to vector<16x16xf32>
    %cst_130 = arith.constant dense<0.000000e+00> : vector<16x256xf32>
    %151 = tpu.matmul %150, %148, %cst_130 {dimension_numbers = #tpu.dot_dimension_numbers<[1], [0], [0], [1], [0, 0, 1, 1], [], []>} : vector<16x16xf32>, vector<16x256xf32>, vector<16x256xf32> -> vector<16x256xf32>
    %152 = arith.addf %145, %151 : vector<16x256xf32>
    %c3_131 = arith.constant 3 : index
    %c0_132 = arith.constant 0 : index
    %c0_133 = arith.constant 0 : index
    %153 = vector.load %arg2[%c3_131, %c0_132, %c0_133] : memref<9x256x256xf32, #tpu.memory_space<vmem>>, vector<1x256x256xf32>
    %154 = vector.shape_cast %153 : vector<1x256x256xf32> to vector<256x256xf32>
    %cst_134 = arith.constant dense<0.000000e+00> : vector<16x256xf32>
    %155 = tpu.matmul %73, %154, %cst_134 {dimension_numbers = #tpu.dot_dimension_numbers<[1], [0], [0], [1], [0, 0, 1, 1], [], []>} : vector<16x256xf32>, vector<256x256xf32>, vector<16x256xf32> -> vector<16x256xf32>
    %c3_135 = arith.constant 3 : index
    %c0_136 = arith.constant 0 : index
    %c0_137 = arith.constant 0 : index
    %156 = vector.load %arg14[%c3_135, %c0_136, %c0_137] : memref<9x16x16xf32, #tpu.memory_space<vmem>>, vector<1x16x16xf32>
    %157 = vector.shape_cast %156 : vector<1x16x16xf32> to vector<16x16xf32>
    %cst_138 = arith.constant dense<0.000000e+00> : vector<16x256xf32>
    %158 = tpu.matmul %157, %155, %cst_138 {dimension_numbers = #tpu.dot_dimension_numbers<[1], [0], [0], [1], [0, 0, 1, 1], [], []>} : vector<16x16xf32>, vector<16x256xf32>, vector<16x256xf32> -> vector<16x256xf32>
    %159 = arith.addf %152, %158 : vector<16x256xf32>
    %c4_139 = arith.constant 4 : index
    %c0_140 = arith.constant 0 : index
    %c0_141 = arith.constant 0 : index
    %160 = vector.load %arg2[%c4_139, %c0_140, %c0_141] : memref<9x256x256xf32, #tpu.memory_space<vmem>>, vector<1x256x256xf32>
    %161 = vector.shape_cast %160 : vector<1x256x256xf32> to vector<256x256xf32>
    %cst_142 = arith.constant dense<0.000000e+00> : vector<16x256xf32>
    %162 = tpu.matmul %73, %161, %cst_142 {dimension_numbers = #tpu.dot_dimension_numbers<[1], [0], [0], [1], [0, 0, 1, 1], [], []>} : vector<16x256xf32>, vector<256x256xf32>, vector<16x256xf32> -> vector<16x256xf32>
    %c4_143 = arith.constant 4 : index
    %c0_144 = arith.constant 0 : index
    %c0_145 = arith.constant 0 : index
    %163 = vector.load %arg14[%c4_143, %c0_144, %c0_145] : memref<9x16x16xf32, #tpu.memory_space<vmem>>, vector<1x16x16xf32>
    %164 = vector.shape_cast %163 : vector<1x16x16xf32> to vector<16x16xf32>
    %cst_146 = arith.constant dense<0.000000e+00> : vector<16x256xf32>
    %165 = tpu.matmul %164, %162, %cst_146 {dimension_numbers = #tpu.dot_dimension_numbers<[1], [0], [0], [1], [0, 0, 1, 1], [], []>} : vector<16x16xf32>, vector<16x256xf32>, vector<16x256xf32> -> vector<16x256xf32>
    %166 = arith.addf %159, %165 : vector<16x256xf32>
    %c5_147 = arith.constant 5 : index
    %c0_148 = arith.constant 0 : index
    %c0_149 = arith.constant 0 : index
    %167 = vector.load %arg2[%c5_147, %c0_148, %c0_149] : memref<9x256x256xf32, #tpu.memory_space<vmem>>, vector<1x256x256xf32>
    %168 = vector.shape_cast %167 : vector<1x256x256xf32> to vector<256x256xf32>
    %cst_150 = arith.constant dense<0.000000e+00> : vector<16x256xf32>
    %169 = tpu.matmul %73, %168, %cst_150 {dimension_numbers = #tpu.dot_dimension_numbers<[1], [0], [0], [1], [0, 0, 1, 1], [], []>} : vector<16x256xf32>, vector<256x256xf32>, vector<16x256xf32> -> vector<16x256xf32>
    %c5_151 = arith.constant 5 : index
    %c0_152 = arith.constant 0 : index
    %c0_153 = arith.constant 0 : index
    %170 = vector.load %arg14[%c5_151, %c0_152, %c0_153] : memref<9x16x16xf32, #tpu.memory_space<vmem>>, vector<1x16x16xf32>
    %171 = vector.shape_cast %170 : vector<1x16x16xf32> to vector<16x16xf32>
    %cst_154 = arith.constant dense<0.000000e+00> : vector<16x256xf32>
    %172 = tpu.matmul %171, %169, %cst_154 {dimension_numbers = #tpu.dot_dimension_numbers<[1], [0], [0], [1], [0, 0, 1, 1], [], []>} : vector<16x16xf32>, vector<16x256xf32>, vector<16x256xf32> -> vector<16x256xf32>
    %173 = arith.addf %166, %172 : vector<16x256xf32>
    %c6_155 = arith.constant 6 : index
    %c0_156 = arith.constant 0 : index
    %c0_157 = arith.constant 0 : index
    %174 = vector.load %arg2[%c6_155, %c0_156, %c0_157] : memref<9x256x256xf32, #tpu.memory_space<vmem>>, vector<1x256x256xf32>
    %175 = vector.shape_cast %174 : vector<1x256x256xf32> to vector<256x256xf32>
    %cst_158 = arith.constant dense<0.000000e+00> : vector<16x256xf32>
    %176 = tpu.matmul %73, %175, %cst_158 {dimension_numbers = #tpu.dot_dimension_numbers<[1], [0], [0], [1], [0, 0, 1, 1], [], []>} : vector<16x256xf32>, vector<256x256xf32>, vector<16x256xf32> -> vector<16x256xf32>
    %c6_159 = arith.constant 6 : index
    %c0_160 = arith.constant 0 : index
    %c0_161 = arith.constant 0 : index
    %177 = vector.load %arg14[%c6_159, %c0_160, %c0_161] : memref<9x16x16xf32, #tpu.memory_space<vmem>>, vector<1x16x16xf32>
    %178 = vector.shape_cast %177 : vector<1x16x16xf32> to vector<16x16xf32>
    %cst_162 = arith.constant dense<0.000000e+00> : vector<16x256xf32>
    %179 = tpu.matmul %178, %176, %cst_162 {dimension_numbers = #tpu.dot_dimension_numbers<[1], [0], [0], [1], [0, 0, 1, 1], [], []>} : vector<16x16xf32>, vector<16x256xf32>, vector<16x256xf32> -> vector<16x256xf32>
    %180 = arith.addf %173, %179 : vector<16x256xf32>
    %c7_163 = arith.constant 7 : index
    %c0_164 = arith.constant 0 : index
    %c0_165 = arith.constant 0 : index
    %181 = vector.load %arg2[%c7_163, %c0_164, %c0_165] : memref<9x256x256xf32, #tpu.memory_space<vmem>>, vector<1x256x256xf32>
    %182 = vector.shape_cast %181 : vector<1x256x256xf32> to vector<256x256xf32>
    %cst_166 = arith.constant dense<0.000000e+00> : vector<16x256xf32>
    %183 = tpu.matmul %73, %182, %cst_166 {dimension_numbers = #tpu.dot_dimension_numbers<[1], [0], [0], [1], [0, 0, 1, 1], [], []>} : vector<16x256xf32>, vector<256x256xf32>, vector<16x256xf32> -> vector<16x256xf32>
    %c7_167 = arith.constant 7 : index
    %c0_168 = arith.constant 0 : index
    %c0_169 = arith.constant 0 : index
    %184 = vector.load %arg14[%c7_167, %c0_168, %c0_169] : memref<9x16x16xf32, #tpu.memory_space<vmem>>, vector<1x16x16xf32>
    %185 = vector.shape_cast %184 : vector<1x16x16xf32> to vector<16x16xf32>
    %cst_170 = arith.constant dense<0.000000e+00> : vector<16x256xf32>
    %186 = tpu.matmul %185, %183, %cst_170 {dimension_numbers = #tpu.dot_dimension_numbers<[1], [0], [0], [1], [0, 0, 1, 1], [], []>} : vector<16x16xf32>, vector<16x256xf32>, vector<16x256xf32> -> vector<16x256xf32>
    %187 = arith.addf %180, %186 : vector<16x256xf32>
    %c8_171 = arith.constant 8 : index
    %c0_172 = arith.constant 0 : index
    %c0_173 = arith.constant 0 : index
    %188 = vector.load %arg2[%c8_171, %c0_172, %c0_173] : memref<9x256x256xf32, #tpu.memory_space<vmem>>, vector<1x256x256xf32>
    %189 = vector.shape_cast %188 : vector<1x256x256xf32> to vector<256x256xf32>
    %cst_174 = arith.constant dense<0.000000e+00> : vector<16x256xf32>
    %190 = tpu.matmul %73, %189, %cst_174 {dimension_numbers = #tpu.dot_dimension_numbers<[1], [0], [0], [1], [0, 0, 1, 1], [], []>} : vector<16x256xf32>, vector<256x256xf32>, vector<16x256xf32> -> vector<16x256xf32>
    %c8_175 = arith.constant 8 : index
    %c0_176 = arith.constant 0 : index
    %c0_177 = arith.constant 0 : index
    %191 = vector.load %arg14[%c8_175, %c0_176, %c0_177] : memref<9x16x16xf32, #tpu.memory_space<vmem>>, vector<1x16x16xf32>
    %192 = vector.shape_cast %191 : vector<1x16x16xf32> to vector<16x16xf32>
    %cst_178 = arith.constant dense<0.000000e+00> : vector<16x256xf32>
    %193 = tpu.matmul %192, %190, %cst_178 {dimension_numbers = #tpu.dot_dimension_numbers<[1], [0], [0], [1], [0, 0, 1, 1], [], []>} : vector<16x16xf32>, vector<16x256xf32>, vector<16x256xf32> -> vector<16x256xf32>
    %194 = arith.addf %187, %193 : vector<16x256xf32>
    %cst_179 = arith.constant dense<0.000000e+00> : vector<16xf32>
    %195 = vector.multi_reduction <add>, %127, %cst_179 [1] : vector<16x256xf32> to vector<16xf32>
    %196 = vector.shape_cast %195 : vector<16xf32> to vector<16x1xf32>
    %cst_180 = arith.constant 2.560000e+02 : f32
    %197 = vector.broadcast %cst_180 : f32 to vector<16x1xf32>
    %198 = arith.divf %196, %197 : vector<16x1xf32>
    %cst_181 = arith.constant dense<0.000000e+00> : vector<16xf32>
    %199 = vector.multi_reduction <add>, %194, %cst_181 [1] : vector<16x256xf32> to vector<16xf32>
    %200 = vector.shape_cast %199 : vector<16xf32> to vector<16x1xf32>
    %cst_182 = arith.constant 2.560000e+02 : f32
    %201 = vector.broadcast %cst_182 : f32 to vector<16x1xf32>
    %202 = arith.divf %200, %201 : vector<16x1xf32>
    %cst_183 = arith.constant dense<0xFF800000> : vector<1xf32>
    %203 = vector.multi_reduction <maximumf>, %198, %cst_183 [0] : vector<16x1xf32> to vector<1xf32>
    %204 = vector.shape_cast %203 : vector<1xf32> to vector<1x1xf32>
    %205 = vector.broadcast %204 : vector<1x1xf32> to vector<16x1xf32>
    %206 = arith.subf %198, %205 : vector<16x1xf32>
    %207 = math.exp %206 : vector<16x1xf32>
    %cst_184 = arith.constant dense<0xFF800000> : vector<1xf32>
    %208 = vector.multi_reduction <maximumf>, %202, %cst_184 [0] : vector<16x1xf32> to vector<1xf32>
    %209 = vector.shape_cast %208 : vector<1xf32> to vector<1x1xf32>
    %210 = vector.broadcast %209 : vector<1x1xf32> to vector<16x1xf32>
    %211 = arith.subf %202, %210 : vector<16x1xf32>
    %212 = math.exp %211 : vector<16x1xf32>
    %c0_185 = arith.constant 0 : index
    %c0_186 = arith.constant 0 : index
    %213 = vector.load %arg16[%c0_185, %c0_186] : memref<16x16xf32, #tpu.memory_space<vmem>>, vector<16x16xf32>
    %cst_187 = arith.constant dense<0.000000e+00> : vector<16x1xf32>
    %214 = tpu.matmul %213, %207, %cst_187 {dimension_numbers = #tpu.dot_dimension_numbers<[1], [0], [0], [1], [0, 0, 1, 1], [], []>} : vector<16x16xf32>, vector<16x1xf32>, vector<16x1xf32> -> vector<16x1xf32>
    %215 = arith.divf %207, %214 : vector<16x1xf32>
    %c0_188 = arith.constant 0 : index
    %c0_189 = arith.constant 0 : index
    %216 = vector.load %arg16[%c0_188, %c0_189] : memref<16x16xf32, #tpu.memory_space<vmem>>, vector<16x16xf32>
    %cst_190 = arith.constant dense<0.000000e+00> : vector<16x1xf32>
    %217 = tpu.matmul %216, %212, %cst_190 {dimension_numbers = #tpu.dot_dimension_numbers<[1], [0], [0], [1], [0, 0, 1, 1], [], []>} : vector<16x16xf32>, vector<16x1xf32>, vector<16x1xf32> -> vector<16x1xf32>
    %218 = arith.divf %212, %217 : vector<16x1xf32>
    %c0_191 = arith.constant 0 : index
    %c0_192 = arith.constant 0 : index
    %219 = vector.load %arg16[%c0_191, %c0_192] : memref<16x16xf32, #tpu.memory_space<vmem>>, vector<16x16xf32>
    %220 = vector.broadcast %215 : vector<16x1xf32> to vector<16x256xf32>
    %221 = arith.mulf %220, %194 : vector<16x256xf32>
    %222 = vector.broadcast %218 : vector<16x1xf32> to vector<16x256xf32>
    %223 = arith.mulf %222, %127 : vector<16x256xf32>
    %224 = arith.addf %221, %223 : vector<16x256xf32>
    %cst_193 = arith.constant dense<0.000000e+00> : vector<16x256xf32>
    %225 = tpu.matmul %219, %224, %cst_193 {dimension_numbers = #tpu.dot_dimension_numbers<[1], [0], [0], [1], [0, 0, 1, 1], [], []>} : vector<16x16xf32>, vector<16x256xf32>, vector<16x256xf32> -> vector<16x256xf32>
    %226 = arith.negf %225 : vector<16x256xf32>
    %227 = math.exp %226 : vector<16x256xf32>
    %cst_194 = arith.constant 1.000000e+00 : f32
    %228 = vector.broadcast %cst_194 : f32 to vector<16x256xf32>
    %229 = arith.addf %228, %227 : vector<16x256xf32>
    %230 = arith.divf %228, %229 : vector<16x256xf32>
    %231 = arith.mulf %73, %230 : vector<16x256xf32>
    %c0_195 = arith.constant 0 : index
    %c0_196 = arith.constant 0 : index
    %c0_197 = arith.constant 0 : index
    %232 = vector.load %arg17[%c0_195, %c0_196, %c0_197] : memref<1x16x256xf32, #tpu.memory_space<vmem>>, vector<1x16x256xf32>
    %233 = vector.shape_cast %232 : vector<1x16x256xf32> to vector<16x256xf32>
    %234 = vector.shape_cast %231 : vector<16x256xf32> to vector<1x16x256xf32>
    tpu.vector_store %arg17[%c0_195, %c0_196, %c0_197], %234 {strides = array<i32>} : memref<1x16x256xf32, #tpu.memory_space<vmem>>, vector<1x16x256xf32>,
    return
  }
  func.func @transform_0(%arg0: i32) -> (i32, i32, i32) {
    %c0_i32 = arith.constant 0 : i32
    %c0_i32_0 = arith.constant 0 : i32
    %c0_i32_1 = arith.constant 0 : i32
    return %arg0, %c0_i32, %c0_i32_0 : i32, i32, i32
  }
  func.func @transform_1(%arg0: i32) -> (i32, i32, i32) {
    %c0_i32 = arith.constant 0 : i32
    %c0_i32_0 = arith.constant 0 : i32
    %c0_i32_1 = arith.constant 0 : i32
    %c0_i32_2 = arith.constant 0 : i32
    return %c0_i32, %c0_i32_0, %c0_i32_1 : i32, i32, i32
  }
  func.func @transform_2(%arg0: i32) -> (i32, i32, i32) {
    %c0_i32 = arith.constant 0 : i32
    %c0_i32_0 = arith.constant 0 : i32
    %c0_i32_1 = arith.constant 0 : i32
    %c0_i32_2 = arith.constant 0 : i32
    return %c0_i32, %c0_i32_0, %c0_i32_1 : i32, i32, i32
  }
  func.func @transform_3(%arg0: i32) -> (i32, i32) {
    %c0_i32 = arith.constant 0 : i32
    %c0_i32_0 = arith.constant 0 : i32
    %c0_i32_1 = arith.constant 0 : i32
    return %c0_i32, %c0_i32_0 : i32, i32
  }
  func.func @transform_4(%arg0: i32) -> (i32, i32) {
    %c0_i32 = arith.constant 0 : i32
    %c0_i32_0 = arith.constant 0 : i32
    %c0_i32_1 = arith.constant 0 : i32
    return %c0_i32, %c0_i32_0 : i32, i32
  }
  func.func @transform_5(%arg0: i32) -> (i32, i32) {
    %c0_i32 = arith.constant 0 : i32
    %c0_i32_0 = arith.constant 0 : i32
    %c0_i32_1 = arith.constant 0 : i32
    return %c0_i32, %c0_i32_0 : i32, i32
  }
  func.func @transform_6(%arg0: i32) -> (i32, i32) {
    %c0_i32 = arith.constant 0 : i32
    %c0_i32_0 = arith.constant 0 : i32
    %c0_i32_1 = arith.constant 0 : i32
    return %c0_i32, %c0_i32_0 : i32, i32
  }
  func.func @transform_7(%arg0: i32) -> (i32, i32) {
    %c0_i32 = arith.constant 0 : i32
    %c0_i32_0 = arith.constant 0 : i32
    %c0_i32_1 = arith.constant 0 : i32
    return %c0_i32, %c0_i32_0 : i32, i32
  }
  func.func @transform_8(%arg0: i32) -> (i32, i32) {
    %c0_i32 = arith.constant 0 : i32
    %c0_i32_0 = arith.constant 0 : i32
    %c0_i32_1 = arith.constant 0 : i32
    return %c0_i32, %c0_i32_0 : i32, i32
  }
  func.func @transform_9(%arg0: i32) -> (i32, i32) {
    %c0_i32 = arith.constant 0 : i32
    %c0_i32_0 = arith.constant 0 : i32
    %c0_i32_1 = arith.constant 0 : i32
    return %c0_i32, %c0_i32_0 : i32, i32
  }
  func.func @transform_10(%arg0: i32) -> (i32, i32) {
    %c0_i32 = arith.constant 0 : i32
    %c0_i32_0 = arith.constant 0 : i32
    %c0_i32_1 = arith.constant 0 : i32
    return %c0_i32, %c0_i32_0 : i32, i32
  }
  func.func @transform_11(%arg0: i32) -> (i32, i32) {
    %c0_i32 = arith.constant 0 : i32
    %c0_i32_0 = arith.constant 0 : i32
    %c0_i32_1 = arith.constant 0 : i32
    return %c0_i32, %c0_i32_0 : i32, i32
  }
  func.func @transform_12(%arg0: i32) -> (i32, i32) {
    %c0_i32 = arith.constant 0 : i32
    %c0_i32_0 = arith.constant 0 : i32
    %c0_i32_1 = arith.constant 0 : i32
    return %c0_i32, %c0_i32_0 : i32, i32
  }
  func.func @transform_13(%arg0: i32) -> (i32, i32, i32) {
    %c0_i32 = arith.constant 0 : i32
    %c0_i32_0 = arith.constant 0 : i32
    %c0_i32_1 = arith.constant 0 : i32
    %c0_i32_2 = arith.constant 0 : i32
    return %c0_i32, %c0_i32_0, %c0_i32_1 : i32, i32, i32
  }
  func.func @transform_14(%arg0: i32) -> (i32, i32) {
    %c0_i32 = arith.constant 0 : i32
    %c0_i32_0 = arith.constant 0 : i32
    %c0_i32_1 = arith.constant 0 : i32
    return %c0_i32, %c0_i32_0 : i32, i32
  }
  func.func @transform_15(%arg0: i32) -> (i32, i32) {
    %c0_i32 = arith.constant 0 : i32
    %c0_i32_0 = arith.constant 0 : i32
    %c0_i32_1 = arith.constant 0 : i32
    return %c0_i32, %c0_i32_0 : i32, i32
  }
  func.func @transform_16(%arg0: i32) -> (i32, i32, i32) {
    %c0_i32 = arith.constant 0 : i32
    %c0_i32_0 = arith.constant 0 : i32
    %c0_i32_1 = arith.constant 0 : i32
    return %arg0, %c0_i32, %c0_i32_0 : i32, i32, i32
  }
}

</mosaic_0001>

<llo_original>
// kernel: mul.139
$region0: #{mul.139}
  #allocation0 [shape = 's32[1]{0}', space=sflag, size = 0x4, scoped, tag = 'scoped memory for mul.139']
  %s0 = inlined_call_operand.vmem [shape: f32[16,16], index: 0, kind: input, shape index: {}]
  %s1 = inlined_call_operand.vmem [shape: f32[16,16], index: 1, kind: input, shape index: {}]
  %s2 = inlined_call_operand.vmem [shape: f32[16,16], index: 2, kind: output, shape index: {}]
  %v3 = vld [vmem:[%s0] sm:$0xff]
  %v4 = vld [vmem:[%s1] sm:$0xff]
  %5 = xla_tuple %v3, %v4
  %6 = xla_tuple %5
  %v7 = vmul.f32 %v3, %v4
  %8 = xla_tuple %v7
  %9 = vst [vmem:[%s2] sm:$0xff] %v7
  %s10 = scalar_lea.vmem %s0, 8
  %v11 = vld [vmem:[%s10] sm:$0xff]
  %s12 = scalar_lea.vmem %s1, 8
  %v13 = vld [vmem:[%s12] sm:$0xff]
  %14 = xla_tuple %v11, %v13
  %15 = xla_tuple %14
  %v16 = vmul.f32 %v11, %v13
  %17 = xla_tuple %v16
  %s18 = scalar_lea.vmem %s2, 8
  %19 = vst [vmem:[%s18] sm:$0xff] %v16

// kernel: tile.28
$region0: #{tile.28}
  #allocation0 [shape = 's32[1]{0}', space=sflag, size = 0x4, scoped, tag = 'scoped memory for tile.28']
  %s0 = inlined_call_operand.vmem [shape: f32[2], index: 0, kind: input, shape index: {}]
  %s1 = inlined_call_operand.vmem [shape: f32[8,2], index: 1, kind: output, shape index: {}]
  // Predicated region
  $region2: #{tile.28} parent=0 // pred_check
    _
  $region3: #{tile.28} parent=0 // pred_check_branch
    %3 = sbr.rel (0) target = $region5
  $region4: #{tile.28} parent=0 // pred_region
    _
  $region5: #{tile.28} parent=0 // pred_fallthru
    _
  %v4 = vld [vmem:[%s0] ss:$0 sm:$0xff]
  %5 = vst [vmem:[%s1] sm:$0xff] %v4

// kernel: tile.0
$region0: #{tile.0}
  %s0 = inlined_call_operand.vmem [shape: f32[8,2], index: 0, kind: input, shape index: {}]
  %s1 = inlined_call_operand.vmem [shape: f32[16,1], index: 1, kind: output, shape index: {}]
  %v2 = vld [vmem:[%s0] sm:$0xff]
  %vm3 = vcmask 7168
  %4 = vst.msk [vmem:[%s1] ss:$2 sm:$0xff] %vm3, %v2
  %v5 = vld [vmem:[%s0] sm:$0xff]
  %6 = vrot.lane.b32.xlu0 %v5, 127
  %v7 = vpop.permute.xlu0 %6
  %vm8 = vcmask 7168
  %s9 = scalar_lea.vmem %s1, 1
  %10 = vst.msk [vmem:[%s9] ss:$2 sm:$0xff] %vm8, %v7

// kernel: maf_forward.1
$region0: #{maf_forward.1}
  #allocation0 [shape = 'u32[]', space=smem, size = 0x4, offset = 0x4, fixed_abs, tag = 'smem constant byte address 0x4 - core index']
  #allocation1 [shape = 'u32[72,128]{1,0:T(1,128)}', space=vmem, size = 0x9000, scoped, tag = 'internal scratch']
  %s0 = inlined_call_operand.vmem [shape: f32[2,8,256], index: 0, kind: input, shape index: {}]
  %s1 = inlined_call_operand.vmem [shape: f32[9,256,256], index: 1, kind: input, shape index: {}]
  %s2 = inlined_call_operand.vmem [shape: f32[9,16,8], index: 2, kind: input, shape index: {}]
  %s3 = inlined_call_operand.vmem [shape: f32[16,1], index: 3, kind: input, shape index: {}]
  %s4 = inlined_call_operand.vmem [shape: f32[16,1], index: 4, kind: input, shape index: {}]
  %s5 = inlined_call_operand.vmem [shape: f32[16,16], index: 5, kind: input, shape index: {}]
  %s6 = inlined_call_operand.vmem [shape: f32[16,1], index: 6, kind: input, shape index: {}]
  %s7 = inlined_call_operand.vmem [shape: f32[256,16], index: 7, kind: input, shape index: {}]
  %s8 = inlined_call_operand.vmem [shape: f32[16,256], index: 8, kind: input, shape index: {}]
  %s9 = inlined_call_operand.vmem [shape: f32[256,16], index: 9, kind: input, shape index: {}]
  %s10 = inlined_call_operand.vmem [shape: f32[16,256], index: 10, kind: input, shape index: {}]
  %s11 = inlined_call_operand.vmem [shape: f32[16,1], index: 11, kind: input, shape index: {}]
  %s12 = inlined_call_operand.vmem [shape: f32[16,1], index: 12, kind: input, shape index: {}]
  %s13 = inlined_call_operand.vmem [shape: f32[9,16,16], index: 13, kind: input, shape index: {}]
  %s14 = inlined_call_operand.vmem [shape: f32[16,1], index: 14, kind: input, shape index: {}]
  %s15 = inlined_call_operand.vmem [shape: f32[16,16], index: 15, kind: input, shape index: {}]
  %s16 = inlined_call_operand.vmem [shape: f32[2,16,256], index: 16, kind: output, shape index: {}]
  %s17 = sld [smem:[#allocation0]]
  $region97: #{maf_forward.1} parent=0
    _
  %s19 = ssub.s32 1, %s17
  %s20 = scalar_select 0, %s19, %s17
  loop: start=0, step=1, limit=4
  $region2: #{maf_forward.1} parent=0 // loop_pre_header
    _
  $region3: #{maf_forward.1} parent=0 // loop_header
    %s22 = sphi 0, %s26
    %p23 = scmp.ge.s32.totalorder %s22, 4
    %s32 = sphi 0, %s34
    %s35 = sphi 0, %s32
    %s36 = sphi 0, %s35
    %s52 = sphi 0, %s36
    %s56 = sphi 0, %s56
    %s58 = sphi 0, %s56
    %s59 = sphi 0, %s58
    %s73 = sphi 0, %s59
    %s77 = sphi 0, %s77
    %s79 = sphi 0, %s77
    %s80 = sphi 0, %s79
    %s94 = sphi 0, %s80
    %s98 = sphi 0, %s98
    %s100 = sphi 0, %s98
    %s101 = sphi 0, %s100
    %s115 = sphi 0, %s101
    %s119 = sphi 0, %s119
    %s121 = sphi 0, %s119
    %s122 = sphi 0, %s121
    %s136 = sphi 0, %s122
    %s140 = sphi 0, %s140
    %s142 = sphi 0, %s140
    %s143 = sphi 0, %s142
    %s157 = sphi 0, %s143
    %s161 = sphi 0, %s161
    %s163 = sphi 0, %s161
    %s164 = sphi 0, %s163
    %s178 = sphi 0, %s164
    %s182 = sphi 0, %s182
    %s184 = sphi 0, %s182
    %s185 = sphi 0, %s184
    %s199 = sphi 0, %s185
    %s203 = sphi 0, %s203
    %s205 = sphi 0, %s203
    %s206 = sphi 0, %s205
    %s220 = sphi 0, %s206
    %s224 = sphi 0, %s224
    %s226 = sphi 0, %s224
    %s227 = sphi 0, %s226
    %s241 = sphi 0, %s227
    %s245 = sphi 0, %s245
    %s247 = sphi 0, %s245
    %s248 = sphi 0, %s247
    %s262 = sphi 0, %s248
    %s266 = sphi 0, %s266
    %s268 = sphi 0, %s266
    %s269 = sphi 0, %s268
    %s283 = sphi 0, %s269
    %s287 = sphi 0, %s287
    %s289 = sphi 0, %s287
    %s290 = sphi 0, %s289
    %s304 = sphi 0, %s290
    %s308 = sphi 0, %s308
    %s310 = sphi 0, %s308
    %s311 = sphi 0, %s310
    %s325 = sphi 0, %s311
    %s329 = sphi 0, %s329
    %s331 = sphi 0, %s329
    %s332 = sphi 0, %s331
    %s346 = sphi 0, %s332
    %s350 = sphi 0, %s350
    %s352 = sphi 0, %s350
    %s353 = sphi 0, %s352
    %s367 = sphi 0, %s353
    %s373 = sphi 0, %s375
    %s376 = sphi 0, %s373
    %s377 = sphi 0, %s376
    %s393 = sphi 0, %s377
  $region4: #{maf_forward.1} parent=0 // loop_header_branch
    %25 = sbr.rel (%p23) target = $region8
  $region5: #{maf_forward.1} parent=0 // loop_body
    %s27 = ssub.s32 %s22, 1
    %s28 = ssub.s32 %s22, 2
    %s29 = sadd.s32 %s22, 1
    %s30 = ssub.s32 %s22, %s29
    %p31 = scmp.eq.s32.totalorder %s30, 0
    %s33 = sadd.s32 %s32, 1
    %s34 = scalar_select %p31, %s32, %s33
    %p37 = pneg %p31
    %p38 = scmp.eq.s32.totalorder %s22, 1
    %p39 = por %p37, %p38
    %p40 = scmp.ne.s32.totalorder %s32, %s35
    %p41 = scmp.eq.s32.totalorder %s22, 0
    %p42 = por %p40, %p41
    %p43 = scmp.ne.s32.totalorder %s32, %s35
    %p44 = scmp.eq.s32.totalorder %s27, 1
    %p45 = por %p43, %p44
    %p46 = scmp.ne.s32.totalorder %s35, %s36
    %p47 = scmp.eq.s32.totalorder %s27, 0
    %p48 = por %p46, %p47
    %p49 = scmp.ne.s32.totalorder %s35, %s36
    %p50 = scmp.eq.s32.totalorder %s28, 1
    %p51 = por %p49, %p50
    %p53 = scmp.ne.s32.totalorder %s36, %s52
    %p54 = scmp.eq.s32.totalorder %s28, 0
    %p55 = por %p53, %p54
    %s57 = sadd.s32 %s56, 1
    %p60 = scmp.eq.s32.totalorder %s22, 1
    %p61 = scmp.ne.s32.totalorder %s56, %s58
    %p62 = scmp.eq.s32.totalorder %s22, 0
    %p63 = por %p61, %p62
    %p64 = scmp.ne.s32.totalorder %s56, %s58
    %p65 = scmp.eq.s32.totalorder %s27, 1
    %p66 = por %p64, %p65
    %p67 = scmp.ne.s32.totalorder %s58, %s59
    %p68 = scmp.eq.s32.totalorder %s27, 0
    %p69 = por %p67, %p68
    %p70 = scmp.ne.s32.totalorder %s58, %s59
    %p71 = scmp.eq.s32.totalorder %s28, 1
    %p72 = por %p70, %p71
    %p74 = scmp.ne.s32.totalorder %s59, %s73
    %p75 = scmp.eq.s32.totalorder %s28, 0
    %p76 = por %p74, %p75
    %s78 = sadd.s32 %s77, 1
    %p81 = scmp.eq.s32.totalorder %s22, 1
    %p82 = scmp.ne.s32.totalorder %s77, %s79
    %p83 = scmp.eq.s32.totalorder %s22, 0
    %p84 = por %p82, %p83
    %p85 = scmp.ne.s32.totalorder %s77, %s79
    %p86 = scmp.eq.s32.totalorder %s27, 1
    %p87 = por %p85, %p86
    %p88 = scmp.ne.s32.totalorder %s79, %s80
    %p89 = scmp.eq.s32.totalorder %s27, 0
    %p90 = por %p88, %p89
    %p91 = scmp.ne.s32.totalorder %s79, %s80
    %p92 = scmp.eq.s32.totalorder %s28, 1
    %p93 = por %p91, %p92
    %p95 = scmp.ne.s32.totalorder %s80, %s94
    %p96 = scmp.eq.s32.totalorder %s28, 0
    %p97 = por %p95, %p96
    %s99 = sadd.s32 %s98, 1
    %p102 = scmp.eq.s32.totalorder %s22, 1
    %p103 = scmp.ne.s32.totalorder %s98, %s100
    %p104 = scmp.eq.s32.totalorder %s22, 0
    %p105 = por %p103, %p104
    %p106 = scmp.ne.s32.totalorder %s98, %s100
    %p107 = scmp.eq.s32.totalorder %s27, 1
    %p108 = por %p106, %p107
    %p109 = scmp.ne.s32.totalorder %s100, %s101
    %p110 = scmp.eq.s32.totalorder %s27, 0
    %p111 = por %p109, %p110
    %p112 = scmp.ne.s32.totalorder %s100, %s101
    %p113 = scmp.eq.s32.totalorder %s28, 1
    %p114 = por %p112, %p113
    %p116 = scmp.ne.s32.totalorder %s101, %s115
    %p117 = scmp.eq.s32.totalorder %s28, 0
    %p118 = por %p116, %p117
    %s120 = sadd.s32 %s119, 1
    %p123 = scmp.eq.s32.totalorder %s22, 1
    %p124 = scmp.ne.s32.totalorder %s119, %s121
    %p125 = scmp.eq.s32.totalorder %s22, 0
    %p126 = por %p124, %p125
    %p127 = scmp.ne.s32.totalorder %s119, %s121
    %p128 = scmp.eq.s32.totalorder %s27, 1
    %p129 = por %p127, %p128
    %p130 = scmp.ne.s32.totalorder %s121, %s122
    %p131 = scmp.eq.s32.totalorder %s27, 0
    %p132 = por %p130, %p131
    %p133 = scmp.ne.s32.totalorder %s121, %s122
    %p134 = scmp.eq.s32.totalorder %s28, 1
    %p135 = por %p133, %p134
    %p137 = scmp.ne.s32.totalorder %s122, %s136
    %p138 = scmp.eq.s32.totalorder %s28, 0
    %p139 = por %p137, %p138
    %s141 = sadd.s32 %s140, 1
    %p144 = scmp.eq.s32.totalorder %s22, 1
    %p145 = scmp.ne.s32.totalorder %s140, %s142
    %p146 = scmp.eq.s32.totalorder %s22, 0
    %p147 = por %p145, %p146
    %p148 = scmp.ne.s32.totalorder %s140, %s142
    %p149 = scmp.eq.s32.totalorder %s27, 1
    %p150 = por %p148, %p149
    %p151 = scmp.ne.s32.totalorder %s142, %s143
    %p152 = scmp.eq.s32.totalorder %s27, 0
    %p153 = por %p151, %p152
    %p154 = scmp.ne.s32.totalorder %s142, %s143
    %p155 = scmp.eq.s32.totalorder %s28, 1
    %p156 = por %p154, %p155
    %p158 = scmp.ne.s32.totalorder %s143, %s157
    %p159 = scmp.eq.s32.totalorder %s28, 0
    %p160 = por %p158, %p159
    %s162 = sadd.s32 %s161, 1
    %p165 = scmp.eq.s32.totalorder %s22, 1
    %p166 = scmp.ne.s32.totalorder %s161, %s163
    %p167 = scmp.eq.s32.totalorder %s22, 0
    %p168 = por %p166, %p167
    %p169 = scmp.ne.s32.totalorder %s161, %s163
    %p170 = scmp.eq.s32.totalorder %s27, 1
    %p171 = por %p169, %p170
    %p172 = scmp.ne.s32.totalorder %s163, %s164
    %p173 = scmp.eq.s32.totalorder %s27, 0
    %p174 = por %p172, %p173
    %p175 = scmp.ne.s32.totalorder %s163, %s164
    %p176 = scmp.eq.s32.totalorder %s28, 1
    %p177 = por %p175, %p176
    %p179 = scmp.ne.s32.totalorder %s164, %s178
    %p180 = scmp.eq.s32.totalorder %s28, 0
    %p181 = por %p179, %p180
    %s183 = sadd.s32 %s182, 1
    %p186 = scmp.eq.s32.totalorder %s22, 1
    %p187 = scmp.ne.s32.totalorder %s182, %s184
    %p188 = scmp.eq.s32.totalorder %s22, 0
    %p189 = por %p187, %p188
    %p190 = scmp.ne.s32.totalorder %s182, %s184
    %p191 = scmp.eq.s32.totalorder %s27, 1
    %p192 = por %p190, %p191
    %p193 = scmp.ne.s32.totalorder %s184, %s185
    %p194 = scmp.eq.s32.totalorder %s27, 0
    %p195 = por %p193, %p194
    %p196 = scmp.ne.s32.totalorder %s184, %s185
    %p197 = scmp.eq.s32.totalorder %s28, 1
    %p198 = por %p196, %p197
    %p200 = scmp.ne.s32.totalorder %s185, %s199
    %p201 = scmp.eq.s32.totalorder %s28, 0
    %p202 = por %p200, %p201
    %s204 = sadd.s32 %s203, 1
    %p207 = scmp.eq.s32.totalorder %s22, 1
    %p208 = scmp.ne.s32.totalorder %s203, %s205
    %p209 = scmp.eq.s32.totalorder %s22, 0
    %p210 = por %p208, %p209
    %p211 = scmp.ne.s32.totalorder %s203, %s205
    %p212 = scmp.eq.s32.totalorder %s27, 1
    %p213 = por %p211, %p212
    %p214 = scmp.ne.s32.totalorder %s205, %s206
    %p215 = scmp.eq.s32.totalorder %s27, 0
    %p216 = por %p214, %p215
    %p217 = scmp.ne.s32.totalorder %s205, %s206
    %p218 = scmp.eq.s32.totalorder %s28, 1
    %p219 = por %p217, %p218
    %p221 = scmp.ne.s32.totalorder %s206, %s220
    %p222 = scmp.eq.s32.totalorder %s28, 0
    %p223 = por %p221, %p222
    %s225 = sadd.s32 %s224, 1
    %p228 = scmp.eq.s32.totalorder %s22, 1
    %p229 = scmp.ne.s32.totalorder %s224, %s226
    %p230 = scmp.eq.s32.totalorder %s22, 0
    %p231 = por %p229, %p230
    %p232 = scmp.ne.s32.totalorder %s224, %s226
    %p233 = scmp.eq.s32.totalorder %s27, 1
    %p234 = por %p232, %p233
    %p235 = scmp.ne.s32.totalorder %s226, %s227
    %p236 = scmp.eq.s32.totalorder %s27, 0
    %p237 = por %p235, %p236
    %p238 = scmp.ne.s32.totalorder %s226, %s227
    %p239 = scmp.eq.s32.totalorder %s28, 1
    %p240 = por %p238, %p239
    %p242 = scmp.ne.s32.totalorder %s227, %s241
    %p243 = scmp.eq.s32.totalorder %s28, 0
    %p244 = por %p242, %p243
    %s246 = sadd.s32 %s245, 1
    %p249 = scmp.eq.s32.totalorder %s22, 1
    %p250 = scmp.ne.s32.totalorder %s245, %s247
    %p251 = scmp.eq.s32.totalorder %s22, 0
    %p252 = por %p250, %p251
    %p253 = scmp.ne.s32.totalorder %s245, %s247
    %p254 = scmp.eq.s32.totalorder %s27, 1
    %p255 = por %p253, %p254
    %p256 = scmp.ne.s32.totalorder %s247, %s248
    %p257 = scmp.eq.s32.totalorder %s27, 0
    %p258 = por %p256, %p257
    %p259 = scmp.ne.s32.totalorder %s247, %s248
    %p260 = scmp.eq.s32.totalorder %s28, 1
    %p261 = por %p259, %p260
    %p263 = scmp.ne.s32.totalorder %s248, %s262
    %p264 = scmp.eq.s32.totalorder %s28, 0
    %p265 = por %p263, %p264
    %s267 = sadd.s32 %s266, 1
    %p270 = scmp.eq.s32.totalorder %s22, 1
    %p271 = scmp.ne.s32.totalorder %s266, %s268
    %p272 = scmp.eq.s32.totalorder %s22, 0
    %p273 = por %p271, %p272
    %p274 = scmp.ne.s32.totalorder %s266, %s268
    %p275 = scmp.eq.s32.totalorder %s27, 1
    %p276 = por %p274, %p275
    %p277 = scmp.ne.s32.totalorder %s268, %s269
    %p278 = scmp.eq.s32.totalorder %s27, 0
    %p279 = por %p277, %p278
    %p280 = scmp.ne.s32.totalorder %s268, %s269
    %p281 = scmp.eq.s32.totalorder %s28, 1
    %p282 = por %p280, %p281
    %p284 = scmp.ne.s32.totalorder %s269, %s283
    %p285 = scmp.eq.s32.totalorder %s28, 0
    %p286 = por %p284, %p285
    %s288 = sadd.s32 %s287, 1
    %p291 = scmp.eq.s32.totalorder %s22, 1
    %p292 = scmp.ne.s32.totalorder %s287, %s289
    %p293 = scmp.eq.s32.totalorder %s22, 0
    %p294 = por %p292, %p293
    %p295 = scmp.ne.s32.totalorder %s287, %s289
    %p296 = scmp.eq.s32.totalorder %s27, 1
    %p297 = por %p295, %p296
    %p298 = scmp.ne.s32.totalorder %s289, %s290
    %p299 = scmp.eq.s32.totalorder %s27, 0
    %p300 = por %p298, %p299
    %p301 = scmp.ne.s32.totalorder %s289, %s290
    %p302 = scmp.eq.s32.totalorder %s28, 1
    %p303 = por %p301, %p302
    %p305 = scmp.ne.s32.totalorder %s290, %s304
    %p306 = scmp.eq.s32.totalorder %s28, 0
    %p307 = por %p305, %p306
    %s309 = sadd.s32 %s308, 1
    %p312 = scmp.eq.s32.totalorder %s22, 1
    %p313 = scmp.ne.s32.totalorder %s308, %s310
    %p314 = scmp.eq.s32.totalorder %s22, 0
    %p315 = por %p313, %p314
    %p316 = scmp.ne.s32.totalorder %s308, %s310
    %p317 = scmp.eq.s32.totalorder %s27, 1
    %p318 = por %p316, %p317
    %p319 = scmp.ne.s32.totalorder %s310, %s311
    %p320 = scmp.eq.s32.totalorder %s27, 0
    %p321 = por %p319, %p320
    %p322 = scmp.ne.s32.totalorder %s310, %s311
    %p323 = scmp.eq.s32.totalorder %s28, 1
    %p324 = por %p322, %p323
    %p326 = scmp.ne.s32.totalorder %s311, %s325
    %p327 = scmp.eq.s32.totalorder %s28, 0
    %p328 = por %p326, %p327
    %s330 = sadd.s32 %s329, 1
    %p333 = scmp.eq.s32.totalorder %s22, 1
    %p334 = scmp.ne.s32.totalorder %s329, %s331
    %p335 = scmp.eq.s32.totalorder %s22, 0
    %p336 = por %p334, %p335
    %p337 = scmp.ne.s32.totalorder %s329, %s331
    %p338 = scmp.eq.s32.totalorder %s27, 1
    %p339 = por %p337, %p338
    %p340 = scmp.ne.s32.totalorder %s331, %s332
    %p341 = scmp.eq.s32.totalorder %s27, 0
    %p342 = por %p340, %p341
    %p343 = scmp.ne.s32.totalorder %s331, %s332
    %p344 = scmp.eq.s32.totalorder %s28, 1
    %p345 = por %p343, %p344
    %p347 = scmp.ne.s32.totalorder %s332, %s346
    %p348 = scmp.eq.s32.totalorder %s28, 0
    %p349 = por %p347, %p348
    %s351 = sadd.s32 %s350, 1
    %p354 = scmp.eq.s32.totalorder %s22, 1
    %p355 = scmp.ne.s32.totalorder %s350, %s352
    %p356 = scmp.eq.s32.totalorder %s22, 0
    %p357 = por %p355, %p356
    %p358 = scmp.ne.s32.totalorder %s350, %s352
    %p359 = scmp.eq.s32.totalorder %s27, 1
    %p360 = por %p358, %p359
    %p361 = scmp.ne.s32.totalorder %s352, %s353
    %p362 = scmp.eq.s32.totalorder %s27, 0
    %p363 = por %p361, %p362
    %p364 = scmp.ne.s32.totalorder %s352, %s353
    %p365 = scmp.eq.s32.totalorder %s28, 1
    %p366 = por %p364, %p365
    %p368 = scmp.ne.s32.totalorder %s353, %s367
    %p369 = scmp.eq.s32.totalorder %s28, 0
    %p370 = por %p368, %p369
    %s371 = ssub.s32 %s22, %s29
    %p372 = scmp.eq.s32.totalorder %s371, 0
    %s374 = sadd.s32 %s373, 1
    %s375 = scalar_select %p372, %s373, %s374
    %p378 = pneg %p372
    %p379 = scmp.eq.s32.totalorder %s22, 1
    %p380 = por %p378, %p379
    %p381 = scmp.ne.s32.totalorder %s373, %s376
    %p382 = scmp.eq.s32.totalorder %s22, 0
    %p383 = por %p381, %p382
    %p384 = scmp.ne.s32.totalorder %s373, %s376
    %p385 = scmp.eq.s32.totalorder %s27, 1
    %p386 = por %p384, %p385
    %p387 = scmp.ne.s32.totalorder %s376, %s377
    %p388 = scmp.eq.s32.totalorder %s27, 0
    %p389 = por %p387, %p388
    %p390 = scmp.ne.s32.totalorder %s376, %s377
    %p391 = scmp.eq.s32.totalorder %s28, 1
    %p392 = por %p390, %p391
    %p394 = scmp.ne.s32.totalorder %s377, %s393
    %p395 = scmp.eq.s32.totalorder %s28, 0
    %p396 = por %p394, %p395
    %p397 = scmp.le.s32.totalorder 1, %s22
    %p398 = scmp.lt.s32.totalorder %s22, 3
    %p399 = pnand %p397, %p398
    %p400 = pneg %p399
    // Predicated region
    $region9: #{maf_forward.1} parent=5 // pred_check
      _
    $region10: #{maf_forward.1} parent=5 // pred_check_branch
      %402 = sbr.rel (%p399) target = $region12
    $region11: #{maf_forward.1} parent=5 // pred_region
      %s403 = ssub.s32 %s22, 1
      // Predicated region
      $region13: #{maf_forward.1} parent=11 // pred_check
        %p404 = pneg %p69
      $region14: #{maf_forward.1} parent=11 // pred_check_branch
        %406 = sbr.rel (%p404) target = $region16
      $region15: #{maf_forward.1} parent=11 // pred_region
        _
      $region16: #{maf_forward.1} parent=11 // pred_fallthru
        _
      // Predicated region
      $region17: #{maf_forward.1} parent=11 // pred_check
        %p407 = pneg %p90
      $region18: #{maf_forward.1} parent=11 // pred_check_branch
        %409 = sbr.rel (%p407) target = $region20
      $region19: #{maf_forward.1} parent=11 // pred_region
        _
      $region20: #{maf_forward.1} parent=11 // pred_fallthru
        _
      // Predicated region
      $region21: #{maf_forward.1} parent=11 // pred_check
        %p410 = pneg %p111
      $region22: #{maf_forward.1} parent=11 // pred_check_branch
        %412 = sbr.rel (%p410) target = $region24
      $region23: #{maf_forward.1} parent=11 // pred_region
        _
      $region24: #{maf_forward.1} parent=11 // pred_fallthru
        _
      // Predicated region
      $region25: #{maf_forward.1} parent=11 // pred_check
        %p413 = pneg %p132
      $region26: #{maf_forward.1} parent=11 // pred_check_branch
        %415 = sbr.rel (%p413) target = $region28
      $region27: #{maf_forward.1} parent=11 // pred_region
        _
      $region28: #{maf_forward.1} parent=11 // pred_fallthru
        _
      // Predicated region
      $region29: #{maf_forward.1} parent=11 // pred_check
        %p416 = pneg %p153
      $region30: #{maf_forward.1} parent=11 // pred_check_branch
        %418 = sbr.rel (%p416) target = $region32
      $region31: #{maf_forward.1} parent=11 // pred_region
        _
      $region32: #{maf_forward.1} parent=11 // pred_fallthru
        _
      // Predicated region
      $region33: #{maf_forward.1} parent=11 // pred_check
        %p419 = pneg %p174
      $region34: #{maf_forward.1} parent=11 // pred_check_branch
        %421 = sbr.rel (%p419) target = $region36
      $region35: #{maf_forward.1} parent=11 // pred_region
        _
      $region36: #{maf_forward.1} parent=11 // pred_fallthru
        _
      // Predicated region
      $region37: #{maf_forward.1} parent=11 // pred_check
        %p422 = pneg %p195
      $region38: #{maf_forward.1} parent=11 // pred_check_branch
        %424 = sbr.rel (%p422) target = $region40
      $region39: #{maf_forward.1} parent=11 // pred_region
        _
      $region40: #{maf_forward.1} parent=11 // pred_fallthru
        _
      // Predicated region
      $region41: #{maf_forward.1} parent=11 // pred_check
        %p425 = pneg %p216
      $region42: #{maf_forward.1} parent=11 // pred_check_branch
        %427 = sbr.rel (%p425) target = $region44
      $region43: #{maf_forward.1} parent=11 // pred_region
        _
      $region44: #{maf_forward.1} parent=11 // pred_fallthru
        _
      // Predicated region
      $region45: #{maf_forward.1} parent=11 // pred_check
        %p428 = pneg %p237
      $region46: #{maf_forward.1} parent=11 // pred_check_branch
        %430 = sbr.rel (%p428) target = $region48
      $region47: #{maf_forward.1} parent=11 // pred_region
        _
      $region48: #{maf_forward.1} parent=11 // pred_fallthru
        _
      // Predicated region
      $region49: #{maf_forward.1} parent=11 // pred_check
        %p431 = pneg %p258
      $region50: #{maf_forward.1} parent=11 // pred_check_branch
        %433 = sbr.rel (%p431) target = $region52
      $region51: #{maf_forward.1} parent=11 // pred_region
        _
      $region52: #{maf_forward.1} parent=11 // pred_fallthru
        _
      // Predicated region
      $region53: #{maf_forward.1} parent=11 // pred_check
        %p434 = pneg %p279
      $region54: #{maf_forward.1} parent=11 // pred_check_branch
        %436 = sbr.rel (%p434) target = $region56
      $region55: #{maf_forward.1} parent=11 // pred_region
        _
      $region56: #{maf_forward.1} parent=11 // pred_fallthru
        _
      // Predicated region
      $region57: #{maf_forward.1} parent=11 // pred_check
        %p437 = pneg %p300
      $region58: #{maf_forward.1} parent=11 // pred_check_branch
        %439 = sbr.rel (%p437) target = $region60
      $region59: #{maf_forward.1} parent=11 // pred_region
        _
      $region60: #{maf_forward.1} parent=11 // pred_fallthru
        _
      // Predicated region
      $region61: #{maf_forward.1} parent=11 // pred_check
        %p440 = pneg %p321
      $region62: #{maf_forward.1} parent=11 // pred_check_branch
        %442 = sbr.rel (%p440) target = $region64
      $region63: #{maf_forward.1} parent=11 // pred_region
        _
      $region64: #{maf_forward.1} parent=11 // pred_fallthru
        _
      // Predicated region
      $region65: #{maf_forward.1} parent=11 // pred_check
        %p443 = pneg %p342
      $region66: #{maf_forward.1} parent=11 // pred_check_branch
        %445 = sbr.rel (%p443) target = $region68
      $region67: #{maf_forward.1} parent=11 // pred_region
        _
      $region68: #{maf_forward.1} parent=11 // pred_fallthru
        _
      // Predicated region
      $region69: #{maf_forward.1} parent=11 // pred_check
        %p446 = pneg %p363
      $region70: #{maf_forward.1} parent=11 // pred_check_branch
        %448 = sbr.rel (%p446) target = $region72
      $region71: #{maf_forward.1} parent=11 // pred_region
        _
      $region72: #{maf_forward.1} parent=11 // pred_fallthru
        _
    $region12: #{maf_forward.1} parent=5 // pred_fallthru
      _
    %p449 = scmp.lt.s32.totalorder %s22, 2
    // Predicated region
    $region73: #{maf_forward.1} parent=5 // pred_check
      %p450 = pneg %p449
    $region74: #{maf_forward.1} parent=5 // pred_check_branch
      %452 = sbr.rel (%p450) target = $region76
    $region75: #{maf_forward.1} parent=5 // pred_region
      // Predicated region
      $region77: #{maf_forward.1} parent=75 // pred_check
        %p453 = pneg %p42
      $region78: #{maf_forward.1} parent=75 // pred_check_branch
        %455 = sbr.rel (%p453) target = $region80
      $region79: #{maf_forward.1} parent=75 // pred_region
        %p456 = scmp.lt.s32.totalorder %s22, 1
        %s457 = scalar_select %p456, %s22, 1
        %s458 = smul.addr %s457, 2
        %s459 = smul.addr %s458, 8
        %s460 = scalar_lea.vmem %s0, %s459
      $region80: #{maf_forward.1} parent=75 // pred_fallthru
        _
    $region76: #{maf_forward.1} parent=5 // pred_fallthru
      _
    %p461 = scmp.le.s32.totalorder 1, %s22
    %p462 = scmp.lt.s32.totalorder %s22, 3
    %p463 = pnand %p461, %p462
    %p464 = pneg %p463
    // Predicated region
    $region81: #{maf_forward.1} parent=5 // pred_check
      _
    $region82: #{maf_forward.1} parent=5 // pred_check_branch
      %466 = sbr.rel (%p463) target = $region84
    $region83: #{maf_forward.1} parent=5 // pred_region
      %s467 = ssub.s32 %s22, 1
      %p468 = scmp.lt.s32.totalorder %s27, 1
      %s469 = scalar_select %p468, %s27, 1
      %s470 = smul.addr %s469, 2
      %s471 = smul.addr %s470, 8
      %s472 = scalar_lea.vmem %s0, %s471
      %p473 = pneg %p48
      %p474 = pneg %p45
      %p475 = pneg %p69
      %p476 = pneg %p66
      %p477 = pneg %p90
      %p478 = pneg %p87
      %p479 = pneg %p111
      %p480 = pneg %p108
      %p481 = pneg %p132
      %p482 = pneg %p129
      %p483 = pneg %p153
      %p484 = pneg %p150
      %p485 = pneg %p174
      %p486 = pneg %p171
      %p487 = pneg %p195
      %p488 = pneg %p192
      %p489 = pneg %p216
      %p490 = pneg %p213
      %p491 = pneg %p237
      %p492 = pneg %p234
      %p493 = pneg %p258
      %p494 = pneg %p255
      %p495 = pneg %p279
      %p496 = pneg %p276
      %p497 = pneg %p300
      %p498 = pneg %p297
      %p499 = pneg %p321
      %p500 = pneg %p318
      %p501 = pneg %p342
      %p502 = pneg %p339
      %p503 = pneg %p363
      %p504 = pneg %p360
      %p505 = pneg %p389
      %p506 = pneg %p386
      %p507 = scmp.lt.s32.totalorder %s27, 1
      %s508 = scalar_select %p507, %s27, 1
      %s509 = smul.addr %s508, 4
      %s510 = smul.addr %s509, 8
      %s511 = scalar_lea.vmem %s16, %s510
      %p512 = scmp.lt.s32.totalorder %s27, 1
      %s513 = scalar_select %p512, %s27, 1
      %s514 = smul.addr %s513, 2
      %s515 = smul.addr %s514, 8
      %s516 = scalar_lea.vmem %s0, %s515
      %p517 = scmp.lt.s32.totalorder %s27, 1
      %s518 = scalar_select %p517, %s27, 1
      %s519 = smul.addr %s518, 4
      %s520 = smul.addr %s519, 8
      %s521 = scalar_lea.vmem %s16, %s520
      %v522 = vld [vmem:[%s516] sm:$0xff]
      %v523 = vld [vmem:[%s516 + $0x8] sm:$0xff]
      %v524 = vmax.f32 %v522, 0.0
      %v525 = vmax.f32 %v523, 0.0
      %v526 = vld [vmem:[%s1] sm:$0xff]
      %v527 = vld [vmem:[%s1 + $0x8] sm:$0xff]
      %v528 = vld [vmem:[%s1 + $0x10] sm:$0xff]
      %v529 = vld [vmem:[%s1 + $0x18] sm:$0xff]
      %v530 = vld [vmem:[%s1 + $0x20] sm:$0xff]
      %v531 = vld [vmem:[%s1 + $0x28] sm:$0xff]
      %v532 = vld [vmem:[%s1 + $0x30] sm:$0xff]
      %v533 = vld [vmem:[%s1 + $0x38] sm:$0xff]
      %v534 = vld [vmem:[%s1 + $0x40] sm:$0xff]
      %v535 = vld [vmem:[%s1 + $0x48] sm:$0xff]
      %v536 = vld [vmem:[%s1 + $0x50] sm:$0xff]
      %v537 = vld [vmem:[%s1 + $0x58] sm:$0xff]
      %v538 = vld [vmem:[%s1 + $0x60] sm:$0xff]
      %v539 = vld [vmem:[%s1 + $0x68] sm:$0xff]
      %v540 = vld [vmem:[%s1 + $0x70] sm:$0xff]
      %v541 = vld [vmem:[%s1 + $0x78] sm:$0xff]
      %v542 = vld [vmem:[%s1 + $0x80] sm:$0xff]
      %v543 = vld [vmem:[%s1 + $0x88] sm:$0xff]
      %v544 = vld [vmem:[%s1 + $0x90] sm:$0xff]
      %v545 = vld [vmem:[%s1 + $0x98] sm:$0xff]
      %v546 = vld [vmem:[%s1 + $0xa0] sm:$0xff]
      %v547 = vld [vmem:[%s1 + $0xa8] sm:$0xff]
      %v548 = vld [vmem:[%s1 + $0xb0] sm:$0xff]
      %v549 = vld [vmem:[%s1 + $0xb8] sm:$0xff]
      %v550 = vld [vmem:[%s1 + $0xc0] sm:$0xff]
      %v551 = vld [vmem:[%s1 + $0xc8] sm:$0xff]
      %v552 = vld [vmem:[%s1 + $0xd0] sm:$0xff]
      %v553 = vld [vmem:[%s1 + $0xd8] sm:$0xff]
      %v554 = vld [vmem:[%s1 + $0xe0] sm:$0xff]
      %v555 = vld [vmem:[%s1 + $0xe8] sm:$0xff]
      %v556 = vld [vmem:[%s1 + $0xf0] sm:$0xff]
      %v557 = vld [vmem:[%s1 + $0xf8] sm:$0xff]
      %v558 = vld [vmem:[%s1 + $0x100] sm:$0xff]
      %v559 = vld [vmem:[%s1 + $0x108] sm:$0xff]
      %v560 = vld [vmem:[%s1 + $0x110] sm:$0xff]
      %v561 = vld [vmem:[%s1 + $0x118] sm:$0xff]
      %v562 = vld [vmem:[%s1 + $0x120] sm:$0xff]
      %v563 = vld [vmem:[%s1 + $0x128] sm:$0xff]
      %v564 = vld [vmem:[%s1 + $0x130] sm:$0xff]
      %v565 = vld [vmem:[%s1 + $0x138] sm:$0xff]
      %v566 = vld [vmem:[%s1 + $0x140] sm:$0xff]
      %v567 = vld [vmem:[%s1 + $0x148] sm:$0xff]
      %v568 = vld [vmem:[%s1 + $0x150] sm:$0xff]
      %v569 = vld [vmem:[%s1 + $0x158] sm:$0xff]
      %v570 = vld [vmem:[%s1 + $0x160] sm:$0xff]
      %v571 = vld [vmem:[%s1 + $0x168] sm:$0xff]
      %v572 = vld [vmem:[%s1 + $0x170] sm:$0xff]
      %v573 = vld [vmem:[%s1 + $0x178] sm:$0xff]
      %v574 = vld [vmem:[%s1 + $0x180] sm:$0xff]
      %v575 = vld [vmem:[%s1 + $0x188] sm:$0xff]
      %v576 = vld [vmem:[%s1 + $0x190] sm:$0xff]
      %v577 = vld [vmem:[%s1 + $0x198] sm:$0xff]
      %v578 = vld [vmem:[%s1 + $0x1a0] sm:$0xff]
      %v579 = vld [vmem:[%s1 + $0x1a8] sm:$0xff]
      %v580 = vld [vmem:[%s1 + $0x1b0] sm:$0xff]
      %v581 = vld [vmem:[%s1 + $0x1b8] sm:$0xff]
      %v582 = vld [vmem:[%s1 + $0x1c0] sm:$0xff]
      %v583 = vld [vmem:[%s1 + $0x1c8] sm:$0xff]
      %v584 = vld [vmem:[%s1 + $0x1d0] sm:$0xff]
      %v585 = vld [vmem:[%s1 + $0x1d8] sm:$0xff]
      %v586 = vld [vmem:[%s1 + $0x1e0] sm:$0xff]
      %v587 = vld [vmem:[%s1 + $0x1e8] sm:$0xff]
      %v588 = vld [vmem:[%s1 + $0x1f0] sm:$0xff]
      %v589 = vld [vmem:[%s1 + $0x1f8] sm:$0xff]
      %590 = vmatpush.msra.mxu0 %v556
      %591 = vmatpush.msra.mxu0 %v554
      %592 = vmatpush.msra.mxu0 %v552
      %593 = vmatpush.msra.mxu0 %v550
      %594 = vmatpush.msra.mxu0 %v548
      %595 = vmatpush.msra.mxu0 %v546
      %596 = vmatpush.msra.mxu0 %v544
      %597 = vmatpush.msra.mxu0 %v542
      %598 = vmatpush.msra.mxu0 %v540
      %599 = vmatpush.msra.mxu0 %v538
      %600 = vmatpush.msra.mxu0 %v536
      %601 = vmatpush.msra.mxu0 %v534
      %602 = vmatpush.msra.mxu0 %v532
      %603 = vmatpush.msra.mxu0 %v530
      %604 = vmatpush.msra.mxu0 %v528
      %605 = vmatpush.msra.mxu0 %v526
      %606 = vmatmul.f32.gmra.mxu0 %v524
      %v607 = vpop.f32.mrf.mxu0
      %v608 = vadd.f32 0.0, %v607
      %609 = vdwg.mxu0
      %610 = vmatpush.msra.mxu0 %v588
      %611 = vmatpush.msra.mxu0 %v586
      %612 = vmatpush.msra.mxu0 %v584
      %613 = vmatpush.msra.mxu0 %v582
      %614 = vmatpush.msra.mxu0 %v580
      %615 = vmatpush.msra.mxu0 %v578
      %616 = vmatpush.msra.mxu0 %v576
      %617 = vmatpush.msra.mxu0 %v574
      %618 = vmatpush.msra.mxu0 %v572
      %619 = vmatpush.msra.mxu0 %v570
      %620 = vmatpush.msra.mxu0 %v568
      %621 = vmatpush.msra.mxu0 %v566
      %622 = vmatpush.msra.mxu0 %v564
      %623 = vmatpush.msra.mxu0 %v562
      %624 = vmatpush.msra.mxu0 %v560
      %625 = vmatpush.msra.mxu0 %v558
      %626 = vmatmul.f32.gmra.mxu0 %v525
      %v627 = vpop.f32.mrf.mxu0
      %v628 = vadd.f32 %v608, %v627
      %629 = vdwg.mxu0
      %630 = vmatpush.msra.mxu0 %v557
      %631 = vmatpush.msra.mxu0 %v555
      %632 = vmatpush.msra.mxu0 %v553
      %633 = vmatpush.msra.mxu0 %v551
      %634 = vmatpush.msra.mxu0 %v549
      %635 = vmatpush.msra.mxu0 %v547
      %636 = vmatpush.msra.mxu0 %v545
      %637 = vmatpush.msra.mxu0 %v543
      %638 = vmatpush.msra.mxu0 %v541
      %639 = vmatpush.msra.mxu0 %v539
      %640 = vmatpush.msra.mxu0 %v537
      %641 = vmatpush.msra.mxu0 %v535
      %642 = vmatpush.msra.mxu0 %v533
      %643 = vmatpush.msra.mxu0 %v531
      %644 = vmatpush.msra.mxu0 %v529
      %645 = vmatpush.msra.mxu0 %v527
      %646 = vmatmul.f32.gmra.mxu0 %v524
      %v647 = vpop.f32.mrf.mxu0
      %v648 = vadd.f32 0.0, %v647
      %649 = vdwg.mxu0
      %650 = vmatpush.msra.mxu0 %v589
      %651 = vmatpush.msra.mxu0 %v587
      %652 = vmatpush.msra.mxu0 %v585
      %653 = vmatpush.msra.mxu0 %v583
      %654 = vmatpush.msra.mxu0 %v581
      %655 = vmatpush.msra.mxu0 %v579
      %656 = vmatpush.msra.mxu0 %v577
      %657 = vmatpush.msra.mxu0 %v575
      %658 = vmatpush.msra.mxu0 %v573
      %659 = vmatpush.msra.mxu0 %v571
      %660 = vmatpush.msra.mxu0 %v569
      %661 = vmatpush.msra.mxu0 %v567
      %662 = vmatpush.msra.mxu0 %v565
      %663 = vmatpush.msra.mxu0 %v563
      %664 = vmatpush.msra.mxu0 %v561
      %665 = vmatpush.msra.mxu0 %v559
      %666 = vmatmul.f32.gmra.mxu0 %v525
      %v667 = vpop.f32.mrf.mxu0
      %v668 = vadd.f32 %v648, %v667
      %669 = vdwg.mxu0
      %v670 = vld [vmem:[%s2] sm:$0xff]
      %v671 = vld [vmem:[%s2 + $0x8] sm:$0xff]
      %s672 = scalar_lea.vmem %s1, 512
      %v673 = vld [vmem:[%s672] sm:$0xff]
      %v674 = vld [vmem:[%s672 + $0x8] sm:$0xff]
      %v675 = vld [vmem:[%s672 + $0x10] sm:$0xff]
      %v676 = vld [vmem:[%s672 + $0x18] sm:$0xff]
      %v677 = vld [vmem:[%s672 + $0x20] sm:$0xff]
      %v678 = vld [vmem:[%s672 + $0x28] sm:$0xff]
      %v679 = vld [vmem:[%s672 + $0x30] sm:$0xff]
      %v680 = vld [vmem:[%s672 + $0x38] sm:$0xff]
      %v681 = vld [vmem:[%s672 + $0x40] sm:$0xff]
      %v682 = vld [vmem:[%s672 + $0x48] sm:$0xff]
      %v683 = vld [vmem:[%s672 + $0x50] sm:$0xff]
      %v684 = vld [vmem:[%s672 + $0x58] sm:$0xff]
      %v685 = vld [vmem:[%s672 + $0x60] sm:$0xff]
      %v686 = vld [vmem:[%s672 + $0x68] sm:$0xff]
      %v687 = vld [vmem:[%s672 + $0x70] sm:$0xff]
      %v688 = vld [vmem:[%s672 + $0x78] sm:$0xff]
      %v689 = vld [vmem:[%s672 + $0x80] sm:$0xff]
      %v690 = vld [vmem:[%s672 + $0x88] sm:$0xff]
      %v691 = vld [vmem:[%s672 + $0x90] sm:$0xff]
      %v692 = vld [vmem:[%s672 + $0x98] sm:$0xff]
      %v693 = vld [vmem:[%s672 + $0xa0] sm:$0xff]
      %v694 = vld [vmem:[%s672 + $0xa8] sm:$0xff]
      %v695 = vld [vmem:[%s672 + $0xb0] sm:$0xff]
      %v696 = vld [vmem:[%s672 + $0xb8] sm:$0xff]
      %v697 = vld [vmem:[%s672 + $0xc0] sm:$0xff]
      %v698 = vld [vmem:[%s672 + $0xc8] sm:$0xff]
      %v699 = vld [vmem:[%s672 + $0xd0] sm:$0xff]
      %v700 = vld [vmem:[%s672 + $0xd8] sm:$0xff]
      %v701 = vld [vmem:[%s672 + $0xe0] sm:$0xff]
      %v702 = vld [vmem:[%s672 + $0xe8] sm:$0xff]
      %v703 = vld [vmem:[%s672 + $0xf0] sm:$0xff]
      %v704 = vld [vmem:[%s672 + $0xf8] sm:$0xff]
      %v705 = vld [vmem:[%s672 + $0x100] sm:$0xff]
      %v706 = vld [vmem:[%s672 + $0x108] sm:$0xff]
      %v707 = vld [vmem:[%s672 + $0x110] sm:$0xff]
      %v708 = vld [vmem:[%s672 + $0x118] sm:$0xff]
      %v709 = vld [vmem:[%s672 + $0x120] sm:$0xff]
      %v710 = vld [vmem:[%s672 + $0x128] sm:$0xff]
      %v711 = vld [vmem:[%s672 + $0x130] sm:$0xff]
      %v712 = vld [vmem:[%s672 + $0x138] sm:$0xff]
      %v713 = vld [vmem:[%s672 + $0x140] sm:$0xff]
      %v714 = vld [vmem:[%s672 + $0x148] sm:$0xff]
      %v715 = vld [vmem:[%s672 + $0x150] sm:$0xff]
      %v716 = vld [vmem:[%s672 + $0x158] sm:$0xff]
      %v717 = vld [vmem:[%s672 + $0x160] sm:$0xff]
      %v718 = vld [vmem:[%s672 + $0x168] sm:$0xff]
      %v719 = vld [vmem:[%s672 + $0x170] sm:$0xff]
      %v720 = vld [vmem:[%s672 + $0x178] sm:$0xff]
      %v721 = vld [vmem:[%s672 + $0x180] sm:$0xff]
      %v722 = vld [vmem:[%s672 + $0x188] sm:$0xff]
      %v723 = vld [vmem:[%s672 + $0x190] sm:$0xff]
      %v724 = vld [vmem:[%s672 + $0x198] sm:$0xff]
      %v725 = vld [vmem:[%s672 + $0x1a0] sm:$0xff]
      %v726 = vld [vmem:[%s672 + $0x1a8] sm:$0xff]
      %v727 = vld [vmem:[%s672 + $0x1b0] sm:$0xff]
      %v728 = vld [vmem:[%s672 + $0x1b8] sm:$0xff]
      %v729 = vld [vmem:[%s672 + $0x1c0] sm:$0xff]
      %v730 = vld [vmem:[%s672 + $0x1c8] sm:$0xff]
      %v731 = vld [vmem:[%s672 + $0x1d0] sm:$0xff]
      %v732 = vld [vmem:[%s672 + $0x1d8] sm:$0xff]
      %v733 = vld [vmem:[%s672 + $0x1e0] sm:$0xff]
      %v734 = vld [vmem:[%s672 + $0x1e8] sm:$0xff]
      %v735 = vld [vmem:[%s672 + $0x1f0] sm:$0xff]
      %v736 = vld [vmem:[%s672 + $0x1f8] sm:$0xff]
      %737 = vmatpush.msra.mxu0 %v703
      %738 = vmatpush.msra.mxu0 %v701
      %739 = vmatpush.msra.mxu0 %v699
      %740 = vmatpush.msra.mxu0 %v697
      %741 = vmatpush.msra.mxu0 %v695
      %742 = vmatpush.msra.mxu0 %v693
      %743 = vmatpush.msra.mxu0 %v691
      %744 = vmatpush.msra.mxu0 %v689
      %745 = vmatpush.msra.mxu0 %v687
      %746 = vmatpush.msra.mxu0 %v685
      %747 = vmatpush.msra.mxu0 %v683
      %748 = vmatpush.msra.mxu0 %v681
      %749 = vmatpush.msra.mxu0 %v679
      %750 = vmatpush.msra.mxu0 %v677
      %751 = vmatpush.msra.mxu0 %v675
      %752 = vmatpush.msra.mxu0 %v673
      %753 = vmatmul.f32.gmra.mxu0 %v524
      %v754 = vpop.f32.mrf.mxu0
      %v755 = vadd.f32 0.0, %v754
      %756 = vdwg.mxu0
      %757 = vmatpush.msra.mxu0 %v735
      %758 = vmatpush.msra.mxu0 %v733
      %759 = vmatpush.msra.mxu0 %v731
      %760 = vmatpush.msra.mxu0 %v729
      %761 = vmatpush.msra.mxu0 %v727
      %762 = vmatpush.msra.mxu0 %v725
      %763 = vmatpush.msra.mxu0 %v723
      %764 = vmatpush.msra.mxu0 %v721
      %765 = vmatpush.msra.mxu0 %v719
      %766 = vmatpush.msra.mxu0 %v717
      %767 = vmatpush.msra.mxu0 %v715
      %768 = vmatpush.msra.mxu0 %v713
      %769 = vmatpush.msra.mxu0 %v711
      %770 = vmatpush.msra.mxu0 %v709
      %771 = vmatpush.msra.mxu0 %v707
      %772 = vmatpush.msra.mxu0 %v705
      %773 = vmatmul.f32.gmra.mxu0 %v525
      %v774 = vpop.f32.mrf.mxu0
      %v775 = vadd.f32 %v755, %v774
      %776 = vdwg.mxu0
      %777 = vmatpush.msra.mxu0 %v704
      %778 = vmatpush.msra.mxu0 %v702
      %779 = vmatpush.msra.mxu0 %v700
      %780 = vmatpush.msra.mxu0 %v698
      %781 = vmatpush.msra.mxu0 %v696
      %782 = vmatpush.msra.mxu0 %v694
      %783 = vmatpush.msra.mxu0 %v692
      %784 = vmatpush.msra.mxu0 %v690
      %785 = vmatpush.msra.mxu0 %v688
      %786 = vmatpush.msra.mxu0 %v686
      %787 = vmatpush.msra.mxu0 %v684
      %788 = vmatpush.msra.mxu0 %v682
      %789 = vmatpush.msra.mxu0 %v680
      %790 = vmatpush.msra.mxu0 %v678
      %791 = vmatpush.msra.mxu0 %v676
      %792 = vmatpush.msra.mxu0 %v674
      %793 = vmatmul.f32.gmra.mxu0 %v524
      %v794 = vpop.f32.mrf.mxu0
      %v795 = vadd.f32 0.0, %v794
      %796 = vdwg.mxu0
      %797 = vmatpush.msra.mxu0 %v736
      %798 = vmatpush.msra.mxu0 %v734
      %799 = vmatpush.msra.mxu0 %v732
      %800 = vmatpush.msra.mxu0 %v730
      %801 = vmatpush.msra.mxu0 %v728
      %802 = vmatpush.msra.mxu0 %v726
      %803 = vmatpush.msra.mxu0 %v724
      %804 = vmatpush.msra.mxu0 %v722
      %805 = vmatpush.msra.mxu0 %v720
      %806 = vmatpush.msra.mxu0 %v718
      %807 = vmatpush.msra.mxu0 %v716
      %808 = vmatpush.msra.mxu0 %v714
      %809 = vmatpush.msra.mxu0 %v712
      %810 = vmatpush.msra.mxu0 %v710
      %811 = vmatpush.msra.mxu0 %v708
      %812 = vmatpush.msra.mxu0 %v706
      %813 = vmatmul.f32.gmra.mxu0 %v525
      %v814 = vpop.f32.mrf.mxu0
      %v815 = vadd.f32 %v795, %v814
      %816 = vdwg.mxu0
      %s817 = scalar_lea.vmem %s2, 16
      %v818 = vld [vmem:[%s817] sm:$0xff]
      %v819 = vld [vmem:[%s817 + $0x8] sm:$0xff]
      %vm820 = vcmask 64512
      %v822 = vsel %vm820, %v818, 0
      %v825 = vsel %vm820, %v819, 0
      %827 = vmatpush.msra.mxu0 0.0
      %828 = vmatpush.msra.mxu0 0.0
      %829 = vmatpush.msra.mxu0 0.0
      %830 = vmatpush.msra.mxu0 0.0
      %831 = vmatpush.msra.mxu0 0.0
      %832 = vmatpush.msra.mxu0 0.0
      %833 = vmatpush.msra.mxu0 0.0
      %834 = vmatpush.msra.mxu0 0.0
      %835 = vmatpush.msra.mxu0 0.0
      %836 = vmatpush.msra.mxu0 0.0
      %837 = vmatpush.msra.mxu0 0.0
      %838 = vmatpush.msra.mxu0 0.0
      %839 = vmatpush.msra.mxu0 0.0
      %840 = vmatpush.msra.mxu0 0.0
      %841 = vmatpush.msra.mxu0 0.0
      %842 = vmatpush.msra.mxu0 %v775
      %843 = vmatmul.f32.gmra.mxu0 %v822
      %v844 = vpop.f32.mrf.mxu0
      %v845 = vadd.f32 0.0, %v844
      %846 = vmatmul.f32.gmra.mxu0 %v825
      %v847 = vpop.f32.mrf.mxu0
      %v848 = vadd.f32 0.0, %v847
      %849 = vdwg.mxu0
      %850 = vmatpush.msra.mxu0 0.0
      %851 = vmatpush.msra.mxu0 0.0
      %852 = vmatpush.msra.mxu0 0.0
      %853 = vmatpush.msra.mxu0 0.0
      %854 = vmatpush.msra.mxu0 0.0
      %855 = vmatpush.msra.mxu0 0.0
      %856 = vmatpush.msra.mxu0 0.0
      %857 = vmatpush.msra.mxu0 0.0
      %858 = vmatpush.msra.mxu0 0.0
      %859 = vmatpush.msra.mxu0 0.0
      %860 = vmatpush.msra.mxu0 0.0
      %861 = vmatpush.msra.mxu0 0.0
      %862 = vmatpush.msra.mxu0 0.0
      %863 = vmatpush.msra.mxu0 0.0
      %864 = vmatpush.msra.mxu0 0.0
      %865 = vmatpush.msra.mxu0 %v815
      %866 = vmatmul.f32.gmra.mxu0 %v822
      %v867 = vpop.f32.mrf.mxu0
      %v868 = vadd.f32 0.0, %v867
      %869 = vmatmul.f32.gmra.mxu0 %v825
      %v870 = vpop.f32.mrf.mxu0
      %v871 = vadd.f32 0.0, %v870
      %872 = vdwg.mxu0
      %v874 = vsel %vm820, %v670, 0
      %v877 = vsel %vm820, %v671, 0
      %879 = vmatpush.msra.mxu0 0.0
      %880 = vmatpush.msra.mxu0 0.0
      %881 = vmatpush.msra.mxu0 0.0
      %882 = vmatpush.msra.mxu0 0.0
      %883 = vmatpush.msra.mxu0 0.0
      %884 = vmatpush.msra.mxu0 0.0
      %885 = vmatpush.msra.mxu0 0.0
      %886 = vmatpush.msra.mxu0 0.0
      %887 = vmatpush.msra.mxu0 0.0
      %888 = vmatpush.msra.mxu0 0.0
      %889 = vmatpush.msra.mxu0 0.0
      %890 = vmatpush.msra.mxu0 0.0
      %891 = vmatpush.msra.mxu0 0.0
      %892 = vmatpush.msra.mxu0 0.0
      %893 = vmatpush.msra.mxu0 0.0
      %894 = vmatpush.msra.mxu0 %v628
      %895 = vmatmul.f32.gmra.mxu0 %v874
      %v896 = vpop.f32.mrf.mxu0
      %v897 = vadd.f32 %v845, %v896
      %898 = vmatmul.f32.gmra.mxu0 %v877
      %v899 = vpop.f32.mrf.mxu0
      %v900 = vadd.f32 %v848, %v899
      %901 = vdwg.mxu0
      %902 = vmatpush.msra.mxu0 0.0
      %903 = vmatpush.msra.mxu0 0.0
      %904 = vmatpush.msra.mxu0 0.0
      %905 = vmatpush.msra.mxu0 0.0
      %906 = vmatpush.msra.mxu0 0.0
      %907 = vmatpush.msra.mxu0 0.0
      %908 = vmatpush.msra.mxu0 0.0
      %909 = vmatpush.msra.mxu0 0.0
      %910 = vmatpush.msra.mxu0 0.0
      %911 = vmatpush.msra.mxu0 0.0
      %912 = vmatpush.msra.mxu0 0.0
      %913 = vmatpush.msra.mxu0 0.0
      %914 = vmatpush.msra.mxu0 0.0
      %915 = vmatpush.msra.mxu0 0.0
      %916 = vmatpush.msra.mxu0 0.0
      %917 = vmatpush.msra.mxu0 %v668
      %918 = vmatmul.f32.gmra.mxu0 %v874
      %v919 = vpop.f32.mrf.mxu0
      %v920 = vadd.f32 %v868, %v919
      %921 = vmatmul.f32.gmra.mxu0 %v877
      %v922 = vpop.f32.mrf.mxu0
      %v923 = vadd.f32 %v871, %v922
      %924 = vdwg.mxu0
      %s925 = scalar_lea.vmem %s1, 1024
      %v926 = vld [vmem:[%s925] sm:$0xff]
      %v927 = vld [vmem:[%s925 + $0x8] sm:$0xff]
      %v928 = vld [vmem:[%s925 + $0x10] sm:$0xff]
      %v929 = vld [vmem:[%s925 + $0x18] sm:$0xff]
      %v930 = vld [vmem:[%s925 + $0x20] sm:$0xff]
      %v931 = vld [vmem:[%s925 + $0x28] sm:$0xff]
      %v932 = vld [vmem:[%s925 + $0x30] sm:$0xff]
      %v933 = vld [vmem:[%s925 + $0x38] sm:$0xff]
      %v934 = vld [vmem:[%s925 + $0x40] sm:$0xff]
      %v935 = vld [vmem:[%s925 + $0x48] sm:$0xff]
      %v936 = vld [vmem:[%s925 + $0x50] sm:$0xff]
      %v937 = vld [vmem:[%s925 + $0x58] sm:$0xff]
      %v938 = vld [vmem:[%s925 + $0x60] sm:$0xff]
      %v939 = vld [vmem:[%s925 + $0x68] sm:$0xff]
      %v940 = vld [vmem:[%s925 + $0x70] sm:$0xff]
      %v941 = vld [vmem:[%s925 + $0x78] sm:$0xff]
      %v942 = vld [vmem:[%s925 + $0x80] sm:$0xff]
      %v943 = vld [vmem:[%s925 + $0x88] sm:$0xff]
      %v944 = vld [vmem:[%s925 + $0x90] sm:$0xff]
      %v945 = vld [vmem:[%s925 + $0x98] sm:$0xff]
      %v946 = vld [vmem:[%s925 + $0xa0] sm:$0xff]
      %v947 = vld [vmem:[%s925 + $0xa8] sm:$0xff]
      %v948 = vld [vmem:[%s925 + $0xb0] sm:$0xff]
      %v949 = vld [vmem:[%s925 + $0xb8] sm:$0xff]
      %v950 = vld [vmem:[%s925 + $0xc0] sm:$0xff]
      %v951 = vld [vmem:[%s925 + $0xc8] sm:$0xff]
      %v952 = vld [vmem:[%s925 + $0xd0] sm:$0xff]
      %v953 = vld [vmem:[%s925 + $0xd8] sm:$0xff]
      %v954 = vld [vmem:[%s925 + $0xe0] sm:$0xff]
      %v955 = vld [vmem:[%s925 + $0xe8] sm:$0xff]
      %v956 = vld [vmem:[%s925 + $0xf0] sm:$0xff]
      %v957 = vld [vmem:[%s925 + $0xf8] sm:$0xff]
      %v958 = vld [vmem:[%s925 + $0x100] sm:$0xff]
      %v959 = vld [vmem:[%s925 + $0x108] sm:$0xff]
      %v960 = vld [vmem:[%s925 + $0x110] sm:$0xff]
      %v961 = vld [vmem:[%s925 + $0x118] sm:$0xff]
      %v962 = vld [vmem:[%s925 + $0x120] sm:$0xff]
      %v963 = vld [vmem:[%s925 + $0x128] sm:$0xff]
      %v964 = vld [vmem:[%s925 + $0x130] sm:$0xff]
      %v965 = vld [vmem:[%s925 + $0x138] sm:$0xff]
      %v966 = vld [vmem:[%s925 + $0x140] sm:$0xff]
      %v967 = vld [vmem:[%s925 + $0x148] sm:$0xff]
      %v968 = vld [vmem:[%s925 + $0x150] sm:$0xff]
      %v969 = vld [vmem:[%s925 + $0x158] sm:$0xff]
      %v970 = vld [vmem:[%s925 + $0x160] sm:$0xff]
      %v971 = vld [vmem:[%s925 + $0x168] sm:$0xff]
      %v972 = vld [vmem:[%s925 + $0x170] sm:$0xff]
      %v973 = vld [vmem:[%s925 + $0x178] sm:$0xff]
      %v974 = vld [vmem:[%s925 + $0x180] sm:$0xff]
      %v975 = vld [vmem:[%s925 + $0x188] sm:$0xff]
      %v976 = vld [vmem:[%s925 + $0x190] sm:$0xff]
      %v977 = vld [vmem:[%s925 + $0x198] sm:$0xff]
      %v978 = vld [vmem:[%s925 + $0x1a0] sm:$0xff]
      %v979 = vld [vmem:[%s925 + $0x1a8] sm:$0xff]
      %v980 = vld [vmem:[%s925 + $0x1b0] sm:$0xff]
      %v981 = vld [vmem:[%s925 + $0x1b8] sm:$0xff]
      %v982 = vld [vmem:[%s925 + $0x1c0] sm:$0xff]
      %v983 = vld [vmem:[%s925 + $0x1c8] sm:$0xff]
      %v984 = vld [vmem:[%s925 + $0x1d0] sm:$0xff]
      %v985 = vld [vmem:[%s925 + $0x1d8] sm:$0xff]
      %v986 = vld [vmem:[%s925 + $0x1e0] sm:$0xff]
      %v987 = vld [vmem:[%s925 + $0x1e8] sm:$0xff]
      %v988 = vld [vmem:[%s925 + $0x1f0] sm:$0xff]
      %v989 = vld [vmem:[%s925 + $0x1f8] sm:$0xff]
      %990 = vmatpush.msra.mxu0 %v956
      %991 = vmatpush.msra.mxu0 %v954
      %992 = vmatpush.msra.mxu0 %v952
      %993 = vmatpush.msra.mxu0 %v950
      %994 = vmatpush.msra.mxu0 %v948
      %995 = vmatpush.msra.mxu0 %v946
      %996 = vmatpush.msra.mxu0 %v944
      %997 = vmatpush.msra.mxu0 %v942
      %998 = vmatpush.msra.mxu0 %v940
      %999 = vmatpush.msra.mxu0 %v938
      %1000 = vmatpush.msra.mxu0 %v936
      %1001 = vmatpush.msra.mxu0 %v934
      %1002 = vmatpush.msra.mxu0 %v932
      %1003 = vmatpush.msra.mxu0 %v930
      %1004 = vmatpush.msra.mxu0 %v928
      %1005 = vmatpush.msra.mxu0 %v926
      %1006 = vmatmul.f32.gmra.mxu0 %v524
      %v1007 = vpop.f32.mrf.mxu0
      %v1008 = vadd.f32 0.0, %v1007
      %1009 = vdwg.mxu0
      %1010 = vmatpush.msra.mxu0 %v988
      %1011 = vmatpush.msra.mxu0 %v986
      %1012 = vmatpush.msra.mxu0 %v984
      %1013 = vmatpush.msra.mxu0 %v982
      %1014 = vmatpush.msra.mxu0 %v980
      %1015 = vmatpush.msra.mxu0 %v978
      %1016 = vmatpush.msra.mxu0 %v976
      %1017 = vmatpush.msra.mxu0 %v974
      %1018 = vmatpush.msra.mxu0 %v972
      %1019 = vmatpush.msra.mxu0 %v970
      %1020 = vmatpush.msra.mxu0 %v968
      %1021 = vmatpush.msra.mxu0 %v966
      %1022 = vmatpush.msra.mxu0 %v964
      %1023 = vmatpush.msra.mxu0 %v962
      %1024 = vmatpush.msra.mxu0 %v960
      %1025 = vmatpush.msra.mxu0 %v958
      %1026 = vmatmul.f32.gmra.mxu0 %v525
      %v1027 = vpop.f32.mrf.mxu0
      %v1028 = vadd.f32 %v1008, %v1027
      %1029 = vdwg.mxu0
      %1030 = vmatpush.msra.mxu0 %v957
      %1031 = vmatpush.msra.mxu0 %v955
      %1032 = vmatpush.msra.mxu0 %v953
      %1033 = vmatpush.msra.mxu0 %v951
      %1034 = vmatpush.msra.mxu0 %v949
      %1035 = vmatpush.msra.mxu0 %v947
      %1036 = vmatpush.msra.mxu0 %v945
      %1037 = vmatpush.msra.mxu0 %v943
      %1038 = vmatpush.msra.mxu0 %v941
      %1039 = vmatpush.msra.mxu0 %v939
      %1040 = vmatpush.msra.mxu0 %v937
      %1041 = vmatpush.msra.mxu0 %v935
      %1042 = vmatpush.msra.mxu0 %v933
      %1043 = vmatpush.msra.mxu0 %v931
      %1044 = vmatpush.msra.mxu0 %v929
      %1045 = vmatpush.msra.mxu0 %v927
      %1046 = vmatmul.f32.gmra.mxu0 %v524
      %v1047 = vpop.f32.mrf.mxu0
      %v1048 = vadd.f32 0.0, %v1047
      %1049 = vdwg.mxu0
      %1050 = vmatpush.msra.mxu0 %v989
      %1051 = vmatpush.msra.mxu0 %v987
      %1052 = vmatpush.msra.mxu0 %v985
      %1053 = vmatpush.msra.mxu0 %v983
      %1054 = vmatpush.msra.mxu0 %v981
      %1055 = vmatpush.msra.mxu0 %v979
      %1056 = vmatpush.msra.mxu0 %v977
      %1057 = vmatpush.msra.mxu0 %v975
      %1058 = vmatpush.msra.mxu0 %v973
      %1059 = vmatpush.msra.mxu0 %v971
      %1060 = vmatpush.msra.mxu0 %v969
      %1061 = vmatpush.msra.mxu0 %v967
      %1062 = vmatpush.msra.mxu0 %v965
      %1063 = vmatpush.msra.mxu0 %v963
      %1064 = vmatpush.msra.mxu0 %v961
      %1065 = vmatpush.msra.mxu0 %v959
      %1066 = vmatmul.f32.gmra.mxu0 %v525
      %v1067 = vpop.f32.mrf.mxu0
      %v1068 = vadd.f32 %v1048, %v1067
      %1069 = vdwg.mxu0
      %s1070 = scalar_lea.vmem %s2, 32
      %v1071 = vld [vmem:[%s1070] sm:$0xff]
      %v1072 = vld [vmem:[%s1070 + $0x8] sm:$0xff]
      %v1074 = vsel %vm820, %v1071, 0
      %v1077 = vsel %vm820, %v1072, 0
      %1079 = vmatpush.msra.mxu0 0.0
      %1080 = vmatpush.msra.mxu0 0.0
      %1081 = vmatpush.msra.mxu0 0.0
      %1082 = vmatpush.msra.mxu0 0.0
      %1083 = vmatpush.msra.mxu0 0.0
      %1084 = vmatpush.msra.mxu0 0.0
      %1085 = vmatpush.msra.mxu0 0.0
      %1086 = vmatpush.msra.mxu0 0.0
      %1087 = vmatpush.msra.mxu0 0.0
      %1088 = vmatpush.msra.mxu0 0.0
      %1089 = vmatpush.msra.mxu0 0.0
      %1090 = vmatpush.msra.mxu0 0.0
      %1091 = vmatpush.msra.mxu0 0.0
      %1092 = vmatpush.msra.mxu0 0.0
      %1093 = vmatpush.msra.mxu0 0.0
      %1094 = vmatpush.msra.mxu0 %v1028
      %1095 = vmatmul.f32.gmra.mxu0 %v1074
      %v1096 = vpop.f32.mrf.mxu0
      %v1097 = vadd.f32 0.0, %v1096
      %1098 = vmatmul.f32.gmra.mxu0 %v1077
      %v1099 = vpop.f32.mrf.mxu0
      %v1100 = vadd.f32 0.0, %v1099
      %1101 = vdwg.mxu0
      %1102 = vmatpush.msra.mxu0 0.0
      %1103 = vmatpush.msra.mxu0 0.0
      %1104 = vmatpush.msra.mxu0 0.0
      %1105 = vmatpush.msra.mxu0 0.0
      %1106 = vmatpush.msra.mxu0 0.0
      %1107 = vmatpush.msra.mxu0 0.0
      %1108 = vmatpush.msra.mxu0 0.0
      %1109 = vmatpush.msra.mxu0 0.0
      %1110 = vmatpush.msra.mxu0 0.0
      %1111 = vmatpush.msra.mxu0 0.0
      %1112 = vmatpush.msra.mxu0 0.0
      %1113 = vmatpush.msra.mxu0 0.0
      %1114 = vmatpush.msra.mxu0 0.0
      %1115 = vmatpush.msra.mxu0 0.0
      %1116 = vmatpush.msra.mxu0 0.0
      %1117 = vmatpush.msra.mxu0 %v1068
      %1118 = vmatmul.f32.gmra.mxu0 %v1074
      %v1119 = vpop.f32.mrf.mxu0
      %v1120 = vadd.f32 0.0, %v1119
      %1121 = vmatmul.f32.gmra.mxu0 %v1077
      %v1122 = vpop.f32.mrf.mxu0
      %v1123 = vadd.f32 0.0, %v1122
      %1124 = vdwg.mxu0
      %v1125 = vadd.f32 %v897, %v1097
      %v1126 = vadd.f32 %v920, %v1120
      %v1127 = vadd.f32 %v900, %v1100
      %v1128 = vadd.f32 %v923, %v1123
      %s1129 = scalar_lea.vmem %s1, 1536
      %v1130 = vld [vmem:[%s1129] sm:$0xff]
      %v1131 = vld [vmem:[%s1129 + $0x8] sm:$0xff]
      %v1132 = vld [vmem:[%s1129 + $0x10] sm:$0xff]
      %v1133 = vld [vmem:[%s1129 + $0x18] sm:$0xff]
      %v1134 = vld [vmem:[%s1129 + $0x20] sm:$0xff]
      %v1135 = vld [vmem:[%s1129 + $0x28] sm:$0xff]
      %v1136 = vld [vmem:[%s1129 + $0x30] sm:$0xff]
      %v1137 = vld [vmem:[%s1129 + $0x38] sm:$0xff]
      %v1138 = vld [vmem:[%s1129 + $0x40] sm:$0xff]
      %v1139 = vld [vmem:[%s1129 + $0x48] sm:$0xff]
      %v1140 = vld [vmem:[%s1129 + $0x50] sm:$0xff]
      %v1141 = vld [vmem:[%s1129 + $0x58] sm:$0xff]
      %v1142 = vld [vmem:[%s1129 + $0x60] sm:$0xff]
      %v1143 = vld [vmem:[%s1129 + $0x68] sm:$0xff]
      %v1144 = vld [vmem:[%s1129 + $0x70] sm:$0xff]
      %v1145 = vld [vmem:[%s1129 + $0x78] sm:$0xff]
      %v1146 = vld [vmem:[%s1129 + $0x80] sm:$0xff]
      %v1147 = vld [vmem:[%s1129 + $0x88] sm:$0xff]
      %v1148 = vld [vmem:[%s1129 + $0x90] sm:$0xff]
      %v1149 = vld [vmem:[%s1129 + $0x98] sm:$0xff]
      %v1150 = vld [vmem:[%s1129 + $0xa0] sm:$0xff]
      %v1151 = vld [vmem:[%s1129 + $0xa8] sm:$0xff]
      %v1152 = vld [vmem:[%s1129 + $0xb0] sm:$0xff]
      %v1153 = vld [vmem:[%s1129 + $0xb8] sm:$0xff]
      %v1154 = vld [vmem:[%s1129 + $0xc0] sm:$0xff]
      %v1155 = vld [vmem:[%s1129 + $0xc8] sm:$0xff]
      %v1156 = vld [vmem:[%s1129 + $0xd0] sm:$0xff]
      %v1157 = vld [vmem:[%s1129 + $0xd8] sm:$0xff]
      %v1158 = vld [vmem:[%s1129 + $0xe0] sm:$0xff]
      %v1159 = vld [vmem:[%s1129 + $0xe8] sm:$0xff]
      %v1160 = vld [vmem:[%s1129 + $0xf0] sm:$0xff]
      %v1161 = vld [vmem:[%s1129 + $0xf8] sm:$0xff]
      %v1162 = vld [vmem:[%s1129 + $0x100] sm:$0xff]
      %v1163 = vld [vmem:[%s1129 + $0x108] sm:$0xff]
      %v1164 = vld [vmem:[%s1129 + $0x110] sm:$0xff]
      %v1165 = vld [vmem:[%s1129 + $0x118] sm:$0xff]
      %v1166 = vld [vmem:[%s1129 + $0x120] sm:$0xff]
      %v1167 = vld [vmem:[%s1129 + $0x128] sm:$0xff]
      %v1168 = vld [vmem:[%s1129 + $0x130] sm:$0xff]
      %v1169 = vld [vmem:[%s1129 + $0x138] sm:$0xff]
      %v1170 = vld [vmem:[%s1129 + $0x140] sm:$0xff]
      %v1171 = vld [vmem:[%s1129 + $0x148] sm:$0xff]
      %v1172 = vld [vmem:[%s1129 + $0x150] sm:$0xff]
      %v1173 = vld [vmem:[%s1129 + $0x158] sm:$0xff]
      %v1174 = vld [vmem:[%s1129 + $0x160] sm:$0xff]
      %v1175 = vld [vmem:[%s1129 + $0x168] sm:$0xff]
      %v1176 = vld [vmem:[%s1129 + $0x170] sm:$0xff]
      %v1177 = vld [vmem:[%s1129 + $0x178] sm:$0xff]
      %v1178 = vld [vmem:[%s1129 + $0x180] sm:$0xff]
      %v1179 = vld [vmem:[%s1129 + $0x188] sm:$0xff]
      %v1180 = vld [vmem:[%s1129 + $0x190] sm:$0xff]
      %v1181 = vld [vmem:[%s1129 + $0x198] sm:$0xff]
      %v1182 = vld [vmem:[%s1129 + $0x1a0] sm:$0xff]
      %v1183 = vld [vmem:[%s1129 + $0x1a8] sm:$0xff]
      %v1184 = vld [vmem:[%s1129 + $0x1b0] sm:$0xff]
      %v1185 = vld [vmem:[%s1129 + $0x1b8] sm:$0xff]
      %v1186 = vld [vmem:[%s1129 + $0x1c0] sm:$0xff]
      %v1187 = vld [vmem:[%s1129 + $0x1c8] sm:$0xff]
      %v1188 = vld [vmem:[%s1129 + $0x1d0] sm:$0xff]
      %v1189 = vld [vmem:[%s1129 + $0x1d8] sm:$0xff]
      %v1190 = vld [vmem:[%s1129 + $0x1e0] sm:$0xff]
      %v1191 = vld [vmem:[%s1129 + $0x1e8] sm:$0xff]
      %v1192 = vld [vmem:[%s1129 + $0x1f0] sm:$0xff]
      %v1193 = vld [vmem:[%s1129 + $0x1f8] sm:$0xff]
      %1194 = vmatpush.msra.mxu0 %v1160
      %1195 = vmatpush.msra.mxu0 %v1158
      %1196 = vmatpush.msra.mxu0 %v1156
      %1197 = vmatpush.msra.mxu0 %v1154
      %1198 = vmatpush.msra.mxu0 %v1152
      %1199 = vmatpush.msra.mxu0 %v1150
      %1200 = vmatpush.msra.mxu0 %v1148
      %1201 = vmatpush.msra.mxu0 %v1146
      %1202 = vmatpush.msra.mxu0 %v1144
      %1203 = vmatpush.msra.mxu0 %v1142
      %1204 = vmatpush.msra.mxu0 %v1140
      %1205 = vmatpush.msra.mxu0 %v1138
      %1206 = vmatpush.msra.mxu0 %v1136
      %1207 = vmatpush.msra.mxu0 %v1134
      %1208 = vmatpush.msra.mxu0 %v1132
      %1209 = vmatpush.msra.mxu0 %v1130
      %1210 = vmatmul.f32.gmra.mxu0 %v524
      %v1211 = vpop.f32.mrf.mxu0
      %v1212 = vadd.f32 0.0, %v1211
      %1213 = vdwg.mxu0
      %1214 = vmatpush.msra.mxu0 %v1192
      %1215 = vmatpush.msra.mxu0 %v1190
      %1216 = vmatpush.msra.mxu0 %v1188
      %1217 = vmatpush.msra.mxu0 %v1186
      %1218 = vmatpush.msra.mxu0 %v1184
      %1219 = vmatpush.msra.mxu0 %v1182
      %1220 = vmatpush.msra.mxu0 %v1180
      %1221 = vmatpush.msra.mxu0 %v1178
      %1222 = vmatpush.msra.mxu0 %v1176
      %1223 = vmatpush.msra.mxu0 %v1174
      %1224 = vmatpush.msra.mxu0 %v1172
      %1225 = vmatpush.msra.mxu0 %v1170
      %1226 = vmatpush.msra.mxu0 %v1168
      %1227 = vmatpush.msra.mxu0 %v1166
      %1228 = vmatpush.msra.mxu0 %v1164
      %1229 = vmatpush.msra.mxu0 %v1162
      %1230 = vmatmul.f32.gmra.mxu0 %v525
      %v1231 = vpop.f32.mrf.mxu0
      %v1232 = vadd.f32 %v1212, %v1231
      %1233 = vdwg.mxu0
      %1234 = vmatpush.msra.mxu0 %v1161
      %1235 = vmatpush.msra.mxu0 %v1159
      %1236 = vmatpush.msra.mxu0 %v1157
      %1237 = vmatpush.msra.mxu0 %v1155
      %1238 = vmatpush.msra.mxu0 %v1153
      %1239 = vmatpush.msra.mxu0 %v1151
      %1240 = vmatpush.msra.mxu0 %v1149
      %1241 = vmatpush.msra.mxu0 %v1147
      %1242 = vmatpush.msra.mxu0 %v1145
      %1243 = vmatpush.msra.mxu0 %v1143
      %1244 = vmatpush.msra.mxu0 %v1141
      %1245 = vmatpush.msra.mxu0 %v1139
      %1246 = vmatpush.msra.mxu0 %v1137
      %1247 = vmatpush.msra.mxu0 %v1135
      %1248 = vmatpush.msra.mxu0 %v1133
      %1249 = vmatpush.msra.mxu0 %v1131
      %1250 = vmatmul.f32.gmra.mxu0 %v524
      %v1251 = vpop.f32.mrf.mxu0
      %v1252 = vadd.f32 0.0, %v1251
      %1253 = vdwg.mxu0
      %1254 = vmatpush.msra.mxu0 %v1193
      %1255 = vmatpush.msra.mxu0 %v1191
      %1256 = vmatpush.msra.mxu0 %v1189
      %1257 = vmatpush.msra.mxu0 %v1187
      %1258 = vmatpush.msra.mxu0 %v1185
      %1259 = vmatpush.msra.mxu0 %v1183
      %1260 = vmatpush.msra.mxu0 %v1181
      %1261 = vmatpush.msra.mxu0 %v1179
      %1262 = vmatpush.msra.mxu0 %v1177
      %1263 = vmatpush.msra.mxu0 %v1175
      %1264 = vmatpush.msra.mxu0 %v1173
      %1265 = vmatpush.msra.mxu0 %v1171
      %1266 = vmatpush.msra.mxu0 %v1169
      %1267 = vmatpush.msra.mxu0 %v1167
      %1268 = vmatpush.msra.mxu0 %v1165
      %1269 = vmatpush.msra.mxu0 %v1163
      %1270 = vmatmul.f32.gmra.mxu0 %v525
      %v1271 = vpop.f32.mrf.mxu0
      %v1272 = vadd.f32 %v1252, %v1271
      %1273 = vdwg.mxu0
      %s1274 = scalar_lea.vmem %s2, 48
      %v1275 = vld [vmem:[%s1274] sm:$0xff]
      %v1276 = vld [vmem:[%s1274 + $0x8] sm:$0xff]
      %v1278 = vsel %vm820, %v1275, 0
      %v1281 = vsel %vm820, %v1276, 0
      %1283 = vmatpush.msra.mxu0 0.0
      %1284 = vmatpush.msra.mxu0 0.0
      %1285 = vmatpush.msra.mxu0 0.0
      %1286 = vmatpush.msra.mxu0 0.0
      %1287 = vmatpush.msra.mxu0 0.0
      %1288 = vmatpush.msra.mxu0 0.0
      %1289 = vmatpush.msra.mxu0 0.0
      %1290 = vmatpush.msra.mxu0 0.0
      %1291 = vmatpush.msra.mxu0 0.0
      %1292 = vmatpush.msra.mxu0 0.0
      %1293 = vmatpush.msra.mxu0 0.0
      %1294 = vmatpush.msra.mxu0 0.0
      %1295 = vmatpush.msra.mxu0 0.0
      %1296 = vmatpush.msra.mxu0 0.0
      %1297 = vmatpush.msra.mxu0 0.0
      %1298 = vmatpush.msra.mxu0 %v1232
      %1299 = vmatmul.f32.gmra.mxu0 %v1278
      %v1300 = vpop.f32.mrf.mxu0
      %v1301 = vadd.f32 0.0, %v1300
      %1302 = vmatmul.f32.gmra.mxu0 %v1281
      %v1303 = vpop.f32.mrf.mxu0
      %v1304 = vadd.f32 0.0, %v1303
      %1305 = vdwg.mxu0
      %1306 = vmatpush.msra.mxu0 0.0
      %1307 = vmatpush.msra.mxu0 0.0
      %1308 = vmatpush.msra.mxu0 0.0
      %1309 = vmatpush.msra.mxu0 0.0
      %1310 = vmatpush.msra.mxu0 0.0
      %1311 = vmatpush.msra.mxu0 0.0
      %1312 = vmatpush.msra.mxu0 0.0
      %1313 = vmatpush.msra.mxu0 0.0
      %1314 = vmatpush.msra.mxu0 0.0
      %1315 = vmatpush.msra.mxu0 0.0
      %1316 = vmatpush.msra.mxu0 0.0
      %1317 = vmatpush.msra.mxu0 0.0
      %1318 = vmatpush.msra.mxu0 0.0
      %1319 = vmatpush.msra.mxu0 0.0
      %1320 = vmatpush.msra.mxu0 0.0
      %1321 = vmatpush.msra.mxu0 %v1272
      %1322 = vmatmul.f32.gmra.mxu0 %v1278
      %v1323 = vpop.f32.mrf.mxu0
      %v1324 = vadd.f32 0.0, %v1323
      %1325 = vmatmul.f32.gmra.mxu0 %v1281
      %v1326 = vpop.f32.mrf.mxu0
      %v1327 = vadd.f32 0.0, %v1326
      %1328 = vdwg.mxu0
      %v1329 = vadd.f32 %v1125, %v1301
      %v1330 = vadd.f32 %v1126, %v1324
      %v1331 = vadd.f32 %v1127, %v1304
      %v1332 = vadd.f32 %v1128, %v1327
      %s1333 = scalar_lea.vmem %s1, 2048
      %v1334 = vld [vmem:[%s1333] sm:$0xff]
      %v1335 = vld [vmem:[%s1333 + $0x8] sm:$0xff]
      %v1336 = vld [vmem:[%s1333 + $0x10] sm:$0xff]
      %v1337 = vld [vmem:[%s1333 + $0x18] sm:$0xff]
      %v1338 = vld [vmem:[%s1333 + $0x20] sm:$0xff]
      %v1339 = vld [vmem:[%s1333 + $0x28] sm:$0xff]
      %v1340 = vld [vmem:[%s1333 + $0x30] sm:$0xff]
      %v1341 = vld [vmem:[%s1333 + $0x38] sm:$0xff]
      %v1342 = vld [vmem:[%s1333 + $0x40] sm:$0xff]
      %v1343 = vld [vmem:[%s1333 + $0x48] sm:$0xff]
      %v1344 = vld [vmem:[%s1333 + $0x50] sm:$0xff]
      %v1345 = vld [vmem:[%s1333 + $0x58] sm:$0xff]
      %v1346 = vld [vmem:[%s1333 + $0x60] sm:$0xff]
      %v1347 = vld [vmem:[%s1333 + $0x68] sm:$0xff]
      %v1348 = vld [vmem:[%s1333 + $0x70] sm:$0xff]
      %v1349 = vld [vmem:[%s1333 + $0x78] sm:$0xff]
      %v1350 = vld [vmem:[%s1333 + $0x80] sm:$0xff]
      %v1351 = vld [vmem:[%s1333 + $0x88] sm:$0xff]
      %v1352 = vld [vmem:[%s1333 + $0x90] sm:$0xff]
      %v1353 = vld [vmem:[%s1333 + $0x98] sm:$0xff]
      %v1354 = vld [vmem:[%s1333 + $0xa0] sm:$0xff]
      %v1355 = vld [vmem:[%s1333 + $0xa8] sm:$0xff]
      %v1356 = vld [vmem:[%s1333 + $0xb0] sm:$0xff]
      %v1357 = vld [vmem:[%s1333 + $0xb8] sm:$0xff]
      %v1358 = vld [vmem:[%s1333 + $0xc0] sm:$0xff]
      %v1359 = vld [vmem:[%s1333 + $0xc8] sm:$0xff]
      %v1360 = vld [vmem:[%s1333 + $0xd0] sm:$0xff]
      %v1361 = vld [vmem:[%s1333 + $0xd8] sm:$0xff]
      %v1362 = vld [vmem:[%s1333 + $0xe0] sm:$0xff]
      %v1363 = vld [vmem:[%s1333 + $0xe8] sm:$0xff]
      %v1364 = vld [vmem:[%s1333 + $0xf0] sm:$0xff]
      %v1365 = vld [vmem:[%s1333 + $0xf8] sm:$0xff]
      %v1366 = vld [vmem:[%s1333 + $0x100] sm:$0xff]
      %v1367 = vld [vmem:[%s1333 + $0x108] sm:$0xff]
      %v1368 = vld [vmem:[%s1333 + $0x110] sm:$0xff]
      %v1369 = vld [vmem:[%s1333 + $0x118] sm:$0xff]
      %v1370 = vld [vmem:[%s1333 + $0x120] sm:$0xff]
      %v1371 = vld [vmem:[%s1333 + $0x128] sm:$0xff]
      %v1372 = vld [vmem:[%s1333 + $0x130] sm:$0xff]
      %v1373 = vld [vmem:[%s1333 + $0x138] sm:$0xff]
      %v1374 = vld [vmem:[%s1333 + $0x140] sm:$0xff]
      %v1375 = vld [vmem:[%s1333 + $0x148] sm:$0xff]
      %v1376 = vld [vmem:[%s1333 + $0x150] sm:$0xff]
      %v1377 = vld [vmem:[%s1333 + $0x158] sm:$0xff]
      %v1378 = vld [vmem:[%s1333 + $0x160] sm:$0xff]
      %v1379 = vld [vmem:[%s1333 + $0x168] sm:$0xff]
      %v1380 = vld [vmem:[%s1333 + $0x170] sm:$0xff]
      %v1381 = vld [vmem:[%s1333 + $0x178] sm:$0xff]
      %v1382 = vld [vmem:[%s1333 + $0x180] sm:$0xff]
      %v1383 = vld [vmem:[%s1333 + $0x188] sm:$0xff]
      %v1384 = vld [vmem:[%s1333 + $0x190] sm:$0xff]
      %v1385 = vld [vmem:[%s1333 + $0x198] sm:$0xff]
      %v1386 = vld [vmem:[%s1333 + $0x1a0] sm:$0xff]
      %v1387 = vld [vmem:[%s1333 + $0x1a8] sm:$0xff]
      %v1388 = vld [vmem:[%s1333 + $0x1b0] sm:$0xff]
      %v1389 = vld [vmem:[%s1333 + $0x1b8] sm:$0xff]
      %v1390 = vld [vmem:[%s1333 + $0x1c0] sm:$0xff]
      %v1391 = vld [vmem:[%s1333 + $0x1c8] sm:$0xff]
      %v1392 = vld [vmem:[%s1333 + $0x1d0] sm:$0xff]
      %v1393 = vld [vmem:[%s1333 + $0x1d8] sm:$0xff]
      %v1394 = vld [vmem:[%s1333 + $0x1e0] sm:$0xff]
      %v1395 = vld [vmem:[%s1333 + $0x1e8] sm:$0xff]
      %v1396 = vld [vmem:[%s1333 + $0x1f0] sm:$0xff]
      %v1397 = vld [vmem:[%s1333 + $0x1f8] sm:$0xff]
      %1398 = vmatpush.msra.mxu0 %v1364
      %1399 = vmatpush.msra.mxu0 %v1362
      %1400 = vmatpush.msra.mxu0 %v1360
      %1401 = vmatpush.msra.mxu0 %v1358
      %1402 = vmatpush.msra.mxu0 %v1356
      %1403 = vmatpush.msra.mxu0 %v1354
      %1404 = vmatpush.msra.mxu0 %v1352
      %1405 = vmatpush.msra.mxu0 %v1350
      %1406 = vmatpush.msra.mxu0 %v1348
      %1407 = vmatpush.msra.mxu0 %v1346
      %1408 = vmatpush.msra.mxu0 %v1344
      %1409 = vmatpush.msra.mxu0 %v1342
      %1410 = vmatpush.msra.mxu0 %v1340
      %1411 = vmatpush.msra.mxu0 %v1338
      %1412 = vmatpush.msra.mxu0 %v1336
      %1413 = vmatpush.msra.mxu0 %v1334
      %1414 = vmatmul.f32.gmra.mxu0 %v524
      %v1415 = vpop.f32.mrf.mxu0
      %v1416 = vadd.f32 0.0, %v1415
      %1417 = vdwg.mxu0
      %1418 = vmatpush.msra.mxu0 %v1396
      %1419 = vmatpush.msra.mxu0 %v1394
      %1420 = vmatpush.msra.mxu0 %v1392
      %1421 = vmatpush.msra.mxu0 %v1390
      %1422 = vmatpush.msra.mxu0 %v1388
      %1423 = vmatpush.msra.mxu0 %v1386
      %1424 = vmatpush.msra.mxu0 %v1384
      %1425 = vmatpush.msra.mxu0 %v1382
      %1426 = vmatpush.msra.mxu0 %v1380
      %1427 = vmatpush.msra.mxu0 %v1378
      %1428 = vmatpush.msra.mxu0 %v1376
      %1429 = vmatpush.msra.mxu0 %v1374
      %1430 = vmatpush.msra.mxu0 %v1372
      %1431 = vmatpush.msra.mxu0 %v1370
      %1432 = vmatpush.msra.mxu0 %v1368
      %1433 = vmatpush.msra.mxu0 %v1366
      %1434 = vmatmul.f32.gmra.mxu0 %v525
      %v1435 = vpop.f32.mrf.mxu0
      %v1436 = vadd.f32 %v1416, %v1435
      %1437 = vdwg.mxu0
      %1438 = vmatpush.msra.mxu0 %v1365
      %1439 = vmatpush.msra.mxu0 %v1363
      %1440 = vmatpush.msra.mxu0 %v1361
      %1441 = vmatpush.msra.mxu0 %v1359
      %1442 = vmatpush.msra.mxu0 %v1357
      %1443 = vmatpush.msra.mxu0 %v1355
      %1444 = vmatpush.msra.mxu0 %v1353
      %1445 = vmatpush.msra.mxu0 %v1351
      %1446 = vmatpush.msra.mxu0 %v1349
      %1447 = vmatpush.msra.mxu0 %v1347
      %1448 = vmatpush.msra.mxu0 %v1345
      %1449 = vmatpush.msra.mxu0 %v1343
      %1450 = vmatpush.msra.mxu0 %v1341
      %1451 = vmatpush.msra.mxu0 %v1339
      %1452 = vmatpush.msra.mxu0 %v1337
      %1453 = vmatpush.msra.mxu0 %v1335
      %1454 = vmatmul.f32.gmra.mxu0 %v524
      %v1455 = vpop.f32.mrf.mxu0
      %v1456 = vadd.f32 0.0, %v1455
      %1457 = vdwg.mxu0
      %1458 = vmatpush.msra.mxu0 %v1397
      %1459 = vmatpush.msra.mxu0 %v1395
      %1460 = vmatpush.msra.mxu0 %v1393
      %1461 = vmatpush.msra.mxu0 %v1391
      %1462 = vmatpush.msra.mxu0 %v1389
      %1463 = vmatpush.msra.mxu0 %v1387
      %1464 = vmatpush.msra.mxu0 %v1385
      %1465 = vmatpush.msra.mxu0 %v1383
      %1466 = vmatpush.msra.mxu0 %v1381
      %1467 = vmatpush.msra.mxu0 %v1379
      %1468 = vmatpush.msra.mxu0 %v1377
      %1469 = vmatpush.msra.mxu0 %v1375
      %1470 = vmatpush.msra.mxu0 %v1373
      %1471 = vmatpush.msra.mxu0 %v1371
      %1472 = vmatpush.msra.mxu0 %v1369
      %1473 = vmatpush.msra.mxu0 %v1367
      %1474 = vmatmul.f32.gmra.mxu0 %v525
      %v1475 = vpop.f32.mrf.mxu0
      %v1476 = vadd.f32 %v1456, %v1475
      %1477 = vdwg.mxu0
      %s1478 = scalar_lea.vmem %s2, 64
      %v1479 = vld [vmem:[%s1478] sm:$0xff]
      %v1480 = vld [vmem:[%s1478 + $0x8] sm:$0xff]
      %v1482 = vsel %vm820, %v1479, 0
      %v1485 = vsel %vm820, %v1480, 0
      %1487 = vmatpush.msra.mxu0 0.0
      %1488 = vmatpush.msra.mxu0 0.0
      %1489 = vmatpush.msra.mxu0 0.0
      %1490 = vmatpush.msra.mxu0 0.0
      %1491 = vmatpush.msra.mxu0 0.0
      %1492 = vmatpush.msra.mxu0 0.0
      %1493 = vmatpush.msra.mxu0 0.0
      %1494 = vmatpush.msra.mxu0 0.0
      %1495 = vmatpush.msra.mxu0 0.0
      %1496 = vmatpush.msra.mxu0 0.0
      %1497 = vmatpush.msra.mxu0 0.0
      %1498 = vmatpush.msra.mxu0 0.0
      %1499 = vmatpush.msra.mxu0 0.0
      %1500 = vmatpush.msra.mxu0 0.0
      %1501 = vmatpush.msra.mxu0 0.0
      %1502 = vmatpush.msra.mxu0 %v1436
      %1503 = vmatmul.f32.gmra.mxu0 %v1482
      %v1504 = vpop.f32.mrf.mxu0
      %v1505 = vadd.f32 0.0, %v1504
      %1506 = vmatmul.f32.gmra.mxu0 %v1485
      %v1507 = vpop.f32.mrf.mxu0
      %v1508 = vadd.f32 0.0, %v1507
      %1509 = vdwg.mxu0
      %1510 = vmatpush.msra.mxu0 0.0
      %1511 = vmatpush.msra.mxu0 0.0
      %1512 = vmatpush.msra.mxu0 0.0
      %1513 = vmatpush.msra.mxu0 0.0
      %1514 = vmatpush.msra.mxu0 0.0
      %1515 = vmatpush.msra.mxu0 0.0
      %1516 = vmatpush.msra.mxu0 0.0
      %1517 = vmatpush.msra.mxu0 0.0
      %1518 = vmatpush.msra.mxu0 0.0
      %1519 = vmatpush.msra.mxu0 0.0
      %1520 = vmatpush.msra.mxu0 0.0
      %1521 = vmatpush.msra.mxu0 0.0
      %1522 = vmatpush.msra.mxu0 0.0
      %1523 = vmatpush.msra.mxu0 0.0
      %1524 = vmatpush.msra.mxu0 0.0
      %1525 = vmatpush.msra.mxu0 %v1476
      %1526 = vmatmul.f32.gmra.mxu0 %v1482
      %v1527 = vpop.f32.mrf.mxu0
      %v1528 = vadd.f32 0.0, %v1527
      %1529 = vmatmul.f32.gmra.mxu0 %v1485
      %v1530 = vpop.f32.mrf.mxu0
      %v1531 = vadd.f32 0.0, %v1530
      %1532 = vdwg.mxu0
      %v1533 = vadd.f32 %v1329, %v1505
      %v1534 = vadd.f32 %v1330, %v1528
      %v1535 = vadd.f32 %v1331, %v1508
      %v1536 = vadd.f32 %v1332, %v1531
      %s1537 = scalar_lea.vmem %s1, 2560
      %v1538 = vld [vmem:[%s1537] sm:$0xff]
      %v1539 = vld [vmem:[%s1537 + $0x8] sm:$0xff]
      %v1540 = vld [vmem:[%s1537 + $0x10] sm:$0xff]
      %v1541 = vld [vmem:[%s1537 + $0x18] sm:$0xff]
      %v1542 = vld [vmem:[%s1537 + $0x20] sm:$0xff]
      %v1543 = vld [vmem:[%s1537 + $0x28] sm:$0xff]
      %v1544 = vld [vmem:[%s1537 + $0x30] sm:$0xff]
      %v1545 = vld [vmem:[%s1537 + $0x38] sm:$0xff]
      %v1546 = vld [vmem:[%s1537 + $0x40] sm:$0xff]
      %v1547 = vld [vmem:[%s1537 + $0x48] sm:$0xff]
      %v1548 = vld [vmem:[%s1537 + $0x50] sm:$0xff]
      %v1549 = vld [vmem:[%s1537 + $0x58] sm:$0xff]
      %v1550 = vld [vmem:[%s1537 + $0x60] sm:$0xff]
      %v1551 = vld [vmem:[%s1537 + $0x68] sm:$0xff]
      %v1552 = vld [vmem:[%s1537 + $0x70] sm:$0xff]
      %v1553 = vld [vmem:[%s1537 + $0x78] sm:$0xff]
      %v1554 = vld [vmem:[%s1537 + $0x80] sm:$0xff]
      %v1555 = vld [vmem:[%s1537 + $0x88] sm:$0xff]
      %v1556 = vld [vmem:[%s1537 + $0x90] sm:$0xff]
      %v1557 = vld [vmem:[%s1537 + $0x98] sm:$0xff]
      %v1558 = vld [vmem:[%s1537 + $0xa0] sm:$0xff]
      %v1559 = vld [vmem:[%s1537 + $0xa8] sm:$0xff]
      %v1560 = vld [vmem:[%s1537 + $0xb0] sm:$0xff]
      %v1561 = vld [vmem:[%s1537 + $0xb8] sm:$0xff]
      %v1562 = vld [vmem:[%s1537 + $0xc0] sm:$0xff]
      %v1563 = vld [vmem:[%s1537 + $0xc8] sm:$0xff]
      %v1564 = vld [vmem:[%s1537 + $0xd0] sm:$0xff]
      %v1565 = vld [vmem:[%s1537 + $0xd8] sm:$0xff]
      %v1566 = vld [vmem:[%s1537 + $0xe0] sm:$0xff]
      %v1567 = vld [vmem:[%s1537 + $0xe8] sm:$0xff]
      %v1568 = vld [vmem:[%s1537 + $0xf0] sm:$0xff]
      %v1569 = vld [vmem:[%s1537 + $0xf8] sm:$0xff]
      %v1570 = vld [vmem:[%s1537 + $0x100] sm:$0xff]
      %v1571 = vld [vmem:[%s1537 + $0x108] sm:$0xff]
      %v1572 = vld [vmem:[%s1537 + $0x110] sm:$0xff]
      %v1573 = vld [vmem:[%s1537 + $0x118] sm:$0xff]
      %v1574 = vld [vmem:[%s1537 + $0x120] sm:$0xff]
      %v1575 = vld [vmem:[%s1537 + $0x128] sm:$0xff]
      %v1576 = vld [vmem:[%s1537 + $0x130] sm:$0xff]
      %v1577 = vld [vmem:[%s1537 + $0x138] sm:$0xff]
      %v1578 = vld [vmem:[%s1537 + $0x140] sm:$0xff]
      %v1579 = vld [vmem:[%s1537 + $0x148] sm:$0xff]
      %v1580 = vld [vmem:[%s1537 + $0x150] sm:$0xff]
      %v1581 = vld [vmem:[%s1537 + $0x158] sm:$0xff]
      %v1582 = vld [vmem:[%s1537 + $0x160] sm:$0xff]
      %v1583 = vld [vmem:[%s1537 + $0x168] sm:$0xff]
      %v1584 = vld [vmem:[%s1537 + $0x170] sm:$0xff]
      %v1585 = vld [vmem:[%s1537 + $0x178] sm:$0xff]
      %v1586 = vld [vmem:[%s1537 + $0x180] sm:$0xff]
      %v1587 = vld [vmem:[%s1537 + $0x188] sm:$0xff]
      %v1588 = vld [vmem:[%s1537 + $0x190] sm:$0xff]
      %v1589 = vld [vmem:[%s1537 + $0x198] sm:$0xff]
      %v1590 = vld [vmem:[%s1537 + $0x1a0] sm:$0xff]
      %v1591 = vld [vmem:[%s1537 + $0x1a8] sm:$0xff]
      %v1592 = vld [vmem:[%s1537 + $0x1b0] sm:$0xff]
      %v1593 = vld [vmem:[%s1537 + $0x1b8] sm:$0xff]
      %v1594 = vld [vmem:[%s1537 + $0x1c0] sm:$0xff]
      %v1595 = vld [vmem:[%s1537 + $0x1c8] sm:$0xff]
      %v1596 = vld [vmem:[%s1537 + $0x1d0] sm:$0xff]
      %v1597 = vld [vmem:[%s1537 + $0x1d8] sm:$0xff]
      %v1598 = vld [vmem:[%s1537 + $0x1e0] sm:$0xff]
      %v1599 = vld [vmem:[%s1537 + $0x1e8] sm:$0xff]
      %v1600 = vld [vmem:[%s1537 + $0x1f0] sm:$0xff]
      %v1601 = vld [vmem:[%s1537 + $0x1f8] sm:$0xff]
      %1602 = vmatpush.msra.mxu0 %v1568
      %1603 = vmatpush.msra.mxu0 %v1566
      %1604 = vmatpush.msra.mxu0 %v1564
      %1605 = vmatpush.msra.mxu0 %v1562
      %1606 = vmatpush.msra.mxu0 %v1560
      %1607 = vmatpush.msra.mxu0 %v1558
      %1608 = vmatpush.msra.mxu0 %v1556
      %1609 = vmatpush.msra.mxu0 %v1554
      %1610 = vmatpush.msra.mxu0 %v1552
      %1611 = vmatpush.msra.mxu0 %v1550
      %1612 = vmatpush.msra.mxu0 %v1548
      %1613 = vmatpush.msra.mxu0 %v1546
      %1614 = vmatpush.msra.mxu0 %v1544
      %1615 = vmatpush.msra.mxu0 %v1542
      %1616 = vmatpush.msra.mxu0 %v1540
      %1617 = vmatpush.msra.mxu0 %v1538
      %1618 = vmatmul.f32.gmra.mxu0 %v524
      %v1619 = vpop.f32.mrf.mxu0
      %v1620 = vadd.f32 0.0, %v1619
      %1621 = vdwg.mxu0
      %1622 = vmatpush.msra.mxu0 %v1600
      %1623 = vmatpush.msra.mxu0 %v1598
      %1624 = vmatpush.msra.mxu0 %v1596
      %1625 = vmatpush.msra.mxu0 %v1594
      %1626 = vmatpush.msra.mxu0 %v1592
      %1627 = vmatpush.msra.mxu0 %v1590
      %1628 = vmatpush.msra.mxu0 %v1588
      %1629 = vmatpush.msra.mxu0 %v1586
      %1630 = vmatpush.msra.mxu0 %v1584
      %1631 = vmatpush.msra.mxu0 %v1582
      %1632 = vmatpush.msra.mxu0 %v1580
      %1633 = vmatpush.msra.mxu0 %v1578
      %1634 = vmatpush.msra.mxu0 %v1576
      %1635 = vmatpush.msra.mxu0 %v1574
      %1636 = vmatpush.msra.mxu0 %v1572
      %1637 = vmatpush.msra.mxu0 %v1570
      %1638 = vmatmul.f32.gmra.mxu0 %v525
      %v1639 = vpop.f32.mrf.mxu0
      %v1640 = vadd.f32 %v1620, %v1639
      %1641 = vdwg.mxu0
      %1642 = vmatpush.msra.mxu0 %v1569
      %1643 = vmatpush.msra.mxu0 %v1567
      %1644 = vmatpush.msra.mxu0 %v1565
      %1645 = vmatpush.msra.mxu0 %v1563
      %1646 = vmatpush.msra.mxu0 %v1561
      %1647 = vmatpush.msra.mxu0 %v1559
      %1648 = vmatpush.msra.mxu0 %v1557
      %1649 = vmatpush.msra.mxu0 %v1555
      %1650 = vmatpush.msra.mxu0 %v1553
      %1651 = vmatpush.msra.mxu0 %v1551
      %1652 = vmatpush.msra.mxu0 %v1549
      %1653 = vmatpush.msra.mxu0 %v1547
      %1654 = vmatpush.msra.mxu0 %v1545
      %1655 = vmatpush.msra.mxu0 %v1543
      %1656 = vmatpush.msra.mxu0 %v1541
      %1657 = vmatpush.msra.mxu0 %v1539
      %1658 = vmatmul.f32.gmra.mxu0 %v524
      %v1659 = vpop.f32.mrf.mxu0
      %v1660 = vadd.f32 0.0, %v1659
      %1661 = vdwg.mxu0
      %1662 = vmatpush.msra.mxu0 %v1601
      %1663 = vmatpush.msra.mxu0 %v1599
      %1664 = vmatpush.msra.mxu0 %v1597
      %1665 = vmatpush.msra.mxu0 %v1595
      %1666 = vmatpush.msra.mxu0 %v1593
      %1667 = vmatpush.msra.mxu0 %v1591
      %1668 = vmatpush.msra.mxu0 %v1589
      %1669 = vmatpush.msra.mxu0 %v1587
      %1670 = vmatpush.msra.mxu0 %v1585
      %1671 = vmatpush.msra.mxu0 %v1583
      %1672 = vmatpush.msra.mxu0 %v1581
      %1673 = vmatpush.msra.mxu0 %v1579
      %1674 = vmatpush.msra.mxu0 %v1577
      %1675 = vmatpush.msra.mxu0 %v1575
      %1676 = vmatpush.msra.mxu0 %v1573
      %1677 = vmatpush.msra.mxu0 %v1571
      %1678 = vmatmul.f32.gmra.mxu0 %v525
      %v1679 = vpop.f32.mrf.mxu0
      %v1680 = vadd.f32 %v1660, %v1679
      %1681 = vdwg.mxu0
      %s1682 = scalar_lea.vmem %s2, 80
      %v1683 = vld [vmem:[%s1682] sm:$0xff]
      %v1684 = vld [vmem:[%s1682 + $0x8] sm:$0xff]
      %v1686 = vsel %vm820, %v1683, 0
      %v1689 = vsel %vm820, %v1684, 0
      %1691 = vmatpush.msra.mxu0 0.0
      %1692 = vmatpush.msra.mxu0 0.0
      %1693 = vmatpush.msra.mxu0 0.0
      %1694 = vmatpush.msra.mxu0 0.0
      %1695 = vmatpush.msra.mxu0 0.0
      %1696 = vmatpush.msra.mxu0 0.0
      %1697 = vmatpush.msra.mxu0 0.0
      %1698 = vmatpush.msra.mxu0 0.0
      %1699 = vmatpush.msra.mxu0 0.0
      %1700 = vmatpush.msra.mxu0 0.0
      %1701 = vmatpush.msra.mxu0 0.0
      %1702 = vmatpush.msra.mxu0 0.0
      %1703 = vmatpush.msra.mxu0 0.0
      %1704 = vmatpush.msra.mxu0 0.0
      %1705 = vmatpush.msra.mxu0 0.0
      %1706 = vmatpush.msra.mxu0 %v1640
      %1707 = vmatmul.f32.gmra.mxu0 %v1686
      %v1708 = vpop.f32.mrf.mxu0
      %v1709 = vadd.f32 0.0, %v1708
      %1710 = vmatmul.f32.gmra.mxu0 %v1689
      %v1711 = vpop.f32.mrf.mxu0
      %v1712 = vadd.f32 0.0, %v1711
      %1713 = vdwg.mxu0
      %1714 = vmatpush.msra.mxu0 0.0
      %1715 = vmatpush.msra.mxu0 0.0
      %1716 = vmatpush.msra.mxu0 0.0
      %1717 = vmatpush.msra.mxu0 0.0
      %1718 = vmatpush.msra.mxu0 0.0
      %1719 = vmatpush.msra.mxu0 0.0
      %1720 = vmatpush.msra.mxu0 0.0
      %1721 = vmatpush.msra.mxu0 0.0
      %1722 = vmatpush.msra.mxu0 0.0
      %1723 = vmatpush.msra.mxu0 0.0
      %1724 = vmatpush.msra.mxu0 0.0
      %1725 = vmatpush.msra.mxu0 0.0
      %1726 = vmatpush.msra.mxu0 0.0
      %1727 = vmatpush.msra.mxu0 0.0
      %1728 = vmatpush.msra.mxu0 0.0
      %1729 = vmatpush.msra.mxu0 %v1680
      %1730 = vmatmul.f32.gmra.mxu0 %v1686
      %v1731 = vpop.f32.mrf.mxu0
      %v1732 = vadd.f32 0.0, %v1731
      %1733 = vmatmul.f32.gmra.mxu0 %v1689
      %v1734 = vpop.f32.mrf.mxu0
      %v1735 = vadd.f32 0.0, %v1734
      %1736 = vdwg.mxu0
      %v1737 = vadd.f32 %v1533, %v1709
      %v1738 = vadd.f32 %v1534, %v1732
      %v1739 = vadd.f32 %v1535, %v1712
      %v1740 = vadd.f32 %v1536, %v1735
      %s1741 = scalar_lea.vmem %s1, 3072
      %v1742 = vld [vmem:[%s1741] sm:$0xff]
      %v1743 = vld [vmem:[%s1741 + $0x8] sm:$0xff]
      %v1744 = vld [vmem:[%s1741 + $0x10] sm:$0xff]
      %v1745 = vld [vmem:[%s1741 + $0x18] sm:$0xff]
      %v1746 = vld [vmem:[%s1741 + $0x20] sm:$0xff]
      %v1747 = vld [vmem:[%s1741 + $0x28] sm:$0xff]
      %v1748 = vld [vmem:[%s1741 + $0x30] sm:$0xff]
      %v1749 = vld [vmem:[%s1741 + $0x38] sm:$0xff]
      %v1750 = vld [vmem:[%s1741 + $0x40] sm:$0xff]
      %v1751 = vld [vmem:[%s1741 + $0x48] sm:$0xff]
      %v1752 = vld [vmem:[%s1741 + $0x50] sm:$0xff]
      %v1753 = vld [vmem:[%s1741 + $0x58] sm:$0xff]
      %v1754 = vld [vmem:[%s1741 + $0x60] sm:$0xff]
      %v1755 = vld [vmem:[%s1741 + $0x68] sm:$0xff]
      %v1756 = vld [vmem:[%s1741 + $0x70] sm:$0xff]
      %v1757 = vld [vmem:[%s1741 + $0x78] sm:$0xff]
      %v1758 = vld [vmem:[%s1741 + $0x80] sm:$0xff]
      %v1759 = vld [vmem:[%s1741 + $0x88] sm:$0xff]
      %v1760 = vld [vmem:[%s1741 + $0x90] sm:$0xff]
      %v1761 = vld [vmem:[%s1741 + $0x98] sm:$0xff]
      %v1762 = vld [vmem:[%s1741 + $0xa0] sm:$0xff]
      %v1763 = vld [vmem:[%s1741 + $0xa8] sm:$0xff]
      %v1764 = vld [vmem:[%s1741 + $0xb0] sm:$0xff]
      %v1765 = vld [vmem:[%s1741 + $0xb8] sm:$0xff]
      %v1766 = vld [vmem:[%s1741 + $0xc0] sm:$0xff]
      %v1767 = vld [vmem:[%s1741 + $0xc8] sm:$0xff]
      %v1768 = vld [vmem:[%s1741 + $0xd0] sm:$0xff]
      %v1769 = vld [vmem:[%s1741 + $0xd8] sm:$0xff]
      %v1770 = vld [vmem:[%s1741 + $0xe0] sm:$0xff]
      %v1771 = vld [vmem:[%s1741 + $0xe8] sm:$0xff]
      %v1772 = vld [vmem:[%s1741 + $0xf0] sm:$0xff]
      %v1773 = vld [vmem:[%s1741 + $0xf8] sm:$0xff]
      %v1774 = vld [vmem:[%s1741 + $0x100] sm:$0xff]
      %v1775 = vld [vmem:[%s1741 + $0x108] sm:$0xff]
      %v1776 = vld [vmem:[%s1741 + $0x110] sm:$0xff]
      %v1777 = vld [vmem:[%s1741 + $0x118] sm:$0xff]
      %v1778 = vld [vmem:[%s1741 + $0x120] sm:$0xff]
      %v1779 = vld [vmem:[%s1741 + $0x128] sm:$0xff]
      %v1780 = vld [vmem:[%s1741 + $0x130] sm:$0xff]
      %v1781 = vld [vmem:[%s1741 + $0x138] sm:$0xff]
      %v1782 = vld [vmem:[%s1741 + $0x140] sm:$0xff]
      %v1783 = vld [vmem:[%s1741 + $0x148] sm:$0xff]
      %v1784 = vld [vmem:[%s1741 + $0x150] sm:$0xff]
      %v1785 = vld [vmem:[%s1741 + $0x158] sm:$0xff]
      %v1786 = vld [vmem:[%s1741 + $0x160] sm:$0xff]
      %v1787 = vld [vmem:[%s1741 + $0x168] sm:$0xff]
      %v1788 = vld [vmem:[%s1741 + $0x170] sm:$0xff]
      %v1789 = vld [vmem:[%s1741 + $0x178] sm:$0xff]
      %v1790 = vld [vmem:[%s1741 + $0x180] sm:$0xff]
      %v1791 = vld [vmem:[%s1741 + $0x188] sm:$0xff]
      %v1792 = vld [vmem:[%s1741 + $0x190] sm:$0xff]
      %v1793 = vld [vmem:[%s1741 + $0x198] sm:$0xff]
      %v1794 = vld [vmem:[%s1741 + $0x1a0] sm:$0xff]
      %v1795 = vld [vmem:[%s1741 + $0x1a8] sm:$0xff]
      %v1796 = vld [vmem:[%s1741 + $0x1b0] sm:$0xff]
      %v1797 = vld [vmem:[%s1741 + $0x1b8] sm:$0xff]
      %v1798 = vld [vmem:[%s1741 + $0x1c0] sm:$0xff]
      %v1799 = vld [vmem:[%s1741 + $0x1c8] sm:$0xff]
      %v1800 = vld [vmem:[%s1741 + $0x1d0] sm:$0xff]
      %v1801 = vld [vmem:[%s1741 + $0x1d8] sm:$0xff]
      %v1802 = vld [vmem:[%s1741 + $0x1e0] sm:$0xff]
      %v1803 = vld [vmem:[%s1741 + $0x1e8] sm:$0xff]
      %v1804 = vld [vmem:[%s1741 + $0x1f0] sm:$0xff]
      %v1805 = vld [vmem:[%s1741 + $0x1f8] sm:$0xff]
      %1806 = vmatpush.msra.mxu0 %v1772
      %1807 = vmatpush.msra.mxu0 %v1770
      %1808 = vmatpush.msra.mxu0 %v1768
      %1809 = vmatpush.msra.mxu0 %v1766
      %1810 = vmatpush.msra.mxu0 %v1764
      %1811 = vmatpush.msra.mxu0 %v1762
      %1812 = vmatpush.msra.mxu0 %v1760
      %1813 = vmatpush.msra.mxu0 %v1758
      %1814 = vmatpush.msra.mxu0 %v1756
      %1815 = vmatpush.msra.mxu0 %v1754
      %1816 = vmatpush.msra.mxu0 %v1752
      %1817 = vmatpush.msra.mxu0 %v1750
      %1818 = vmatpush.msra.mxu0 %v1748
      %1819 = vmatpush.msra.mxu0 %v1746
      %1820 = vmatpush.msra.mxu0 %v1744
      %1821 = vmatpush.msra.mxu0 %v1742
      %1822 = vmatmul.f32.gmra.mxu0 %v524
      %v1823 = vpop.f32.mrf.mxu0
      %v1824 = vadd.f32 0.0, %v1823
      %1825 = vdwg.mxu0
      %1826 = vmatpush.msra.mxu0 %v1804
      %1827 = vmatpush.msra.mxu0 %v1802
      %1828 = vmatpush.msra.mxu0 %v1800
      %1829 = vmatpush.msra.mxu0 %v1798
      %1830 = vmatpush.msra.mxu0 %v1796
      %1831 = vmatpush.msra.mxu0 %v1794
      %1832 = vmatpush.msra.mxu0 %v1792
      %1833 = vmatpush.msra.mxu0 %v1790
      %1834 = vmatpush.msra.mxu0 %v1788
      %1835 = vmatpush.msra.mxu0 %v1786
      %1836 = vmatpush.msra.mxu0 %v1784
      %1837 = vmatpush.msra.mxu0 %v1782
      %1838 = vmatpush.msra.mxu0 %v1780
      %1839 = vmatpush.msra.mxu0 %v1778
      %1840 = vmatpush.msra.mxu0 %v1776
      %1841 = vmatpush.msra.mxu0 %v1774
      %1842 = vmatmul.f32.gmra.mxu0 %v525
      %v1843 = vpop.f32.mrf.mxu0
      %v1844 = vadd.f32 %v1824, %v1843
      %1845 = vdwg.mxu0
      %1846 = vmatpush.msra.mxu0 %v1773
      %1847 = vmatpush.msra.mxu0 %v1771
      %1848 = vmatpush.msra.mxu0 %v1769
      %1849 = vmatpush.msra.mxu0 %v1767
      %1850 = vmatpush.msra.mxu0 %v1765
      %1851 = vmatpush.msra.mxu0 %v1763
      %1852 = vmatpush.msra.mxu0 %v1761
      %1853 = vmatpush.msra.mxu0 %v1759
      %1854 = vmatpush.msra.mxu0 %v1757
      %1855 = vmatpush.msra.mxu0 %v1755
      %1856 = vmatpush.msra.mxu0 %v1753
      %1857 = vmatpush.msra.mxu0 %v1751
      %1858 = vmatpush.msra.mxu0 %v1749
      %1859 = vmatpush.msra.mxu0 %v1747
      %1860 = vmatpush.msra.mxu0 %v1745
      %1861 = vmatpush.msra.mxu0 %v1743
      %1862 = vmatmul.f32.gmra.mxu0 %v524
      %v1863 = vpop.f32.mrf.mxu0
      %v1864 = vadd.f32 0.0, %v1863
      %1865 = vdwg.mxu0
      %1866 = vmatpush.msra.mxu0 %v1805
      %1867 = vmatpush.msra.mxu0 %v1803
      %1868 = vmatpush.msra.mxu0 %v1801
      %1869 = vmatpush.msra.mxu0 %v1799
      %1870 = vmatpush.msra.mxu0 %v1797
      %1871 = vmatpush.msra.mxu0 %v1795
      %1872 = vmatpush.msra.mxu0 %v1793
      %1873 = vmatpush.msra.mxu0 %v1791
      %1874 = vmatpush.msra.mxu0 %v1789
      %1875 = vmatpush.msra.mxu0 %v1787
      %1876 = vmatpush.msra.mxu0 %v1785
      %1877 = vmatpush.msra.mxu0 %v1783
      %1878 = vmatpush.msra.mxu0 %v1781
      %1879 = vmatpush.msra.mxu0 %v1779
      %1880 = vmatpush.msra.mxu0 %v1777
      %1881 = vmatpush.msra.mxu0 %v1775
      %1882 = vmatmul.f32.gmra.mxu0 %v525
      %v1883 = vpop.f32.mrf.mxu0
      %v1884 = vadd.f32 %v1864, %v1883
      %1885 = vdwg.mxu0
      %s1886 = scalar_lea.vmem %s2, 96
      %v1887 = vld [vmem:[%s1886] sm:$0xff]
      %v1888 = vld [vmem:[%s1886 + $0x8] sm:$0xff]
      %v1890 = vsel %vm820, %v1887, 0
      %v1893 = vsel %vm820, %v1888, 0
      %1895 = vmatpush.msra.mxu0 0.0
      %1896 = vmatpush.msra.mxu0 0.0
      %1897 = vmatpush.msra.mxu0 0.0
      %1898 = vmatpush.msra.mxu0 0.0
      %1899 = vmatpush.msra.mxu0 0.0
      %1900 = vmatpush.msra.mxu0 0.0
      %1901 = vmatpush.msra.mxu0 0.0
      %1902 = vmatpush.msra.mxu0 0.0
      %1903 = vmatpush.msra.mxu0 0.0
      %1904 = vmatpush.msra.mxu0 0.0
      %1905 = vmatpush.msra.mxu0 0.0
      %1906 = vmatpush.msra.mxu0 0.0
      %1907 = vmatpush.msra.mxu0 0.0
      %1908 = vmatpush.msra.mxu0 0.0
      %1909 = vmatpush.msra.mxu0 0.0
      %1910 = vmatpush.msra.mxu0 %v1844
      %1911 = vmatmul.f32.gmra.mxu0 %v1890
      %v1912 = vpop.f32.mrf.mxu0
      %v1913 = vadd.f32 0.0, %v1912
      %1914 = vmatmul.f32.gmra.mxu0 %v1893
      %v1915 = vpop.f32.mrf.mxu0
      %v1916 = vadd.f32 0.0, %v1915
      %1917 = vdwg.mxu0
      %1918 = vmatpush.msra.mxu0 0.0
      %1919 = vmatpush.msra.mxu0 0.0
      %1920 = vmatpush.msra.mxu0 0.0
      %1921 = vmatpush.msra.mxu0 0.0
      %1922 = vmatpush.msra.mxu0 0.0
      %1923 = vmatpush.msra.mxu0 0.0
      %1924 = vmatpush.msra.mxu0 0.0
      %1925 = vmatpush.msra.mxu0 0.0
      %1926 = vmatpush.msra.mxu0 0.0
      %1927 = vmatpush.msra.mxu0 0.0
      %1928 = vmatpush.msra.mxu0 0.0
      %1929 = vmatpush.msra.mxu0 0.0
      %1930 = vmatpush.msra.mxu0 0.0
      %1931 = vmatpush.msra.mxu0 0.0
      %1932 = vmatpush.msra.mxu0 0.0
      %1933 = vmatpush.msra.mxu0 %v1884
      %1934 = vmatmul.f32.gmra.mxu0 %v1890
      %v1935 = vpop.f32.mrf.mxu0
      %v1936 = vadd.f32 0.0, %v1935
      %1937 = vmatmul.f32.gmra.mxu0 %v1893
      %v1938 = vpop.f32.mrf.mxu0
      %v1939 = vadd.f32 0.0, %v1938
      %1940 = vdwg.mxu0
      %v1941 = vadd.f32 %v1737, %v1913
      %v1942 = vadd.f32 %v1738, %v1936
      %v1943 = vadd.f32 %v1739, %v1916
      %v1944 = vadd.f32 %v1740, %v1939
      %s1945 = scalar_lea.vmem %s1, 3584
      %v1946 = vld [vmem:[%s1945] sm:$0xff]
      %v1947 = vld [vmem:[%s1945 + $0x8] sm:$0xff]
      %v1948 = vld [vmem:[%s1945 + $0x10] sm:$0xff]
      %v1949 = vld [vmem:[%s1945 + $0x18] sm:$0xff]
      %v1950 = vld [vmem:[%s1945 + $0x20] sm:$0xff]
      %v1951 = vld [vmem:[%s1945 + $0x28] sm:$0xff]
      %v1952 = vld [vmem:[%s1945 + $0x30] sm:$0xff]
      %v1953 = vld [vmem:[%s1945 + $0x38] sm:$0xff]
      %v1954 = vld [vmem:[%s1945 + $0x40] sm:$0xff]
      %v1955 = vld [vmem:[%s1945 + $0x48] sm:$0xff]
      %v1956 = vld [vmem:[%s1945 + $0x50] sm:$0xff]
      %v1957 = vld [vmem:[%s1945 + $0x58] sm:$0xff]
      %v1958 = vld [vmem:[%s1945 + $0x60] sm:$0xff]
      %v1959 = vld [vmem:[%s1945 + $0x68] sm:$0xff]
      %v1960 = vld [vmem:[%s1945 + $0x70] sm:$0xff]
      %v1961 = vld [vmem:[%s1945 + $0x78] sm:$0xff]
      %v1962 = vld [vmem:[%s1945 + $0x80] sm:$0xff]
      %v1963 = vld [vmem:[%s1945 + $0x88] sm:$0xff]
      %v1964 = vld [vmem:[%s1945 + $0x90] sm:$0xff]
      %v1965 = vld [vmem:[%s1945 + $0x98] sm:$0xff]
      %v1966 = vld [vmem:[%s1945 + $0xa0] sm:$0xff]
      %v1967 = vld [vmem:[%s1945 + $0xa8] sm:$0xff]
      %v1968 = vld [vmem:[%s1945 + $0xb0] sm:$0xff]
      %v1969 = vld [vmem:[%s1945 + $0xb8] sm:$0xff]
      %v1970 = vld [vmem:[%s1945 + $0xc0] sm:$0xff]
      %v1971 = vld [vmem:[%s1945 + $0xc8] sm:$0xff]
      %v1972 = vld [vmem:[%s1945 + $0xd0] sm:$0xff]
      %v1973 = vld [vmem:[%s1945 + $0xd8] sm:$0xff]
      %v1974 = vld [vmem:[%s1945 + $0xe0] sm:$0xff]
      %v1975 = vld [vmem:[%s1945 + $0xe8] sm:$0xff]
      %v1976 = vld [vmem:[%s1945 + $0xf0] sm:$0xff]
      %v1977 = vld [vmem:[%s1945 + $0xf8] sm:$0xff]
      %v1978 = vld [vmem:[%s1945 + $0x100] sm:$0xff]
      %v1979 = vld [vmem:[%s1945 + $0x108] sm:$0xff]
      %v1980 = vld [vmem:[%s1945 + $0x110] sm:$0xff]
      %v1981 = vld [vmem:[%s1945 + $0x118] sm:$0xff]
      %v1982 = vld [vmem:[%s1945 + $0x120] sm:$0xff]
      %v1983 = vld [vmem:[%s1945 + $0x128] sm:$0xff]
      %v1984 = vld [vmem:[%s1945 + $0x130] sm:$0xff]
      %v1985 = vld [vmem:[%s1945 + $0x138] sm:$0xff]
      %v1986 = vld [vmem:[%s1945 + $0x140] sm:$0xff]
      %v1987 = vld [vmem:[%s1945 + $0x148] sm:$0xff]
      %v1988 = vld [vmem:[%s1945 + $0x150] sm:$0xff]
      %v1989 = vld [vmem:[%s1945 + $0x158] sm:$0xff]
      %v1990 = vld [vmem:[%s1945 + $0x160] sm:$0xff]
      %v1991 = vld [vmem:[%s1945 + $0x168] sm:$0xff]
      %v1992 = vld [vmem:[%s1945 + $0x170] sm:$0xff]
      %v1993 = vld [vmem:[%s1945 + $0x178] sm:$0xff]
      %v1994 = vld [vmem:[%s1945 + $0x180] sm:$0xff]
      %v1995 = vld [vmem:[%s1945 + $0x188] sm:$0xff]
      %v1996 = vld [vmem:[%s1945 + $0x190] sm:$0xff]
      %v1997 = vld [vmem:[%s1945 + $0x198] sm:$0xff]
      %v1998 = vld [vmem:[%s1945 + $0x1a0] sm:$0xff]
      %v1999 = vld [vmem:[%s1945 + $0x1a8] sm:$0xff]
      %v2000 = vld [vmem:[%s1945 + $0x1b0] sm:$0xff]
      %v2001 = vld [vmem:[%s1945 + $0x1b8] sm:$0xff]
      %v2002 = vld [vmem:[%s1945 + $0x1c0] sm:$0xff]
      %v2003 = vld [vmem:[%s1945 + $0x1c8] sm:$0xff]
      %v2004 = vld [vmem:[%s1945 + $0x1d0] sm:$0xff]
      %v2005 = vld [vmem:[%s1945 + $0x1d8] sm:$0xff]
      %v2006 = vld [vmem:[%s1945 + $0x1e0] sm:$0xff]
      %v2007 = vld [vmem:[%s1945 + $0x1e8] sm:$0xff]
      %v2008 = vld [vmem:[%s1945 + $0x1f0] sm:$0xff]
      %v2009 = vld [vmem:[%s1945 + $0x1f8] sm:$0xff]
      %2010 = vmatpush.msra.mxu0 %v1976
      %2011 = vmatpush.msra.mxu0 %v1974
      %2012 = vmatpush.msra.mxu0 %v1972
      %2013 = vmatpush.msra.mxu0 %v1970
      %2014 = vmatpush.msra.mxu0 %v1968
      %2015 = vmatpush.msra.mxu0 %v1966
      %2016 = vmatpush.msra.mxu0 %v1964
      %2017 = vmatpush.msra.mxu0 %v1962
      %2018 = vmatpush.msra.mxu0 %v1960
      %2019 = vmatpush.msra.mxu0 %v1958
      %2020 = vmatpush.msra.mxu0 %v1956
      %2021 = vmatpush.msra.mxu0 %v1954
      %2022 = vmatpush.msra.mxu0 %v1952
      %2023 = vmatpush.msra.mxu0 %v1950
      %2024 = vmatpush.msra.mxu0 %v1948
      %2025 = vmatpush.msra.mxu0 %v1946
      %2026 = vmatmul.f32.gmra.mxu0 %v524
      %v2027 = vpop.f32.mrf.mxu0
      %v2028 = vadd.f32 0.0, %v2027
      %2029 = vdwg.mxu0
      %2030 = vmatpush.msra.mxu0 %v2008
      %2031 = vmatpush.msra.mxu0 %v2006
      %2032 = vmatpush.msra.mxu0 %v2004
      %2033 = vmatpush.msra.mxu0 %v2002
      %2034 = vmatpush.msra.mxu0 %v2000
      %2035 = vmatpush.msra.mxu0 %v1998
      %2036 = vmatpush.msra.mxu0 %v1996
      %2037 = vmatpush.msra.mxu0 %v1994
      %2038 = vmatpush.msra.mxu0 %v1992
      %2039 = vmatpush.msra.mxu0 %v1990
      %2040 = vmatpush.msra.mxu0 %v1988
      %2041 = vmatpush.msra.mxu0 %v1986
      %2042 = vmatpush.msra.mxu0 %v1984
      %2043 = vmatpush.msra.mxu0 %v1982
      %2044 = vmatpush.msra.mxu0 %v1980
      %2045 = vmatpush.msra.mxu0 %v1978
      %2046 = vmatmul.f32.gmra.mxu0 %v525
      %v2047 = vpop.f32.mrf.mxu0
      %v2048 = vadd.f32 %v2028, %v2047
      %2049 = vdwg.mxu0
      %2050 = vmatpush.msra.mxu0 %v1977
      %2051 = vmatpush.msra.mxu0 %v1975
      %2052 = vmatpush.msra.mxu0 %v1973
      %2053 = vmatpush.msra.mxu0 %v1971
      %2054 = vmatpush.msra.mxu0 %v1969
      %2055 = vmatpush.msra.mxu0 %v1967
      %2056 = vmatpush.msra.mxu0 %v1965
      %2057 = vmatpush.msra.mxu0 %v1963
      %2058 = vmatpush.msra.mxu0 %v1961
      %2059 = vmatpush.msra.mxu0 %v1959
      %2060 = vmatpush.msra.mxu0 %v1957
      %2061 = vmatpush.msra.mxu0 %v1955
      %2062 = vmatpush.msra.mxu0 %v1953
      %2063 = vmatpush.msra.mxu0 %v1951
      %2064 = vmatpush.msra.mxu0 %v1949
      %2065 = vmatpush.msra.mxu0 %v1947
      %2066 = vmatmul.f32.gmra.mxu0 %v524
      %v2067 = vpop.f32.mrf.mxu0
      %v2068 = vadd.f32 0.0, %v2067
      %2069 = vdwg.mxu0
      %2070 = vmatpush.msra.mxu0 %v2009
      %2071 = vmatpush.msra.mxu0 %v2007
      %2072 = vmatpush.msra.mxu0 %v2005
      %2073 = vmatpush.msra.mxu0 %v2003
      %2074 = vmatpush.msra.mxu0 %v2001
      %2075 = vmatpush.msra.mxu0 %v1999
      %2076 = vmatpush.msra.mxu0 %v1997
      %2077 = vmatpush.msra.mxu0 %v1995
      %2078 = vmatpush.msra.mxu0 %v1993
      %2079 = vmatpush.msra.mxu0 %v1991
      %2080 = vmatpush.msra.mxu0 %v1989
      %2081 = vmatpush.msra.mxu0 %v1987
      %2082 = vmatpush.msra.mxu0 %v1985
      %2083 = vmatpush.msra.mxu0 %v1983
      %2084 = vmatpush.msra.mxu0 %v1981
      %2085 = vmatpush.msra.mxu0 %v1979
      %2086 = vmatmul.f32.gmra.mxu0 %v525
      %v2087 = vpop.f32.mrf.mxu0
      %v2088 = vadd.f32 %v2068, %v2087
      %2089 = vdwg.mxu0
      %s2090 = scalar_lea.vmem %s2, 112
      %v2091 = vld [vmem:[%s2090] sm:$0xff]
      %v2092 = vld [vmem:[%s2090 + $0x8] sm:$0xff]
      %v2094 = vsel %vm820, %v2091, 0
      %v2097 = vsel %vm820, %v2092, 0
      %2099 = vmatpush.msra.mxu0 0.0
      %2100 = vmatpush.msra.mxu0 0.0
      %2101 = vmatpush.msra.mxu0 0.0
      %2102 = vmatpush.msra.mxu0 0.0
      %2103 = vmatpush.msra.mxu0 0.0
      %2104 = vmatpush.msra.mxu0 0.0
      %2105 = vmatpush.msra.mxu0 0.0
      %2106 = vmatpush.msra.mxu0 0.0
      %2107 = vmatpush.msra.mxu0 0.0
      %2108 = vmatpush.msra.mxu0 0.0
      %2109 = vmatpush.msra.mxu0 0.0
      %2110 = vmatpush.msra.mxu0 0.0
      %2111 = vmatpush.msra.mxu0 0.0
      %2112 = vmatpush.msra.mxu0 0.0
      %2113 = vmatpush.msra.mxu0 0.0
      %2114 = vmatpush.msra.mxu0 %v2048
      %2115 = vmatmul.f32.gmra.mxu0 %v2094
      %v2116 = vpop.f32.mrf.mxu0
      %v2117 = vadd.f32 0.0, %v2116
      %2118 = vmatmul.f32.gmra.mxu0 %v2097
      %v2119 = vpop.f32.mrf.mxu0
      %v2120 = vadd.f32 0.0, %v2119
      %2121 = vdwg.mxu0
      %2122 = vmatpush.msra.mxu0 0.0
      %2123 = vmatpush.msra.mxu0 0.0
      %2124 = vmatpush.msra.mxu0 0.0
      %2125 = vmatpush.msra.mxu0 0.0
      %2126 = vmatpush.msra.mxu0 0.0
      %2127 = vmatpush.msra.mxu0 0.0
      %2128 = vmatpush.msra.mxu0 0.0
      %2129 = vmatpush.msra.mxu0 0.0
      %2130 = vmatpush.msra.mxu0 0.0
      %2131 = vmatpush.msra.mxu0 0.0
      %2132 = vmatpush.msra.mxu0 0.0
      %2133 = vmatpush.msra.mxu0 0.0
      %2134 = vmatpush.msra.mxu0 0.0
      %2135 = vmatpush.msra.mxu0 0.0
      %2136 = vmatpush.msra.mxu0 0.0
      %2137 = vmatpush.msra.mxu0 %v2088
      %2138 = vmatmul.f32.gmra.mxu0 %v2094
      %v2139 = vpop.f32.mrf.mxu0
      %v2140 = vadd.f32 0.0, %v2139
      %2141 = vmatmul.f32.gmra.mxu0 %v2097
      %v2142 = vpop.f32.mrf.mxu0
      %v2143 = vadd.f32 0.0, %v2142
      %2144 = vdwg.mxu0
      %v2145 = vadd.f32 %v1941, %v2117
      %v2146 = vadd.f32 %v1942, %v2140
      %v2147 = vadd.f32 %v1943, %v2120
      %v2148 = vadd.f32 %v1944, %v2143
      %s2149 = scalar_lea.vmem %s1, 4096
      %v2150 = vld [vmem:[%s2149] sm:$0xff]
      %v2151 = vld [vmem:[%s2149 + $0x8] sm:$0xff]
      %v2152 = vld [vmem:[%s2149 + $0x10] sm:$0xff]
      %v2153 = vld [vmem:[%s2149 + $0x18] sm:$0xff]
      %v2154 = vld [vmem:[%s2149 + $0x20] sm:$0xff]
      %v2155 = vld [vmem:[%s2149 + $0x28] sm:$0xff]
      %v2156 = vld [vmem:[%s2149 + $0x30] sm:$0xff]
      %v2157 = vld [vmem:[%s2149 + $0x38] sm:$0xff]
      %v2158 = vld [vmem:[%s2149 + $0x40] sm:$0xff]
      %v2159 = vld [vmem:[%s2149 + $0x48] sm:$0xff]
      %v2160 = vld [vmem:[%s2149 + $0x50] sm:$0xff]
      %v2161 = vld [vmem:[%s2149 + $0x58] sm:$0xff]
      %v2162 = vld [vmem:[%s2149 + $0x60] sm:$0xff]
      %v2163 = vld [vmem:[%s2149 + $0x68] sm:$0xff]
      %v2164 = vld [vmem:[%s2149 + $0x70] sm:$0xff]
      %v2165 = vld [vmem:[%s2149 + $0x78] sm:$0xff]
      %v2166 = vld [vmem:[%s2149 + $0x80] sm:$0xff]
      %v2167 = vld [vmem:[%s2149 + $0x88] sm:$0xff]
      %v2168 = vld [vmem:[%s2149 + $0x90] sm:$0xff]
      %v2169 = vld [vmem:[%s2149 + $0x98] sm:$0xff]
      %v2170 = vld [vmem:[%s2149 + $0xa0] sm:$0xff]
      %v2171 = vld [vmem:[%s2149 + $0xa8] sm:$0xff]
      %v2172 = vld [vmem:[%s2149 + $0xb0] sm:$0xff]
      %v2173 = vld [vmem:[%s2149 + $0xb8] sm:$0xff]
      %v2174 = vld [vmem:[%s2149 + $0xc0] sm:$0xff]
      %v2175 = vld [vmem:[%s2149 + $0xc8] sm:$0xff]
      %v2176 = vld [vmem:[%s2149 + $0xd0] sm:$0xff]
      %v2177 = vld [vmem:[%s2149 + $0xd8] sm:$0xff]
      %v2178 = vld [vmem:[%s2149 + $0xe0] sm:$0xff]
      %v2179 = vld [vmem:[%s2149 + $0xe8] sm:$0xff]
      %v2180 = vld [vmem:[%s2149 + $0xf0] sm:$0xff]
      %v2181 = vld [vmem:[%s2149 + $0xf8] sm:$0xff]
      %v2182 = vld [vmem:[%s2149 + $0x100] sm:$0xff]
      %v2183 = vld [vmem:[%s2149 + $0x108] sm:$0xff]
      %v2184 = vld [vmem:[%s2149 + $0x110] sm:$0xff]
      %v2185 = vld [vmem:[%s2149 + $0x118] sm:$0xff]
      %v2186 = vld [vmem:[%s2149 + $0x120] sm:$0xff]
      %v2187 = vld [vmem:[%s2149 + $0x128] sm:$0xff]
      %v2188 = vld [vmem:[%s2149 + $0x130] sm:$0xff]
      %v2189 = vld [vmem:[%s2149 + $0x138] sm:$0xff]
      %v2190 = vld [vmem:[%s2149 + $0x140] sm:$0xff]
      %v2191 = vld [vmem:[%s2149 + $0x148] sm:$0xff]
      %v2192 = vld [vmem:[%s2149 + $0x150] sm:$0xff]
      %v2193 = vld [vmem:[%s2149 + $0x158] sm:$0xff]
      %v2194 = vld [vmem:[%s2149 + $0x160] sm:$0xff]
      %v2195 = vld [vmem:[%s2149 + $0x168] sm:$0xff]
      %v2196 = vld [vmem:[%s2149 + $0x170] sm:$0xff]
      %v2197 = vld [vmem:[%s2149 + $0x178] sm:$0xff]
      %v2198 = vld [vmem:[%s2149 + $0x180] sm:$0xff]
      %v2199 = vld [vmem:[%s2149 + $0x188] sm:$0xff]
      %v2200 = vld [vmem:[%s2149 + $0x190] sm:$0xff]
      %v2201 = vld [vmem:[%s2149 + $0x198] sm:$0xff]
      %v2202 = vld [vmem:[%s2149 + $0x1a0] sm:$0xff]
      %v2203 = vld [vmem:[%s2149 + $0x1a8] sm:$0xff]
      %v2204 = vld [vmem:[%s2149 + $0x1b0] sm:$0xff]
      %v2205 = vld [vmem:[%s2149 + $0x1b8] sm:$0xff]
      %v2206 = vld [vmem:[%s2149 + $0x1c0] sm:$0xff]
      %v2207 = vld [vmem:[%s2149 + $0x1c8] sm:$0xff]
      %v2208 = vld [vmem:[%s2149 + $0x1d0] sm:$0xff]
      %v2209 = vld [vmem:[%s2149 + $0x1d8] sm:$0xff]
      %v2210 = vld [vmem:[%s2149 + $0x1e0] sm:$0xff]
      %v2211 = vld [vmem:[%s2149 + $0x1e8] sm:$0xff]
      %v2212 = vld [vmem:[%s2149 + $0x1f0] sm:$0xff]
      %v2213 = vld [vmem:[%s2149 + $0x1f8] sm:$0xff]
      %2214 = vmatpush.msra.mxu0 %v2180
      %2215 = vmatpush.msra.mxu0 %v2178
      %2216 = vmatpush.msra.mxu0 %v2176
      %2217 = vmatpush.msra.mxu0 %v2174
      %2218 = vmatpush.msra.mxu0 %v2172
      %2219 = vmatpush.msra.mxu0 %v2170
      %2220 = vmatpush.msra.mxu0 %v2168
      %2221 = vmatpush.msra.mxu0 %v2166
      %2222 = vmatpush.msra.mxu0 %v2164
      %2223 = vmatpush.msra.mxu0 %v2162
      %2224 = vmatpush.msra.mxu0 %v2160
      %2225 = vmatpush.msra.mxu0 %v2158
      %2226 = vmatpush.msra.mxu0 %v2156
      %2227 = vmatpush.msra.mxu0 %v2154
      %2228 = vmatpush.msra.mxu0 %v2152
      %2229 = vmatpush.msra.mxu0 %v2150
      %2230 = vmatmul.f32.gmra.mxu0 %v524
      %v2231 = vpop.f32.mrf.mxu0
      %v2232 = vadd.f32 0.0, %v2231
      %2233 = vdwg.mxu0
      %2234 = vmatpush.msra.mxu0 %v2212
      %2235 = vmatpush.msra.mxu0 %v2210
      %2236 = vmatpush.msra.mxu0 %v2208
      %2237 = vmatpush.msra.mxu0 %v2206
      %2238 = vmatpush.msra.mxu0 %v2204
      %2239 = vmatpush.msra.mxu0 %v2202
      %2240 = vmatpush.msra.mxu0 %v2200
      %2241 = vmatpush.msra.mxu0 %v2198
      %2242 = vmatpush.msra.mxu0 %v2196
      %2243 = vmatpush.msra.mxu0 %v2194
      %2244 = vmatpush.msra.mxu0 %v2192
      %2245 = vmatpush.msra.mxu0 %v2190
      %2246 = vmatpush.msra.mxu0 %v2188
      %2247 = vmatpush.msra.mxu0 %v2186
      %2248 = vmatpush.msra.mxu0 %v2184
      %2249 = vmatpush.msra.mxu0 %v2182
      %2250 = vmatmul.f32.gmra.mxu0 %v525
      %v2251 = vpop.f32.mrf.mxu0
      %v2252 = vadd.f32 %v2232, %v2251
      %2253 = vdwg.mxu0
      %2254 = vmatpush.msra.mxu0 %v2181
      %2255 = vmatpush.msra.mxu0 %v2179
      %2256 = vmatpush.msra.mxu0 %v2177
      %2257 = vmatpush.msra.mxu0 %v2175
      %2258 = vmatpush.msra.mxu0 %v2173
      %2259 = vmatpush.msra.mxu0 %v2171
      %2260 = vmatpush.msra.mxu0 %v2169
      %2261 = vmatpush.msra.mxu0 %v2167
      %2262 = vmatpush.msra.mxu0 %v2165
      %2263 = vmatpush.msra.mxu0 %v2163
      %2264 = vmatpush.msra.mxu0 %v2161
      %2265 = vmatpush.msra.mxu0 %v2159
      %2266 = vmatpush.msra.mxu0 %v2157
      %2267 = vmatpush.msra.mxu0 %v2155
      %2268 = vmatpush.msra.mxu0 %v2153
      %2269 = vmatpush.msra.mxu0 %v2151
      %2270 = vmatmul.f32.gmra.mxu0 %v524
      %v2271 = vpop.f32.mrf.mxu0
      %v2272 = vadd.f32 0.0, %v2271
      %2273 = vdwg.mxu0
      %2274 = vmatpush.msra.mxu0 %v2213
      %2275 = vmatpush.msra.mxu0 %v2211
      %2276 = vmatpush.msra.mxu0 %v2209
      %2277 = vmatpush.msra.mxu0 %v2207
      %2278 = vmatpush.msra.mxu0 %v2205
      %2279 = vmatpush.msra.mxu0 %v2203
      %2280 = vmatpush.msra.mxu0 %v2201
      %2281 = vmatpush.msra.mxu0 %v2199
      %2282 = vmatpush.msra.mxu0 %v2197
      %2283 = vmatpush.msra.mxu0 %v2195
      %2284 = vmatpush.msra.mxu0 %v2193
      %2285 = vmatpush.msra.mxu0 %v2191
      %2286 = vmatpush.msra.mxu0 %v2189
      %2287 = vmatpush.msra.mxu0 %v2187
      %2288 = vmatpush.msra.mxu0 %v2185
      %2289 = vmatpush.msra.mxu0 %v2183
      %2290 = vmatmul.f32.gmra.mxu0 %v525
      %v2291 = vpop.f32.mrf.mxu0
      %v2292 = vadd.f32 %v2272, %v2291
      %2293 = vdwg.mxu0
      %s2294 = scalar_lea.vmem %s2, 128
      %v2295 = vld [vmem:[%s2294] sm:$0xff]
      %v2296 = vld [vmem:[%s2294 + $0x8] sm:$0xff]
      %v2298 = vsel %vm820, %v2295, 0
      %v2301 = vsel %vm820, %v2296, 0
      %2303 = vmatpush.msra.mxu0 0.0
      %2304 = vmatpush.msra.mxu0 0.0
      %2305 = vmatpush.msra.mxu0 0.0
      %2306 = vmatpush.msra.mxu0 0.0
      %2307 = vmatpush.msra.mxu0 0.0
      %2308 = vmatpush.msra.mxu0 0.0
      %2309 = vmatpush.msra.mxu0 0.0
      %2310 = vmatpush.msra.mxu0 0.0
      %2311 = vmatpush.msra.mxu0 0.0
      %2312 = vmatpush.msra.mxu0 0.0
      %2313 = vmatpush.msra.mxu0 0.0
      %2314 = vmatpush.msra.mxu0 0.0
      %2315 = vmatpush.msra.mxu0 0.0
      %2316 = vmatpush.msra.mxu0 0.0
      %2317 = vmatpush.msra.mxu0 0.0
      %2318 = vmatpush.msra.mxu0 %v2252
      %2319 = vmatmul.f32.gmra.mxu0 %v2298
      %v2320 = vpop.f32.mrf.mxu0
      %v2321 = vadd.f32 0.0, %v2320
      %2322 = vmatmul.f32.gmra.mxu0 %v2301
      %v2323 = vpop.f32.mrf.mxu0
      %v2324 = vadd.f32 0.0, %v2323
      %2325 = vdwg.mxu0
      %2326 = vmatpush.msra.mxu0 0.0
      %2327 = vmatpush.msra.mxu0 0.0
      %2328 = vmatpush.msra.mxu0 0.0
      %2329 = vmatpush.msra.mxu0 0.0
      %2330 = vmatpush.msra.mxu0 0.0
      %2331 = vmatpush.msra.mxu0 0.0
      %2332 = vmatpush.msra.mxu0 0.0
      %2333 = vmatpush.msra.mxu0 0.0
      %2334 = vmatpush.msra.mxu0 0.0
      %2335 = vmatpush.msra.mxu0 0.0
      %2336 = vmatpush.msra.mxu0 0.0
      %2337 = vmatpush.msra.mxu0 0.0
      %2338 = vmatpush.msra.mxu0 0.0
      %2339 = vmatpush.msra.mxu0 0.0
      %2340 = vmatpush.msra.mxu0 0.0
      %2341 = vmatpush.msra.mxu0 %v2292
      %2342 = vmatmul.f32.gmra.mxu0 %v2298
      %v2343 = vpop.f32.mrf.mxu0
      %v2344 = vadd.f32 0.0, %v2343
      %2345 = vmatmul.f32.gmra.mxu0 %v2301
      %v2346 = vpop.f32.mrf.mxu0
      %v2347 = vadd.f32 0.0, %v2346
      %2348 = vdwg.mxu0
      %v2349 = vadd.f32 %v2145, %v2321
      %v2350 = vadd.f32 %v2146, %v2344
      %v2351 = vadd.f32 %v2147, %v2324
      %v2352 = vadd.f32 %v2148, %v2347
      %v2353 = vld [vmem:[%s3] sm:$0xff]
      %v2354 = vld [vmem:[%s3 + $0x8] sm:$0xff]
      %2356 = vset.pattern.permute.xlu0 0
      %2357 = vperm.xlu0 %2356, %v2353
      %v2358 = vpop.permute.xlu0 %2357
      %2361 = vset.pattern.permute.xlu0 0
      %2362 = vperm.xlu0 %2361, %v2354
      %v2363 = vpop.permute.xlu0 %2362
      %v2365 = vmul.f32 %v2349, %v2358
      %v2366 = vmul.f32 %v2350, %v2358
      %v2367 = vmul.f32 %v2351, %v2363
      %v2368 = vmul.f32 %v2352, %v2363
      %v2369 = vld [vmem:[%s4] sm:$0xff]
      %v2370 = vld [vmem:[%s4 + $0x8] sm:$0xff]
      %2372 = vset.pattern.permute.xlu0 0
      %2373 = vperm.xlu0 %2372, %v2369
      %v2374 = vpop.permute.xlu0 %2373
      %2377 = vset.pattern.permute.xlu0 0
      %2378 = vperm.xlu0 %2377, %v2370
      %v2379 = vpop.permute.xlu0 %2378
      %v2381 = vadd.f32 %v2365, %v2374
      %v2382 = vadd.f32 %v2366, %v2374
      %v2383 = vadd.f32 %v2367, %v2379
      %v2384 = vadd.f32 %v2368, %v2379
      %v2385 = vld [vmem:[%s7] sm:$0xff]
      %v2386 = vld [vmem:[%s7 + $0x8] sm:$0xff]
      %v2387 = vld [vmem:[%s7 + $0x10] sm:$0xff]
      %v2388 = vld [vmem:[%s7 + $0x18] sm:$0xff]
      %v2389 = vld [vmem:[%s7 + $0x20] sm:$0xff]
      %v2390 = vld [vmem:[%s7 + $0x28] sm:$0xff]
      %v2391 = vld [vmem:[%s7 + $0x30] sm:$0xff]
      %v2392 = vld [vmem:[%s7 + $0x38] sm:$0xff]
      %v2393 = vld [vmem:[%s7 + $0x40] sm:$0xff]
      %v2394 = vld [vmem:[%s7 + $0x48] sm:$0xff]
      %v2395 = vld [vmem:[%s7 + $0x50] sm:$0xff]
      %v2396 = vld [vmem:[%s7 + $0x58] sm:$0xff]
      %v2397 = vld [vmem:[%s7 + $0x60] sm:$0xff]
      %v2398 = vld [vmem:[%s7 + $0x68] sm:$0xff]
      %v2399 = vld [vmem:[%s7 + $0x70] sm:$0xff]
      %v2400 = vld [vmem:[%s7 + $0x78] sm:$0xff]
      %v2401 = vld [vmem:[%s7 + $0x80] sm:$0xff]
      %v2402 = vld [vmem:[%s7 + $0x88] sm:$0xff]
      %v2403 = vld [vmem:[%s7 + $0x90] sm:$0xff]
      %v2404 = vld [vmem:[%s7 + $0x98] sm:$0xff]
      %v2405 = vld [vmem:[%s7 + $0xa0] sm:$0xff]
      %v2406 = vld [vmem:[%s7 + $0xa8] sm:$0xff]
      %v2407 = vld [vmem:[%s7 + $0xb0] sm:$0xff]
      %v2408 = vld [vmem:[%s7 + $0xb8] sm:$0xff]
      %v2409 = vld [vmem:[%s7 + $0xc0] sm:$0xff]
      %v2410 = vld [vmem:[%s7 + $0xc8] sm:$0xff]
      %v2411 = vld [vmem:[%s7 + $0xd0] sm:$0xff]
      %v2412 = vld [vmem:[%s7 + $0xd8] sm:$0xff]
      %v2413 = vld [vmem:[%s7 + $0xe0] sm:$0xff]
      %v2414 = vld [vmem:[%s7 + $0xe8] sm:$0xff]
      %v2415 = vld [vmem:[%s7 + $0xf0] sm:$0xff]
      %v2416 = vld [vmem:[%s7 + $0xf8] sm:$0xff]
      %2417 = vmatpush.msra.mxu0 %v2400
      %2418 = vmatpush.msra.mxu0 %v2399
      %2419 = vmatpush.msra.mxu0 %v2398
      %2420 = vmatpush.msra.mxu0 %v2397
      %2421 = vmatpush.msra.mxu0 %v2396
      %2422 = vmatpush.msra.mxu0 %v2395
      %2423 = vmatpush.msra.mxu0 %v2394
      %2424 = vmatpush.msra.mxu0 %v2393
      %2425 = vmatpush.msra.mxu0 %v2392
      %2426 = vmatpush.msra.mxu0 %v2391
      %2427 = vmatpush.msra.mxu0 %v2390
      %2428 = vmatpush.msra.mxu0 %v2389
      %2429 = vmatpush.msra.mxu0 %v2388
      %2430 = vmatpush.msra.mxu0 %v2387
      %2431 = vmatpush.msra.mxu0 %v2386
      %2432 = vmatpush.msra.mxu0 %v2385
      %2433 = vmatmul.f32.gmra.mxu0 %v2381
      %v2434 = vpop.f32.mrf.mxu0
      %v2435 = vadd.f32 0.0, %v2434
      %2436 = vmatmul.f32.gmra.mxu0 %v2383
      %v2437 = vpop.f32.mrf.mxu0
      %v2438 = vadd.f32 0.0, %v2437
      %2439 = vdwg.mxu0
      %2440 = vmatpush.msra.mxu0 %v2416
      %2441 = vmatpush.msra.mxu0 %v2415
      %2442 = vmatpush.msra.mxu0 %v2414
      %2443 = vmatpush.msra.mxu0 %v2413
      %2444 = vmatpush.msra.mxu0 %v2412
      %2445 = vmatpush.msra.mxu0 %v2411
      %2446 = vmatpush.msra.mxu0 %v2410
      %2447 = vmatpush.msra.mxu0 %v2409
      %2448 = vmatpush.msra.mxu0 %v2408
      %2449 = vmatpush.msra.mxu0 %v2407
      %2450 = vmatpush.msra.mxu0 %v2406
      %2451 = vmatpush.msra.mxu0 %v2405
      %2452 = vmatpush.msra.mxu0 %v2404
      %2453 = vmatpush.msra.mxu0 %v2403
      %2454 = vmatpush.msra.mxu0 %v2402
      %2455 = vmatpush.msra.mxu0 %v2401
      %2456 = vmatmul.f32.gmra.mxu0 %v2382
      %v2457 = vpop.f32.mrf.mxu0
      %v2458 = vadd.f32 %v2435, %v2457
      %2459 = vmatmul.f32.gmra.mxu0 %v2384
      %v2460 = vpop.f32.mrf.mxu0
      %v2461 = vadd.f32 %v2438, %v2460
      %2462 = vdwg.mxu0
      %v2463 = vld [vmem:[%s9] sm:$0xff]
      %v2464 = vld [vmem:[%s9 + $0x8] sm:$0xff]
      %v2465 = vld [vmem:[%s9 + $0x10] sm:$0xff]
      %v2466 = vld [vmem:[%s9 + $0x18] sm:$0xff]
      %v2467 = vld [vmem:[%s9 + $0x20] sm:$0xff]
      %v2468 = vld [vmem:[%s9 + $0x28] sm:$0xff]
      %v2469 = vld [vmem:[%s9 + $0x30] sm:$0xff]
      %v2470 = vld [vmem:[%s9 + $0x38] sm:$0xff]
      %v2471 = vld [vmem:[%s9 + $0x40] sm:$0xff]
      %v2472 = vld [vmem:[%s9 + $0x48] sm:$0xff]
      %v2473 = vld [vmem:[%s9 + $0x50] sm:$0xff]
      %v2474 = vld [vmem:[%s9 + $0x58] sm:$0xff]
      %v2475 = vld [vmem:[%s9 + $0x60] sm:$0xff]
      %v2476 = vld [vmem:[%s9 + $0x68] sm:$0xff]
      %v2477 = vld [vmem:[%s9 + $0x70] sm:$0xff]
      %v2478 = vld [vmem:[%s9 + $0x78] sm:$0xff]
      %v2479 = vld [vmem:[%s9 + $0x80] sm:$0xff]
      %v2480 = vld [vmem:[%s9 + $0x88] sm:$0xff]
      %v2481 = vld [vmem:[%s9 + $0x90] sm:$0xff]
      %v2482 = vld [vmem:[%s9 + $0x98] sm:$0xff]
      %v2483 = vld [vmem:[%s9 + $0xa0] sm:$0xff]
      %v2484 = vld [vmem:[%s9 + $0xa8] sm:$0xff]
      %v2485 = vld [vmem:[%s9 + $0xb0] sm:$0xff]
      %v2486 = vld [vmem:[%s9 + $0xb8] sm:$0xff]
      %v2487 = vld [vmem:[%s9 + $0xc0] sm:$0xff]
      %v2488 = vld [vmem:[%s9 + $0xc8] sm:$0xff]
      %v2489 = vld [vmem:[%s9 + $0xd0] sm:$0xff]
      %v2490 = vld [vmem:[%s9 + $0xd8] sm:$0xff]
      %v2491 = vld [vmem:[%s9 + $0xe0] sm:$0xff]
      %v2492 = vld [vmem:[%s9 + $0xe8] sm:$0xff]
      %v2493 = vld [vmem:[%s9 + $0xf0] sm:$0xff]
      %v2494 = vld [vmem:[%s9 + $0xf8] sm:$0xff]
      %2495 = vmatpush.msra.mxu0 %v2478
      %2496 = vmatpush.msra.mxu0 %v2477
      %2497 = vmatpush.msra.mxu0 %v2476
      %2498 = vmatpush.msra.mxu0 %v2475
      %2499 = vmatpush.msra.mxu0 %v2474
      %2500 = vmatpush.msra.mxu0 %v2473
      %2501 = vmatpush.msra.mxu0 %v2472
      %2502 = vmatpush.msra.mxu0 %v2471
      %2503 = vmatpush.msra.mxu0 %v2470
      %2504 = vmatpush.msra.mxu0 %v2469
      %2505 = vmatpush.msra.mxu0 %v2468
      %2506 = vmatpush.msra.mxu0 %v2467
      %2507 = vmatpush.msra.mxu0 %v2466
      %2508 = vmatpush.msra.mxu0 %v2465
      %2509 = vmatpush.msra.mxu0 %v2464
      %2510 = vmatpush.msra.mxu0 %v2463
      %2511 = vmatmul.f32.gmra.mxu0 %v2381
      %v2512 = vpop.f32.mrf.mxu0
      %v2513 = vadd.f32 0.0, %v2512
      %2514 = vmatmul.f32.gmra.mxu0 %v2383
      %v2515 = vpop.f32.mrf.mxu0
      %v2516 = vadd.f32 0.0, %v2515
      %2517 = vdwg.mxu0
      %2518 = vmatpush.msra.mxu0 %v2494
      %2519 = vmatpush.msra.mxu0 %v2493
      %2520 = vmatpush.msra.mxu0 %v2492
      %2521 = vmatpush.msra.mxu0 %v2491
      %2522 = vmatpush.msra.mxu0 %v2490
      %2523 = vmatpush.msra.mxu0 %v2489
      %2524 = vmatpush.msra.mxu0 %v2488
      %2525 = vmatpush.msra.mxu0 %v2487
      %2526 = vmatpush.msra.mxu0 %v2486
      %2527 = vmatpush.msra.mxu0 %v2485
      %2528 = vmatpush.msra.mxu0 %v2484
      %2529 = vmatpush.msra.mxu0 %v2483
      %2530 = vmatpush.msra.mxu0 %v2482
      %2531 = vmatpush.msra.mxu0 %v2481
      %2532 = vmatpush.msra.mxu0 %v2480
      %2533 = vmatpush.msra.mxu0 %v2479
      %2534 = vmatmul.f32.gmra.mxu0 %v2382
      %v2535 = vpop.f32.mrf.mxu0
      %v2536 = vadd.f32 %v2513, %v2535
      %2537 = vmatmul.f32.gmra.mxu0 %v2384
      %v2538 = vpop.f32.mrf.mxu0
      %v2539 = vadd.f32 %v2516, %v2538
      %2540 = vdwg.mxu0
      %v2541 = vld [vmem:[%s5] sm:$0xff]
      %v2542 = vld [vmem:[%s5 + $0x8] sm:$0xff]
      %v2543 = vld [vmem:[%s6] sm:$0xff]
      %v2544 = vld [vmem:[%s6 + $0x8] sm:$0xff]
      %2546 = vset.pattern.permute.xlu0 0
      %2547 = vperm.xlu0 %2546, %v2543
      %v2548 = vpop.permute.xlu0 %2547
      %2551 = vset.pattern.permute.xlu0 0
      %2552 = vperm.xlu0 %2551, %v2544
      %v2553 = vpop.permute.xlu0 %2552
      %vm2555 = vcmask 130048
      %v2557 = vsel %vm2555, %v2541, 0
      %v2560 = vsel %vm2555, %v2542, 0
      %2562 = vmatpush.msra.mxu0 0.0
      %2563 = vmatpush.msra.mxu0 0.0
      %2564 = vmatpush.msra.mxu0 0.0
      %2565 = vmatpush.msra.mxu0 0.0
      %2566 = vmatpush.msra.mxu0 0.0
      %2567 = vmatpush.msra.mxu0 0.0
      %2568 = vmatpush.msra.mxu0 0.0
      %2569 = vmatpush.msra.mxu0 0.0
      %2570 = vmatpush.msra.mxu0 0.0
      %2571 = vmatpush.msra.mxu0 0.0
      %2572 = vmatpush.msra.mxu0 0.0
      %2573 = vmatpush.msra.mxu0 0.0
      %2574 = vmatpush.msra.mxu0 0.0
      %2575 = vmatpush.msra.mxu0 0.0
      %2576 = vmatpush.msra.mxu0 %v2461
      %2577 = vmatpush.msra.mxu0 %v2458
      %2578 = vmatmul.f32.gmra.mxu0 %v2557
      %v2579 = vpop.f32.mrf.mxu0
      %v2580 = vadd.f32 %v2548, %v2579
      %2581 = vmatmul.f32.gmra.mxu0 %v2560
      %v2582 = vpop.f32.mrf.mxu0
      %v2583 = vadd.f32 %v2553, %v2582
      %2584 = vdwg.mxu0
      %v2585 = vxor.u32 %v2580, 2147483648
      %v2586 = vxor.u32 %v2583, 2147483648
      %v2587 = vmul.f32 %v2585, 1.442695
      %v2588 = vpow.pop %v2587
      %v2589 = vmul.f32 %v2586, 1.442695
      %v2590 = vpow.pop %v2589
      %v2591 = vadd.f32 %v2588, 1.0
      %v2592 = vadd.f32 %v2590, 1.0
      %v2593 = vrcp.pop %v2591
      %v2594 = vmul.f32 %v2591, %v2593
      %v2595 = vsub.f32 1.0, %v2594
      %v2596 = vmul.f32 %v2593, %v2595
      %v2597 = vadd.f32 %v2593, %v2596
      %vm2598 = vweird.f32 %v2591
      %vm2599 = vweird.f32 %v2593
      %vm2600 = vmor %vm2598, %vm2599
      %v2601 = vsel %vm2600, %v2593, %v2597
      %v2602 = vand.u32 2147483647, %v2591
      %vm2603 = vcmp.eq.f32.partialorder %v2602, 8.507059e+37
      %v2604 = vand.u32 %v2591, 2147483648
      %v2605 = vor.u32 1.1754944e-38, %v2604
      %v2606 = vsel %vm2603, %v2605, %v2601
      %v2607 = vmul.f32 1.0, %v2606
      %v2608 = vrcp.pop %v2592
      %v2609 = vmul.f32 %v2592, %v2608
      %v2610 = vsub.f32 1.0, %v2609
      %v2611 = vmul.f32 %v2608, %v2610
      %v2612 = vadd.f32 %v2608, %v2611
      %vm2613 = vweird.f32 %v2592
      %vm2614 = vweird.f32 %v2608
      %vm2615 = vmor %vm2613, %vm2614
      %v2616 = vsel %vm2615, %v2608, %v2612
      %v2617 = vand.u32 2147483647, %v2592
      %vm2618 = vcmp.eq.f32.partialorder %v2617, 8.507059e+37
      %v2619 = vand.u32 %v2592, 2147483648
      %v2620 = vor.u32 1.1754944e-38, %v2619
      %v2621 = vsel %vm2618, %v2620, %v2616
      %v2622 = vmul.f32 1.0, %v2621
      %2623 = vmatpush.msra.mxu0 0.0
      %2624 = vmatpush.msra.mxu0 0.0
      %2625 = vmatpush.msra.mxu0 0.0
      %2626 = vmatpush.msra.mxu0 0.0
      %2627 = vmatpush.msra.mxu0 0.0
      %2628 = vmatpush.msra.mxu0 0.0
      %2629 = vmatpush.msra.mxu0 0.0
      %2630 = vmatpush.msra.mxu0 0.0
      %2631 = vmatpush.msra.mxu0 0.0
      %2632 = vmatpush.msra.mxu0 0.0
      %2633 = vmatpush.msra.mxu0 0.0
      %2634 = vmatpush.msra.mxu0 0.0
      %2635 = vmatpush.msra.mxu0 0.0
      %2636 = vmatpush.msra.mxu0 0.0
      %2637 = vmatpush.msra.mxu0 %v2539
      %2638 = vmatpush.msra.mxu0 %v2536
      %2639 = vmatmul.f32.gmra.mxu0 %v2557
      %v2640 = vpop.f32.mrf.mxu0
      %v2641 = vadd.f32 %v2548, %v2640
      %2642 = vmatmul.f32.gmra.mxu0 %v2560
      %v2643 = vpop.f32.mrf.mxu0
      %v2644 = vadd.f32 %v2553, %v2643
      %2645 = vdwg.mxu0
      %v2646 = vxor.u32 %v2641, 2147483648
      %v2647 = vxor.u32 %v2644, 2147483648
      %v2648 = vmul.f32 %v2646, 1.442695
      %v2649 = vpow.pop %v2648
      %v2650 = vmul.f32 %v2647, 1.442695
      %v2651 = vpow.pop %v2650
      %v2652 = vadd.f32 %v2649, 1.0
      %v2653 = vadd.f32 %v2651, 1.0
      %v2654 = vrcp.pop %v2652
      %v2655 = vmul.f32 %v2652, %v2654
      %v2656 = vsub.f32 1.0, %v2655
      %v2657 = vmul.f32 %v2654, %v2656
      %v2658 = vadd.f32 %v2654, %v2657
      %vm2659 = vweird.f32 %v2652
      %vm2660 = vweird.f32 %v2654
      %vm2661 = vmor %vm2659, %vm2660
      %v2662 = vsel %vm2661, %v2654, %v2658
      %v2663 = vand.u32 2147483647, %v2652
      %vm2664 = vcmp.eq.f32.partialorder %v2663, 8.507059e+37
      %v2665 = vand.u32 %v2652, 2147483648
      %v2666 = vor.u32 1.1754944e-38, %v2665
      %v2667 = vsel %vm2664, %v2666, %v2662
      %v2668 = vmul.f32 1.0, %v2667
      %v2669 = vrcp.pop %v2653
      %v2670 = vmul.f32 %v2653, %v2669
      %v2671 = vsub.f32 1.0, %v2670
      %v2672 = vmul.f32 %v2669, %v2671
      %v2673 = vadd.f32 %v2669, %v2672
      %vm2674 = vweird.f32 %v2653
      %vm2675 = vweird.f32 %v2669
      %vm2676 = vmor %vm2674, %vm2675
      %v2677 = vsel %vm2676, %v2669, %v2673
      %v2678 = vand.u32 2147483647, %v2653
      %vm2679 = vcmp.eq.f32.partialorder %v2678, 8.507059e+37
      %v2680 = vand.u32 %v2653, 2147483648
      %v2681 = vor.u32 1.1754944e-38, %v2680
      %v2682 = vsel %vm2679, %v2681, %v2677
      %v2683 = vmul.f32 1.0, %v2682
      %v2684 = vld [vmem:[%s8] sm:$0xff]
      %v2685 = vld [vmem:[%s8 + $0x8] sm:$0xff]
      %v2686 = vld [vmem:[%s8 + $0x10] sm:$0xff]
      %v2687 = vld [vmem:[%s8 + $0x18] sm:$0xff]
      %v2689 = vsel %vm2555, %v2607, 0
      %v2692 = vsel %vm2555, %v2622, 0
      %2694 = vmatpush.msra.mxu0 0.0
      %2695 = vmatpush.msra.mxu0 0.0
      %2696 = vmatpush.msra.mxu0 0.0
      %2697 = vmatpush.msra.mxu0 0.0
      %2698 = vmatpush.msra.mxu0 0.0
      %2699 = vmatpush.msra.mxu0 0.0
      %2700 = vmatpush.msra.mxu0 0.0
      %2701 = vmatpush.msra.mxu0 0.0
      %2702 = vmatpush.msra.mxu0 0.0
      %2703 = vmatpush.msra.mxu0 0.0
      %2704 = vmatpush.msra.mxu0 0.0
      %2705 = vmatpush.msra.mxu0 0.0
      %2706 = vmatpush.msra.mxu0 0.0
      %2707 = vmatpush.msra.mxu0 0.0
      %2708 = vmatpush.msra.mxu0 %v2686
      %2709 = vmatpush.msra.mxu0 %v2684
      %2710 = vmatmul.f32.gmra.mxu0 %v2689
      %v2711 = vpop.f32.mrf.mxu0
      %v2712 = vadd.f32 0.0, %v2711
      %2713 = vmatmul.f32.gmra.mxu0 %v2692
      %v2714 = vpop.f32.mrf.mxu0
      %v2715 = vadd.f32 0.0, %v2714
      %2716 = vdwg.mxu0
      %2717 = vmatpush.msra.mxu0 0.0
      %2718 = vmatpush.msra.mxu0 0.0
      %2719 = vmatpush.msra.mxu0 0.0
      %2720 = vmatpush.msra.mxu0 0.0
      %2721 = vmatpush.msra.mxu0 0.0
      %2722 = vmatpush.msra.mxu0 0.0
      %2723 = vmatpush.msra.mxu0 0.0
      %2724 = vmatpush.msra.mxu0 0.0
      %2725 = vmatpush.msra.mxu0 0.0
      %2726 = vmatpush.msra.mxu0 0.0
      %2727 = vmatpush.msra.mxu0 0.0
      %2728 = vmatpush.msra.mxu0 0.0
      %2729 = vmatpush.msra.mxu0 0.0
      %2730 = vmatpush.msra.mxu0 0.0
      %2731 = vmatpush.msra.mxu0 %v2687
      %2732 = vmatpush.msra.mxu0 %v2685
      %2733 = vmatmul.f32.gmra.mxu0 %v2689
      %v2734 = vpop.f32.mrf.mxu0
      %v2735 = vadd.f32 0.0, %v2734
      %2736 = vmatmul.f32.gmra.mxu0 %v2692
      %v2737 = vpop.f32.mrf.mxu0
      %v2738 = vadd.f32 0.0, %v2737
      %2739 = vdwg.mxu0
      %v2740 = vmul.f32 %v2381, %v2712
      %v2741 = vmul.f32 %v2382, %v2735
      %v2742 = vmul.f32 %v2383, %v2715
      %v2743 = vmul.f32 %v2384, %v2738
      %v2744 = vld [vmem:[%s10] sm:$0xff]
      %v2745 = vld [vmem:[%s10 + $0x8] sm:$0xff]
      %v2746 = vld [vmem:[%s10 + $0x10] sm:$0xff]
      %v2747 = vld [vmem:[%s10 + $0x18] sm:$0xff]
      %v2749 = vsel %vm2555, %v2668, 0
      %v2752 = vsel %vm2555, %v2683, 0
      %2754 = vmatpush.msra.mxu0 0.0
      %2755 = vmatpush.msra.mxu0 0.0
      %2756 = vmatpush.msra.mxu0 0.0
      %2757 = vmatpush.msra.mxu0 0.0
      %2758 = vmatpush.msra.mxu0 0.0
      %2759 = vmatpush.msra.mxu0 0.0
      %2760 = vmatpush.msra.mxu0 0.0
      %2761 = vmatpush.msra.mxu0 0.0
      %2762 = vmatpush.msra.mxu0 0.0
      %2763 = vmatpush.msra.mxu0 0.0
      %2764 = vmatpush.msra.mxu0 0.0
      %2765 = vmatpush.msra.mxu0 0.0
      %2766 = vmatpush.msra.mxu0 0.0
      %2767 = vmatpush.msra.mxu0 0.0
      %2768 = vmatpush.msra.mxu0 %v2746
      %2769 = vmatpush.msra.mxu0 %v2744
      %2770 = vmatmul.f32.gmra.mxu0 %v2749
      %v2771 = vpop.f32.mrf.mxu0
      %v2772 = vadd.f32 0.0, %v2771
      %2773 = vmatmul.f32.gmra.mxu0 %v2752
      %v2774 = vpop.f32.mrf.mxu0
      %v2775 = vadd.f32 0.0, %v2774
      %2776 = vdwg.mxu0
      %2777 = vmatpush.msra.mxu0 0.0
      %2778 = vmatpush.msra.mxu0 0.0
      %2779 = vmatpush.msra.mxu0 0.0
      %2780 = vmatpush.msra.mxu0 0.0
      %2781 = vmatpush.msra.mxu0 0.0
      %2782 = vmatpush.msra.mxu0 0.0
      %2783 = vmatpush.msra.mxu0 0.0
      %2784 = vmatpush.msra.mxu0 0.0
      %2785 = vmatpush.msra.mxu0 0.0
      %2786 = vmatpush.msra.mxu0 0.0
      %2787 = vmatpush.msra.mxu0 0.0
      %2788 = vmatpush.msra.mxu0 0.0
      %2789 = vmatpush.msra.mxu0 0.0
      %2790 = vmatpush.msra.mxu0 0.0
      %2791 = vmatpush.msra.mxu0 %v2747
      %2792 = vmatpush.msra.mxu0 %v2745
      %2793 = vmatmul.f32.gmra.mxu0 %v2749
      %v2794 = vpop.f32.mrf.mxu0
      %v2795 = vadd.f32 0.0, %v2794
      %2796 = vmatmul.f32.gmra.mxu0 %v2752
      %v2797 = vpop.f32.mrf.mxu0
      %v2798 = vadd.f32 0.0, %v2797
      %2799 = vdwg.mxu0
      %v2800 = vmul.f32 %v2740, %v2772
      %v2801 = vmul.f32 %v2741, %v2795
      %v2802 = vmul.f32 %v2742, %v2775
      %v2803 = vmul.f32 %v2743, %v2798
      %v2804 = vadd.f32 %v2800, %v2801
      %2805 = vadd.xlane.f32.xlu0 %v2804
      %v2806 = vpop.xlane.xlu0 %2805
      %v2807 = vadd.f32 %v2802, %v2803
      %2808 = vadd.xlane.f32.xlu0 %v2807
      %v2809 = vpop.xlane.xlu0 %2808
      %v2810 = vrcp.pop 256.0
      %v2811 = vmul.f32 256.0, %v2810
      %v2812 = vsub.f32 1.0, %v2811
      %v2813 = vmul.f32 %v2810, %v2812
      %v2814 = vadd.f32 %v2810, %v2813
      %vm2815 = vweird.f32 %v2810
      %v2816 = vsel %vm2815, %v2810, %v2814
      %v2817 = vmul.f32 %v2806, %v2816
      %v2818 = vmul.f32 %v2809, %v2816
      %v2819 = vsub.f32 %v2800, %v2817
      %v2820 = vsub.f32 %v2801, %v2817
      %v2821 = vsub.f32 %v2802, %v2818
      %v2822 = vsub.f32 %v2803, %v2818
      %v2823 = vmul.f32 %v2819, %v2819
      %v2824 = vmul.f32 %v2820, %v2820
      %v2825 = vmul.f32 %v2821, %v2821
      %v2826 = vmul.f32 %v2822, %v2822
      %v2827 = vadd.f32 %v2823, %v2824
      %2828 = vadd.xlane.f32.xlu0 %v2827
      %v2829 = vpop.xlane.xlu0 %2828
      %v2830 = vadd.f32 %v2825, %v2826
      %2831 = vadd.xlane.f32.xlu0 %v2830
      %v2832 = vpop.xlane.xlu0 %2831
      %v2833 = vmul.f32 %v2829, %v2816
      %v2834 = vmul.f32 %v2832, %v2816
      %v2835 = vadd.f32 %v2833, 1e-05
      %v2836 = vadd.f32 %v2834, 1e-05
      %v2837 = vrsqrt.pop %v2835
      %v2838 = vmul.f32 %v2837, %v2835
      %v2839 = vmul.f32 %v2838, %v2837
      %v2840 = vmul.f32 0.5, %v2839
      %v2841 = vsub.f32 1.5, %v2840
      %v2842 = vmul.f32 %v2837, %v2841
      %vm2843 = vweird.f32 %v2835
      %vm2844 = vweird.f32 %v2837
      %vm2845 = vmor %vm2843, %vm2844
      %v2846 = vsel %vm2845, %v2837, %v2842
      %v2847 = vrsqrt.pop %v2836
      %v2848 = vmul.f32 %v2847, %v2836
      %v2849 = vmul.f32 %v2848, %v2847
      %v2850 = vmul.f32 0.5, %v2849
      %v2851 = vsub.f32 1.5, %v2850
      %v2852 = vmul.f32 %v2847, %v2851
      %vm2853 = vweird.f32 %v2836
      %vm2854 = vweird.f32 %v2847
      %vm2855 = vmor %vm2853, %vm2854
      %v2856 = vsel %vm2855, %v2847, %v2852
      %v2857 = vmul.f32 %v2819, %v2846
      %v2858 = vmul.f32 %v2820, %v2846
      %v2859 = vmul.f32 %v2821, %v2856
      %v2860 = vmul.f32 %v2822, %v2856
      %v2861 = vld [vmem:[%s11] sm:$0xff]
      %v2862 = vld [vmem:[%s11 + $0x8] sm:$0xff]
      %2864 = vset.pattern.permute.xlu0 0
      %2865 = vperm.xlu0 %2864, %v2861
      %v2866 = vpop.permute.xlu0 %2865
      %2869 = vset.pattern.permute.xlu0 0
      %2870 = vperm.xlu0 %2869, %v2862
      %v2871 = vpop.permute.xlu0 %2870
      %v2873 = vmul.f32 %v2857, %v2866
      %v2874 = vmul.f32 %v2858, %v2866
      %v2875 = vmul.f32 %v2859, %v2871
      %v2876 = vmul.f32 %v2860, %v2871
      %v2877 = vld [vmem:[%s12] sm:$0xff]
      %v2878 = vld [vmem:[%s12 + $0x8] sm:$0xff]
      %2880 = vset.pattern.permute.xlu0 0
      %2881 = vperm.xlu0 %2880, %v2877
      %v2882 = vpop.permute.xlu0 %2881
      %2885 = vset.pattern.permute.xlu0 0
      %2886 = vperm.xlu0 %2885, %v2878
      %v2887 = vpop.permute.xlu0 %2886
      %v2889 = vadd.f32 %v2873, %v2882
      %v2890 = vadd.f32 %v2874, %v2882
      %v2891 = vadd.f32 %v2875, %v2887
      %v2892 = vadd.f32 %v2876, %v2887
      %v2893 = vld [vmem:[%s14] sm:$0xff]
      %v2894 = vld [vmem:[%s14 + $0x8] sm:$0xff]
      %2896 = vset.pattern.permute.xlu0 0
      %2897 = vperm.xlu0 %2896, %v2893
      %v2898 = vpop.permute.xlu0 %2897
      %2901 = vset.pattern.permute.xlu0 0
      %2902 = vperm.xlu0 %2901, %v2894
      %v2903 = vpop.permute.xlu0 %2902
      %v2905 = vadd.f32 %v2898, 0.0
      %v2906 = vadd.f32 %v2903, 0.0
      %2907 = vmatpush.msra.mxu0 %v556
      %2908 = vmatpush.msra.mxu0 %v554
      %2909 = vmatpush.msra.mxu0 %v552
      %2910 = vmatpush.msra.mxu0 %v550
      %2911 = vmatpush.msra.mxu0 %v548
      %2912 = vmatpush.msra.mxu0 %v546
      %2913 = vmatpush.msra.mxu0 %v544
      %2914 = vmatpush.msra.mxu0 %v542
      %2915 = vmatpush.msra.mxu0 %v540
      %2916 = vmatpush.msra.mxu0 %v538
      %2917 = vmatpush.msra.mxu0 %v536
      %2918 = vmatpush.msra.mxu0 %v534
      %2919 = vmatpush.msra.mxu0 %v532
      %2920 = vmatpush.msra.mxu0 %v530
      %2921 = vmatpush.msra.mxu0 %v528
      %2922 = vmatpush.msra.mxu0 %v526
      %2923 = vmatmul.f32.gmra.mxu0 %v2381
      %v2924 = vpop.f32.mrf.mxu0
      %v2925 = vadd.f32 0.0, %v2924
      %2926 = vmatmul.f32.gmra.mxu0 %v2383
      %v2927 = vpop.f32.mrf.mxu0
      %v2928 = vadd.f32 0.0, %v2927
      %2929 = vdwg.mxu0
      %2930 = vmatpush.msra.mxu0 %v588
      %2931 = vmatpush.msra.mxu0 %v586
      %2932 = vmatpush.msra.mxu0 %v584
      %2933 = vmatpush.msra.mxu0 %v582
      %2934 = vmatpush.msra.mxu0 %v580
      %2935 = vmatpush.msra.mxu0 %v578
      %2936 = vmatpush.msra.mxu0 %v576
      %2937 = vmatpush.msra.mxu0 %v574
      %2938 = vmatpush.msra.mxu0 %v572
      %2939 = vmatpush.msra.mxu0 %v570
      %2940 = vmatpush.msra.mxu0 %v568
      %2941 = vmatpush.msra.mxu0 %v566
      %2942 = vmatpush.msra.mxu0 %v564
      %2943 = vmatpush.msra.mxu0 %v562
      %2944 = vmatpush.msra.mxu0 %v560
      %2945 = vmatpush.msra.mxu0 %v558
      %2946 = vmatmul.f32.gmra.mxu0 %v2382
      %v2947 = vpop.f32.mrf.mxu0
      %v2948 = vadd.f32 %v2925, %v2947
      %2949 = vmatmul.f32.gmra.mxu0 %v2384
      %v2950 = vpop.f32.mrf.mxu0
      %v2951 = vadd.f32 %v2928, %v2950
      %2952 = vdwg.mxu0
      %2953 = vmatpush.msra.mxu0 %v557
      %2954 = vmatpush.msra.mxu0 %v555
      %2955 = vmatpush.msra.mxu0 %v553
      %2956 = vmatpush.msra.mxu0 %v551
      %2957 = vmatpush.msra.mxu0 %v549
      %2958 = vmatpush.msra.mxu0 %v547
      %2959 = vmatpush.msra.mxu0 %v545
      %2960 = vmatpush.msra.mxu0 %v543
      %2961 = vmatpush.msra.mxu0 %v541
      %2962 = vmatpush.msra.mxu0 %v539
      %2963 = vmatpush.msra.mxu0 %v537
      %2964 = vmatpush.msra.mxu0 %v535
      %2965 = vmatpush.msra.mxu0 %v533
      %2966 = vmatpush.msra.mxu0 %v531
      %2967 = vmatpush.msra.mxu0 %v529
      %2968 = vmatpush.msra.mxu0 %v527
      %2969 = vmatmul.f32.gmra.mxu0 %v2381
      %v2970 = vpop.f32.mrf.mxu0
      %v2971 = vadd.f32 0.0, %v2970
      %2972 = vmatmul.f32.gmra.mxu0 %v2383
      %v2973 = vpop.f32.mrf.mxu0
      %v2974 = vadd.f32 0.0, %v2973
      %2975 = vdwg.mxu0
      %2976 = vmatpush.msra.mxu0 %v589
      %2977 = vmatpush.msra.mxu0 %v587
      %2978 = vmatpush.msra.mxu0 %v585
      %2979 = vmatpush.msra.mxu0 %v583
      %2980 = vmatpush.msra.mxu0 %v581
      %2981 = vmatpush.msra.mxu0 %v579
      %2982 = vmatpush.msra.mxu0 %v577
      %2983 = vmatpush.msra.mxu0 %v575
      %2984 = vmatpush.msra.mxu0 %v573
      %2985 = vmatpush.msra.mxu0 %v571
      %2986 = vmatpush.msra.mxu0 %v569
      %2987 = vmatpush.msra.mxu0 %v567
      %2988 = vmatpush.msra.mxu0 %v565
      %2989 = vmatpush.msra.mxu0 %v563
      %2990 = vmatpush.msra.mxu0 %v561
      %2991 = vmatpush.msra.mxu0 %v559
      %2992 = vmatmul.f32.gmra.mxu0 %v2382
      %v2993 = vpop.f32.mrf.mxu0
      %v2994 = vadd.f32 %v2971, %v2993
      %2995 = vmatmul.f32.gmra.mxu0 %v2384
      %v2996 = vpop.f32.mrf.mxu0
      %v2997 = vadd.f32 %v2974, %v2996
      %2998 = vdwg.mxu0
      %v2999 = vld [vmem:[%s13] sm:$0xff]
      %v3000 = vld [vmem:[%s13 + $0x8] sm:$0xff]
      %v3002 = vsel %vm2555, %v2999, 0
      %v3005 = vsel %vm2555, %v3000, 0
      %3007 = vmatpush.msra.mxu0 0.0
      %3008 = vmatpush.msra.mxu0 0.0
      %3009 = vmatpush.msra.mxu0 0.0
      %3010 = vmatpush.msra.mxu0 0.0
      %3011 = vmatpush.msra.mxu0 0.0
      %3012 = vmatpush.msra.mxu0 0.0
      %3013 = vmatpush.msra.mxu0 0.0
      %3014 = vmatpush.msra.mxu0 0.0
      %3015 = vmatpush.msra.mxu0 0.0
      %3016 = vmatpush.msra.mxu0 0.0
      %3017 = vmatpush.msra.mxu0 0.0
      %3018 = vmatpush.msra.mxu0 0.0
      %3019 = vmatpush.msra.mxu0 0.0
      %3020 = vmatpush.msra.mxu0 0.0
      %3021 = vmatpush.msra.mxu0 %v2951
      %3022 = vmatpush.msra.mxu0 %v2948
      %3023 = vmatmul.f32.gmra.mxu0 %v3002
      %v3024 = vpop.f32.mrf.mxu0
      %v3025 = vadd.f32 0.0, %v3024
      %3026 = vmatmul.f32.gmra.mxu0 %v3005
      %v3027 = vpop.f32.mrf.mxu0
      %v3028 = vadd.f32 0.0, %v3027
      %3029 = vdwg.mxu0
      %3030 = vmatpush.msra.mxu0 0.0
      %3031 = vmatpush.msra.mxu0 0.0
      %3032 = vmatpush.msra.mxu0 0.0
      %3033 = vmatpush.msra.mxu0 0.0
      %3034 = vmatpush.msra.mxu0 0.0
      %3035 = vmatpush.msra.mxu0 0.0
      %3036 = vmatpush.msra.mxu0 0.0
      %3037 = vmatpush.msra.mxu0 0.0
      %3038 = vmatpush.msra.mxu0 0.0
      %3039 = vmatpush.msra.mxu0 0.0
      %3040 = vmatpush.msra.mxu0 0.0
      %3041 = vmatpush.msra.mxu0 0.0
      %3042 = vmatpush.msra.mxu0 0.0
      %3043 = vmatpush.msra.mxu0 0.0
      %3044 = vmatpush.msra.mxu0 %v2997
      %3045 = vmatpush.msra.mxu0 %v2994
      %3046 = vmatmul.f32.gmra.mxu0 %v3002
      %v3047 = vpop.f32.mrf.mxu0
      %v3048 = vadd.f32 0.0, %v3047
      %3049 = vmatmul.f32.gmra.mxu0 %v3005
      %v3050 = vpop.f32.mrf.mxu0
      %v3051 = vadd.f32 0.0, %v3050
      %3052 = vdwg.mxu0
      %v3053 = vadd.f32 %v2905, %v3025
      %v3054 = vadd.f32 %v2905, %v3048
      %v3055 = vadd.f32 %v2906, %v3028
      %v3056 = vadd.f32 %v2906, %v3051
      %3057 = vmatpush.msra.mxu0 %v703
      %3058 = vmatpush.msra.mxu0 %v701
      %3059 = vmatpush.msra.mxu0 %v699
      %3060 = vmatpush.msra.mxu0 %v697
      %3061 = vmatpush.msra.mxu0 %v695
      %3062 = vmatpush.msra.mxu0 %v693
      %3063 = vmatpush.msra.mxu0 %v691
      %3064 = vmatpush.msra.mxu0 %v689
      %3065 = vmatpush.msra.mxu0 %v687
      %3066 = vmatpush.msra.mxu0 %v685
      %3067 = vmatpush.msra.mxu0 %v683
      %3068 = vmatpush.msra.mxu0 %v681
      %3069 = vmatpush.msra.mxu0 %v679
      %3070 = vmatpush.msra.mxu0 %v677
      %3071 = vmatpush.msra.mxu0 %v675
      %3072 = vmatpush.msra.mxu0 %v673
      %3073 = vmatmul.f32.gmra.mxu0 %v2381
      %v3074 = vpop.f32.mrf.mxu0
      %v3075 = vadd.f32 0.0, %v3074
      %3076 = vmatmul.f32.gmra.mxu0 %v2383
      %v3077 = vpop.f32.mrf.mxu0
      %v3078 = vadd.f32 0.0, %v3077
      %3079 = vdwg.mxu0
      %3080 = vmatpush.msra.mxu0 %v735
      %3081 = vmatpush.msra.mxu0 %v733
      %3082 = vmatpush.msra.mxu0 %v731
      %3083 = vmatpush.msra.mxu0 %v729
      %3084 = vmatpush.msra.mxu0 %v727
      %3085 = vmatpush.msra.mxu0 %v725
      %3086 = vmatpush.msra.mxu0 %v723
      %3087 = vmatpush.msra.mxu0 %v721
      %3088 = vmatpush.msra.mxu0 %v719
      %3089 = vmatpush.msra.mxu0 %v717
      %3090 = vmatpush.msra.mxu0 %v715
      %3091 = vmatpush.msra.mxu0 %v713
      %3092 = vmatpush.msra.mxu0 %v711
      %3093 = vmatpush.msra.mxu0 %v709
      %3094 = vmatpush.msra.mxu0 %v707
      %3095 = vmatpush.msra.mxu0 %v705
      %3096 = vmatmul.f32.gmra.mxu0 %v2382
      %v3097 = vpop.f32.mrf.mxu0
      %v3098 = vadd.f32 %v3075, %v3097
      %3099 = vmatmul.f32.gmra.mxu0 %v2384
      %v3100 = vpop.f32.mrf.mxu0
      %v3101 = vadd.f32 %v3078, %v3100
      %3102 = vdwg.mxu0
      %3103 = vmatpush.msra.mxu0 %v704
      %3104 = vmatpush.msra.mxu0 %v702
      %3105 = vmatpush.msra.mxu0 %v700
      %3106 = vmatpush.msra.mxu0 %v698
      %3107 = vmatpush.msra.mxu0 %v696
      %3108 = vmatpush.msra.mxu0 %v694
      %3109 = vmatpush.msra.mxu0 %v692
      %3110 = vmatpush.msra.mxu0 %v690
      %3111 = vmatpush.msra.mxu0 %v688
      %3112 = vmatpush.msra.mxu0 %v686
      %3113 = vmatpush.msra.mxu0 %v684
      %3114 = vmatpush.msra.mxu0 %v682
      %3115 = vmatpush.msra.mxu0 %v680
      %3116 = vmatpush.msra.mxu0 %v678
      %3117 = vmatpush.msra.mxu0 %v676
      %3118 = vmatpush.msra.mxu0 %v674
      %3119 = vmatmul.f32.gmra.mxu0 %v2381
      %v3120 = vpop.f32.mrf.mxu0
      %v3121 = vadd.f32 0.0, %v3120
      %3122 = vmatmul.f32.gmra.mxu0 %v2383
      %v3123 = vpop.f32.mrf.mxu0
      %v3124 = vadd.f32 0.0, %v3123
      %3125 = vdwg.mxu0
      %3126 = vmatpush.msra.mxu0 %v736
      %3127 = vmatpush.msra.mxu0 %v734
      %3128 = vmatpush.msra.mxu0 %v732
      %3129 = vmatpush.msra.mxu0 %v730
      %3130 = vmatpush.msra.mxu0 %v728
      %3131 = vmatpush.msra.mxu0 %v726
      %3132 = vmatpush.msra.mxu0 %v724
      %3133 = vmatpush.msra.mxu0 %v722
      %3134 = vmatpush.msra.mxu0 %v720
      %3135 = vmatpush.msra.mxu0 %v718
      %3136 = vmatpush.msra.mxu0 %v716
      %3137 = vmatpush.msra.mxu0 %v714
      %3138 = vmatpush.msra.mxu0 %v712
      %3139 = vmatpush.msra.mxu0 %v710
      %3140 = vmatpush.msra.mxu0 %v708
      %3141 = vmatpush.msra.mxu0 %v706
      %3142 = vmatmul.f32.gmra.mxu0 %v2382
      %v3143 = vpop.f32.mrf.mxu0
      %v3144 = vadd.f32 %v3121, %v3143
      %3145 = vmatmul.f32.gmra.mxu0 %v2384
      %v3146 = vpop.f32.mrf.mxu0
      %v3147 = vadd.f32 %v3124, %v3146
      %3148 = vdwg.mxu0
      %s3149 = scalar_lea.vmem %s13, 16
      %v3150 = vld [vmem:[%s3149] sm:$0xff]
      %v3151 = vld [vmem:[%s3149 + $0x8] sm:$0xff]
      %v3153 = vsel %vm2555, %v3150, 0
      %v3156 = vsel %vm2555, %v3151, 0
      %3158 = vmatpush.msra.mxu0 0.0
      %3159 = vmatpush.msra.mxu0 0.0
      %3160 = vmatpush.msra.mxu0 0.0
      %3161 = vmatpush.msra.mxu0 0.0
      %3162 = vmatpush.msra.mxu0 0.0
      %3163 = vmatpush.msra.mxu0 0.0
      %3164 = vmatpush.msra.mxu0 0.0
      %3165 = vmatpush.msra.mxu0 0.0
      %3166 = vmatpush.msra.mxu0 0.0
      %3167 = vmatpush.msra.mxu0 0.0
      %3168 = vmatpush.msra.mxu0 0.0
      %3169 = vmatpush.msra.mxu0 0.0
      %3170 = vmatpush.msra.mxu0 0.0
      %3171 = vmatpush.msra.mxu0 0.0
      %3172 = vmatpush.msra.mxu0 %v3101
      %3173 = vmatpush.msra.mxu0 %v3098
      %3174 = vmatmul.f32.gmra.mxu0 %v3153
      %v3175 = vpop.f32.mrf.mxu0
      %v3176 = vadd.f32 0.0, %v3175
      %3177 = vmatmul.f32.gmra.mxu0 %v3156
      %v3178 = vpop.f32.mrf.mxu0
      %v3179 = vadd.f32 0.0, %v3178
      %3180 = vdwg.mxu0
      %3181 = vmatpush.msra.mxu0 0.0
      %3182 = vmatpush.msra.mxu0 0.0
      %3183 = vmatpush.msra.mxu0 0.0
      %3184 = vmatpush.msra.mxu0 0.0
      %3185 = vmatpush.msra.mxu0 0.0
      %3186 = vmatpush.msra.mxu0 0.0
      %3187 = vmatpush.msra.mxu0 0.0
      %3188 = vmatpush.msra.mxu0 0.0
      %3189 = vmatpush.msra.mxu0 0.0
      %3190 = vmatpush.msra.mxu0 0.0
      %3191 = vmatpush.msra.mxu0 0.0
      %3192 = vmatpush.msra.mxu0 0.0
      %3193 = vmatpush.msra.mxu0 0.0
      %3194 = vmatpush.msra.mxu0 0.0
      %3195 = vmatpush.msra.mxu0 %v3147
      %3196 = vmatpush.msra.mxu0 %v3144
      %3197 = vmatmul.f32.gmra.mxu0 %v3153
      %v3198 = vpop.f32.mrf.mxu0
      %v3199 = vadd.f32 0.0, %v3198
      %3200 = vmatmul.f32.gmra.mxu0 %v3156
      %v3201 = vpop.f32.mrf.mxu0
      %v3202 = vadd.f32 0.0, %v3201
      %3203 = vdwg.mxu0
      %v3204 = vadd.f32 %v3053, %v3176
      %v3205 = vadd.f32 %v3054, %v3199
      %v3206 = vadd.f32 %v3055, %v3179
      %v3207 = vadd.f32 %v3056, %v3202
      %3208 = vmatpush.msra.mxu0 %v956
      %3209 = vmatpush.msra.mxu0 %v954
      %3210 = vmatpush.msra.mxu0 %v952
      %3211 = vmatpush.msra.mxu0 %v950
      %3212 = vmatpush.msra.mxu0 %v948
      %3213 = vmatpush.msra.mxu0 %v946
      %3214 = vmatpush.msra.mxu0 %v944
      %3215 = vmatpush.msra.mxu0 %v942
      %3216 = vmatpush.msra.mxu0 %v940
      %3217 = vmatpush.msra.mxu0 %v938
      %3218 = vmatpush.msra.mxu0 %v936
      %3219 = vmatpush.msra.mxu0 %v934
      %3220 = vmatpush.msra.mxu0 %v932
      %3221 = vmatpush.msra.mxu0 %v930
      %3222 = vmatpush.msra.mxu0 %v928
      %3223 = vmatpush.msra.mxu0 %v926
      %3224 = vmatmul.f32.gmra.mxu0 %v2381
      %v3225 = vpop.f32.mrf.mxu0
      %v3226 = vadd.f32 0.0, %v3225
      %3227 = vmatmul.f32.gmra.mxu0 %v2383
      %v3228 = vpop.f32.mrf.mxu0
      %v3229 = vadd.f32 0.0, %v3228
      %3230 = vdwg.mxu0
      %3231 = vmatpush.msra.mxu0 %v988
      %3232 = vmatpush.msra.mxu0 %v986
      %3233 = vmatpush.msra.mxu0 %v984
      %3234 = vmatpush.msra.mxu0 %v982
      %3235 = vmatpush.msra.mxu0 %v980
      %3236 = vmatpush.msra.mxu0 %v978
      %3237 = vmatpush.msra.mxu0 %v976
      %3238 = vmatpush.msra.mxu0 %v974
      %3239 = vmatpush.msra.mxu0 %v972
      %3240 = vmatpush.msra.mxu0 %v970
      %3241 = vmatpush.msra.mxu0 %v968
      %3242 = vmatpush.msra.mxu0 %v966
      %3243 = vmatpush.msra.mxu0 %v964
      %3244 = vmatpush.msra.mxu0 %v962
      %3245 = vmatpush.msra.mxu0 %v960
      %3246 = vmatpush.msra.mxu0 %v958
      %3247 = vmatmul.f32.gmra.mxu0 %v2382
      %v3248 = vpop.f32.mrf.mxu0
      %v3249 = vadd.f32 %v3226, %v3248
      %3250 = vmatmul.f32.gmra.mxu0 %v2384
      %v3251 = vpop.f32.mrf.mxu0
      %v3252 = vadd.f32 %v3229, %v3251
      %3253 = vdwg.mxu0
      %3254 = vmatpush.msra.mxu0 %v957
      %3255 = vmatpush.msra.mxu0 %v955
      %3256 = vmatpush.msra.mxu0 %v953
      %3257 = vmatpush.msra.mxu0 %v951
      %3258 = vmatpush.msra.mxu0 %v949
      %3259 = vmatpush.msra.mxu0 %v947
      %3260 = vmatpush.msra.mxu0 %v945
      %3261 = vmatpush.msra.mxu0 %v943
      %3262 = vmatpush.msra.mxu0 %v941
      %3263 = vmatpush.msra.mxu0 %v939
      %3264 = vmatpush.msra.mxu0 %v937
      %3265 = vmatpush.msra.mxu0 %v935
      %3266 = vmatpush.msra.mxu0 %v933
      %3267 = vmatpush.msra.mxu0 %v931
      %3268 = vmatpush.msra.mxu0 %v929
      %3269 = vmatpush.msra.mxu0 %v927
      %3270 = vmatmul.f32.gmra.mxu0 %v2381
      %v3271 = vpop.f32.mrf.mxu0
      %v3272 = vadd.f32 0.0, %v3271
      %3273 = vmatmul.f32.gmra.mxu0 %v2383
      %v3274 = vpop.f32.mrf.mxu0
      %v3275 = vadd.f32 0.0, %v3274
      %3276 = vdwg.mxu0
      %3277 = vmatpush.msra.mxu0 %v989
      %3278 = vmatpush.msra.mxu0 %v987
      %3279 = vmatpush.msra.mxu0 %v985
      %3280 = vmatpush.msra.mxu0 %v983
      %3281 = vmatpush.msra.mxu0 %v981
      %3282 = vmatpush.msra.mxu0 %v979
      %3283 = vmatpush.msra.mxu0 %v977
      %3284 = vmatpush.msra.mxu0 %v975
      %3285 = vmatpush.msra.mxu0 %v973
      %3286 = vmatpush.msra.mxu0 %v971
      %3287 = vmatpush.msra.mxu0 %v969
      %3288 = vmatpush.msra.mxu0 %v967
      %3289 = vmatpush.msra.mxu0 %v965
      %3290 = vmatpush.msra.mxu0 %v963
      %3291 = vmatpush.msra.mxu0 %v961
      %3292 = vmatpush.msra.mxu0 %v959
      %3293 = vmatmul.f32.gmra.mxu0 %v2382
      %v3294 = vpop.f32.mrf.mxu0
      %v3295 = vadd.f32 %v3272, %v3294
      %3296 = vmatmul.f32.gmra.mxu0 %v2384
      %v3297 = vpop.f32.mrf.mxu0
      %v3298 = vadd.f32 %v3275, %v3297
      %3299 = vdwg.mxu0
      %s3300 = scalar_lea.vmem %s13, 32
      %v3301 = vld [vmem:[%s3300] sm:$0xff]
      %v3302 = vld [vmem:[%s3300 + $0x8] sm:$0xff]
      %v3304 = vsel %vm2555, %v3301, 0
      %v3307 = vsel %vm2555, %v3302, 0
      %3309 = vmatpush.msra.mxu0 0.0
      %3310 = vmatpush.msra.mxu0 0.0
      %3311 = vmatpush.msra.mxu0 0.0
      %3312 = vmatpush.msra.mxu0 0.0
      %3313 = vmatpush.msra.mxu0 0.0
      %3314 = vmatpush.msra.mxu0 0.0
      %3315 = vmatpush.msra.mxu0 0.0
      %3316 = vmatpush.msra.mxu0 0.0
      %3317 = vmatpush.msra.mxu0 0.0
      %3318 = vmatpush.msra.mxu0 0.0
      %3319 = vmatpush.msra.mxu0 0.0
      %3320 = vmatpush.msra.mxu0 0.0
      %3321 = vmatpush.msra.mxu0 0.0
      %3322 = vmatpush.msra.mxu0 0.0
      %3323 = vmatpush.msra.mxu0 %v3252
      %3324 = vmatpush.msra.mxu0 %v3249
      %3325 = vmatmul.f32.gmra.mxu0 %v3304
      %v3326 = vpop.f32.mrf.mxu0
      %v3327 = vadd.f32 0.0, %v3326
      %3328 = vmatmul.f32.gmra.mxu0 %v3307
      %v3329 = vpop.f32.mrf.mxu0
      %v3330 = vadd.f32 0.0, %v3329
      %3331 = vdwg.mxu0
      %3332 = vmatpush.msra.mxu0 0.0
      %3333 = vmatpush.msra.mxu0 0.0
      %3334 = vmatpush.msra.mxu0 0.0
      %3335 = vmatpush.msra.mxu0 0.0
      %3336 = vmatpush.msra.mxu0 0.0
      %3337 = vmatpush.msra.mxu0 0.0
      %3338 = vmatpush.msra.mxu0 0.0
      %3339 = vmatpush.msra.mxu0 0.0
      %3340 = vmatpush.msra.mxu0 0.0
      %3341 = vmatpush.msra.mxu0 0.0
      %3342 = vmatpush.msra.mxu0 0.0
      %3343 = vmatpush.msra.mxu0 0.0
      %3344 = vmatpush.msra.mxu0 0.0
      %3345 = vmatpush.msra.mxu0 0.0
      %3346 = vmatpush.msra.mxu0 %v3298
      %3347 = vmatpush.msra.mxu0 %v3295
      %3348 = vmatmul.f32.gmra.mxu0 %v3304
      %v3349 = vpop.f32.mrf.mxu0
      %v3350 = vadd.f32 0.0, %v3349
      %3351 = vmatmul.f32.gmra.mxu0 %v3307
      %v3352 = vpop.f32.mrf.mxu0
      %v3353 = vadd.f32 0.0, %v3352
      %3354 = vdwg.mxu0
      %v3355 = vadd.f32 %v3204, %v3327
      %v3356 = vadd.f32 %v3205, %v3350
      %v3357 = vadd.f32 %v3206, %v3330
      %v3358 = vadd.f32 %v3207, %v3353
      %3359 = vmatpush.msra.mxu0 %v1160
      %3360 = vmatpush.msra.mxu0 %v1158
      %3361 = vmatpush.msra.mxu0 %v1156
      %3362 = vmatpush.msra.mxu0 %v1154
      %3363 = vmatpush.msra.mxu0 %v1152
      %3364 = vmatpush.msra.mxu0 %v1150
      %3365 = vmatpush.msra.mxu0 %v1148
      %3366 = vmatpush.msra.mxu0 %v1146
      %3367 = vmatpush.msra.mxu0 %v1144
      %3368 = vmatpush.msra.mxu0 %v1142
      %3369 = vmatpush.msra.mxu0 %v1140
      %3370 = vmatpush.msra.mxu0 %v1138
      %3371 = vmatpush.msra.mxu0 %v1136
      %3372 = vmatpush.msra.mxu0 %v1134
      %3373 = vmatpush.msra.mxu0 %v1132
      %3374 = vmatpush.msra.mxu0 %v1130
      %3375 = vmatmul.f32.gmra.mxu0 %v2381
      %v3376 = vpop.f32.mrf.mxu0
      %v3377 = vadd.f32 0.0, %v3376
      %3378 = vmatmul.f32.gmra.mxu0 %v2383
      %v3379 = vpop.f32.mrf.mxu0
      %v3380 = vadd.f32 0.0, %v3379
      %3381 = vdwg.mxu0
      %3382 = vmatpush.msra.mxu0 %v1192
      %3383 = vmatpush.msra.mxu0 %v1190
      %3384 = vmatpush.msra.mxu0 %v1188
      %3385 = vmatpush.msra.mxu0 %v1186
      %3386 = vmatpush.msra.mxu0 %v1184
      %3387 = vmatpush.msra.mxu0 %v1182
      %3388 = vmatpush.msra.mxu0 %v1180
      %3389 = vmatpush.msra.mxu0 %v1178
      %3390 = vmatpush.msra.mxu0 %v1176
      %3391 = vmatpush.msra.mxu0 %v1174
      %3392 = vmatpush.msra.mxu0 %v1172
      %3393 = vmatpush.msra.mxu0 %v1170
      %3394 = vmatpush.msra.mxu0 %v1168
      %3395 = vmatpush.msra.mxu0 %v1166
      %3396 = vmatpush.msra.mxu0 %v1164
      %3397 = vmatpush.msra.mxu0 %v1162
      %3398 = vmatmul.f32.gmra.mxu0 %v2382
      %v3399 = vpop.f32.mrf.mxu0
      %v3400 = vadd.f32 %v3377, %v3399
      %3401 = vmatmul.f32.gmra.mxu0 %v2384
      %v3402 = vpop.f32.mrf.mxu0
      %v3403 = vadd.f32 %v3380, %v3402
      %3404 = vdwg.mxu0
      %3405 = vmatpush.msra.mxu0 %v1161
      %3406 = vmatpush.msra.mxu0 %v1159
      %3407 = vmatpush.msra.mxu0 %v1157
      %3408 = vmatpush.msra.mxu0 %v1155
      %3409 = vmatpush.msra.mxu0 %v1153
      %3410 = vmatpush.msra.mxu0 %v1151
      %3411 = vmatpush.msra.mxu0 %v1149
      %3412 = vmatpush.msra.mxu0 %v1147
      %3413 = vmatpush.msra.mxu0 %v1145
      %3414 = vmatpush.msra.mxu0 %v1143
      %3415 = vmatpush.msra.mxu0 %v1141
      %3416 = vmatpush.msra.mxu0 %v1139
      %3417 = vmatpush.msra.mxu0 %v1137
      %3418 = vmatpush.msra.mxu0 %v1135
      %3419 = vmatpush.msra.mxu0 %v1133
      %3420 = vmatpush.msra.mxu0 %v1131
      %3421 = vmatmul.f32.gmra.mxu0 %v2381
      %v3422 = vpop.f32.mrf.mxu0
      %v3423 = vadd.f32 0.0, %v3422
      %3424 = vmatmul.f32.gmra.mxu0 %v2383
      %v3425 = vpop.f32.mrf.mxu0
      %v3426 = vadd.f32 0.0, %v3425
      %3427 = vdwg.mxu0
      %3428 = vmatpush.msra.mxu0 %v1193
      %3429 = vmatpush.msra.mxu0 %v1191
      %3430 = vmatpush.msra.mxu0 %v1189
      %3431 = vmatpush.msra.mxu0 %v1187
      %3432 = vmatpush.msra.mxu0 %v1185
      %3433 = vmatpush.msra.mxu0 %v1183
      %3434 = vmatpush.msra.mxu0 %v1181
      %3435 = vmatpush.msra.mxu0 %v1179
      %3436 = vmatpush.msra.mxu0 %v1177
      %3437 = vmatpush.msra.mxu0 %v1175
      %3438 = vmatpush.msra.mxu0 %v1173
      %3439 = vmatpush.msra.mxu0 %v1171
      %3440 = vmatpush.msra.mxu0 %v1169
      %3441 = vmatpush.msra.mxu0 %v1167
      %3442 = vmatpush.msra.mxu0 %v1165
      %3443 = vmatpush.msra.mxu0 %v1163
      %3444 = vmatmul.f32.gmra.mxu0 %v2382
      %v3445 = vpop.f32.mrf.mxu0
      %v3446 = vadd.f32 %v3423, %v3445
      %3447 = vmatmul.f32.gmra.mxu0 %v2384
      %v3448 = vpop.f32.mrf.mxu0
      %v3449 = vadd.f32 %v3426, %v3448
      %3450 = vdwg.mxu0
      %s3451 = scalar_lea.vmem %s13, 48
      %v3452 = vld [vmem:[%s3451] sm:$0xff]
      %v3453 = vld [vmem:[%s3451 + $0x8] sm:$0xff]
      %v3455 = vsel %vm2555, %v3452, 0
      %v3458 = vsel %vm2555, %v3453, 0
      %3460 = vmatpush.msra.mxu0 0.0
      %3461 = vmatpush.msra.mxu0 0.0
      %3462 = vmatpush.msra.mxu0 0.0
      %3463 = vmatpush.msra.mxu0 0.0
      %3464 = vmatpush.msra.mxu0 0.0
      %3465 = vmatpush.msra.mxu0 0.0
      %3466 = vmatpush.msra.mxu0 0.0
      %3467 = vmatpush.msra.mxu0 0.0
      %3468 = vmatpush.msra.mxu0 0.0
      %3469 = vmatpush.msra.mxu0 0.0
      %3470 = vmatpush.msra.mxu0 0.0
      %3471 = vmatpush.msra.mxu0 0.0
      %3472 = vmatpush.msra.mxu0 0.0
      %3473 = vmatpush.msra.mxu0 0.0
      %3474 = vmatpush.msra.mxu0 %v3403
      %3475 = vmatpush.msra.mxu0 %v3400
      %3476 = vmatmul.f32.gmra.mxu0 %v3455
      %v3477 = vpop.f32.mrf.mxu0
      %v3478 = vadd.f32 0.0, %v3477
      %3479 = vmatmul.f32.gmra.mxu0 %v3458
      %v3480 = vpop.f32.mrf.mxu0
      %v3481 = vadd.f32 0.0, %v3480
      %3482 = vdwg.mxu0
      %3483 = vmatpush.msra.mxu0 0.0
      %3484 = vmatpush.msra.mxu0 0.0
      %3485 = vmatpush.msra.mxu0 0.0
      %3486 = vmatpush.msra.mxu0 0.0
      %3487 = vmatpush.msra.mxu0 0.0
      %3488 = vmatpush.msra.mxu0 0.0
      %3489 = vmatpush.msra.mxu0 0.0
      %3490 = vmatpush.msra.mxu0 0.0
      %3491 = vmatpush.msra.mxu0 0.0
      %3492 = vmatpush.msra.mxu0 0.0
      %3493 = vmatpush.msra.mxu0 0.0
      %3494 = vmatpush.msra.mxu0 0.0
      %3495 = vmatpush.msra.mxu0 0.0
      %3496 = vmatpush.msra.mxu0 0.0
      %3497 = vmatpush.msra.mxu0 %v3449
      %3498 = vmatpush.msra.mxu0 %v3446
      %3499 = vmatmul.f32.gmra.mxu0 %v3455
      %v3500 = vpop.f32.mrf.mxu0
      %v3501 = vadd.f32 0.0, %v3500
      %3502 = vmatmul.f32.gmra.mxu0 %v3458
      %v3503 = vpop.f32.mrf.mxu0
      %v3504 = vadd.f32 0.0, %v3503
      %3505 = vdwg.mxu0
      %v3506 = vadd.f32 %v3355, %v3478
      %v3507 = vadd.f32 %v3356, %v3501
      %v3508 = vadd.f32 %v3357, %v3481
      %v3509 = vadd.f32 %v3358, %v3504
      %3510 = vmatpush.msra.mxu0 %v1364
      %3511 = vmatpush.msra.mxu0 %v1362
      %3512 = vmatpush.msra.mxu0 %v1360
      %3513 = vmatpush.msra.mxu0 %v1358
      %3514 = vmatpush.msra.mxu0 %v1356
      %3515 = vmatpush.msra.mxu0 %v1354
      %3516 = vmatpush.msra.mxu0 %v1352
      %3517 = vmatpush.msra.mxu0 %v1350
      %3518 = vmatpush.msra.mxu0 %v1348
      %3519 = vmatpush.msra.mxu0 %v1346
      %3520 = vmatpush.msra.mxu0 %v1344
      %3521 = vmatpush.msra.mxu0 %v1342
      %3522 = vmatpush.msra.mxu0 %v1340
      %3523 = vmatpush.msra.mxu0 %v1338
      %3524 = vmatpush.msra.mxu0 %v1336
      %3525 = vmatpush.msra.mxu0 %v1334
      %3526 = vmatmul.f32.gmra.mxu0 %v2381
      %v3527 = vpop.f32.mrf.mxu0
      %v3528 = vadd.f32 0.0, %v3527
      %3529 = vmatmul.f32.gmra.mxu0 %v2383
      %v3530 = vpop.f32.mrf.mxu0
      %v3531 = vadd.f32 0.0, %v3530
      %3532 = vdwg.mxu0
      %3533 = vmatpush.msra.mxu0 %v1396
      %3534 = vmatpush.msra.mxu0 %v1394
      %3535 = vmatpush.msra.mxu0 %v1392
      %3536 = vmatpush.msra.mxu0 %v1390
      %3537 = vmatpush.msra.mxu0 %v1388
      %3538 = vmatpush.msra.mxu0 %v1386
      %3539 = vmatpush.msra.mxu0 %v1384
      %3540 = vmatpush.msra.mxu0 %v1382
      %3541 = vmatpush.msra.mxu0 %v1380
      %3542 = vmatpush.msra.mxu0 %v1378
      %3543 = vmatpush.msra.mxu0 %v1376
      %3544 = vmatpush.msra.mxu0 %v1374
      %3545 = vmatpush.msra.mxu0 %v1372
      %3546 = vmatpush.msra.mxu0 %v1370
      %3547 = vmatpush.msra.mxu0 %v1368
      %3548 = vmatpush.msra.mxu0 %v1366
      %3549 = vmatmul.f32.gmra.mxu0 %v2382
      %v3550 = vpop.f32.mrf.mxu0
      %v3551 = vadd.f32 %v3528, %v3550
      %3552 = vmatmul.f32.gmra.mxu0 %v2384
      %v3553 = vpop.f32.mrf.mxu0
      %v3554 = vadd.f32 %v3531, %v3553
      %3555 = vdwg.mxu0
      %3556 = vmatpush.msra.mxu0 %v1365
      %3557 = vmatpush.msra.mxu0 %v1363
      %3558 = vmatpush.msra.mxu0 %v1361
      %3559 = vmatpush.msra.mxu0 %v1359
      %3560 = vmatpush.msra.mxu0 %v1357
      %3561 = vmatpush.msra.mxu0 %v1355
      %3562 = vmatpush.msra.mxu0 %v1353
      %3563 = vmatpush.msra.mxu0 %v1351
      %3564 = vmatpush.msra.mxu0 %v1349
      %3565 = vmatpush.msra.mxu0 %v1347
      %3566 = vmatpush.msra.mxu0 %v1345
      %3567 = vmatpush.msra.mxu0 %v1343
      %3568 = vmatpush.msra.mxu0 %v1341
      %3569 = vmatpush.msra.mxu0 %v1339
      %3570 = vmatpush.msra.mxu0 %v1337
      %3571 = vmatpush.msra.mxu0 %v1335
      %3572 = vmatmul.f32.gmra.mxu0 %v2381
      %v3573 = vpop.f32.mrf.mxu0
      %v3574 = vadd.f32 0.0, %v3573
      %3575 = vmatmul.f32.gmra.mxu0 %v2383
      %v3576 = vpop.f32.mrf.mxu0
      %v3577 = vadd.f32 0.0, %v3576
      %3578 = vdwg.mxu0
      %3579 = vmatpush.msra.mxu0 %v1397
      %3580 = vmatpush.msra.mxu0 %v1395
      %3581 = vmatpush.msra.mxu0 %v1393
      %3582 = vmatpush.msra.mxu0 %v1391
      %3583 = vmatpush.msra.mxu0 %v1389
      %3584 = vmatpush.msra.mxu0 %v1387
      %3585 = vmatpush.msra.mxu0 %v1385
      %3586 = vmatpush.msra.mxu0 %v1383
      %3587 = vmatpush.msra.mxu0 %v1381
      %3588 = vmatpush.msra.mxu0 %v1379
      %3589 = vmatpush.msra.mxu0 %v1377
      %3590 = vmatpush.msra.mxu0 %v1375
      %3591 = vmatpush.msra.mxu0 %v1373
      %3592 = vmatpush.msra.mxu0 %v1371
      %3593 = vmatpush.msra.mxu0 %v1369
      %3594 = vmatpush.msra.mxu0 %v1367
      %3595 = vmatmul.f32.gmra.mxu0 %v2382
      %v3596 = vpop.f32.mrf.mxu0
      %v3597 = vadd.f32 %v3574, %v3596
      %3598 = vmatmul.f32.gmra.mxu0 %v2384
      %v3599 = vpop.f32.mrf.mxu0
      %v3600 = vadd.f32 %v3577, %v3599
      %3601 = vdwg.mxu0
      %s3602 = scalar_lea.vmem %s13, 64
      %v3603 = vld [vmem:[%s3602] sm:$0xff]
      %v3604 = vld [vmem:[%s3602 + $0x8] sm:$0xff]
      %v3606 = vsel %vm2555, %v3603, 0
      %v3609 = vsel %vm2555, %v3604, 0
      %3611 = vmatpush.msra.mxu0 0.0
      %3612 = vmatpush.msra.mxu0 0.0
      %3613 = vmatpush.msra.mxu0 0.0
      %3614 = vmatpush.msra.mxu0 0.0
      %3615 = vmatpush.msra.mxu0 0.0
      %3616 = vmatpush.msra.mxu0 0.0
      %3617 = vmatpush.msra.mxu0 0.0
      %3618 = vmatpush.msra.mxu0 0.0
      %3619 = vmatpush.msra.mxu0 0.0
      %3620 = vmatpush.msra.mxu0 0.0
      %3621 = vmatpush.msra.mxu0 0.0
      %3622 = vmatpush.msra.mxu0 0.0
      %3623 = vmatpush.msra.mxu0 0.0
      %3624 = vmatpush.msra.mxu0 0.0
      %3625 = vmatpush.msra.mxu0 %v3554
      %3626 = vmatpush.msra.mxu0 %v3551
      %3627 = vmatmul.f32.gmra.mxu0 %v3606
      %v3628 = vpop.f32.mrf.mxu0
      %v3629 = vadd.f32 0.0, %v3628
      %3630 = vmatmul.f32.gmra.mxu0 %v3609
      %v3631 = vpop.f32.mrf.mxu0
      %v3632 = vadd.f32 0.0, %v3631
      %3633 = vdwg.mxu0
      %3634 = vmatpush.msra.mxu0 0.0
      %3635 = vmatpush.msra.mxu0 0.0
      %3636 = vmatpush.msra.mxu0 0.0
      %3637 = vmatpush.msra.mxu0 0.0
      %3638 = vmatpush.msra.mxu0 0.0
      %3639 = vmatpush.msra.mxu0 0.0
      %3640 = vmatpush.msra.mxu0 0.0
      %3641 = vmatpush.msra.mxu0 0.0
      %3642 = vmatpush.msra.mxu0 0.0
      %3643 = vmatpush.msra.mxu0 0.0
      %3644 = vmatpush.msra.mxu0 0.0
      %3645 = vmatpush.msra.mxu0 0.0
      %3646 = vmatpush.msra.mxu0 0.0
      %3647 = vmatpush.msra.mxu0 0.0
      %3648 = vmatpush.msra.mxu0 %v3600
      %3649 = vmatpush.msra.mxu0 %v3597
      %3650 = vmatmul.f32.gmra.mxu0 %v3606
      %v3651 = vpop.f32.mrf.mxu0
      %v3652 = vadd.f32 0.0, %v3651
      %3653 = vmatmul.f32.gmra.mxu0 %v3609
      %v3654 = vpop.f32.mrf.mxu0
      %v3655 = vadd.f32 0.0, %v3654
      %3656 = vdwg.mxu0
      %v3657 = vadd.f32 %v3506, %v3629
      %v3658 = vadd.f32 %v3507, %v3652
      %v3659 = vadd.f32 %v3508, %v3632
      %v3660 = vadd.f32 %v3509, %v3655
      %3661 = vmatpush.msra.mxu0 %v1568
      %3662 = vmatpush.msra.mxu0 %v1566
      %3663 = vmatpush.msra.mxu0 %v1564
      %3664 = vmatpush.msra.mxu0 %v1562
      %3665 = vmatpush.msra.mxu0 %v1560
      %3666 = vmatpush.msra.mxu0 %v1558
      %3667 = vmatpush.msra.mxu0 %v1556
      %3668 = vmatpush.msra.mxu0 %v1554
      %3669 = vmatpush.msra.mxu0 %v1552
      %3670 = vmatpush.msra.mxu0 %v1550
      %3671 = vmatpush.msra.mxu0 %v1548
      %3672 = vmatpush.msra.mxu0 %v1546
      %3673 = vmatpush.msra.mxu0 %v1544
      %3674 = vmatpush.msra.mxu0 %v1542
      %3675 = vmatpush.msra.mxu0 %v1540
      %3676 = vmatpush.msra.mxu0 %v1538
      %3677 = vmatmul.f32.gmra.mxu0 %v2381
      %v3678 = vpop.f32.mrf.mxu0
      %v3679 = vadd.f32 0.0, %v3678
      %3680 = vmatmul.f32.gmra.mxu0 %v2383
      %v3681 = vpop.f32.mrf.mxu0
      %v3682 = vadd.f32 0.0, %v3681
      %3683 = vdwg.mxu0
      %3684 = vmatpush.msra.mxu0 %v1600
      %3685 = vmatpush.msra.mxu0 %v1598
      %3686 = vmatpush.msra.mxu0 %v1596
      %3687 = vmatpush.msra.mxu0 %v1594
      %3688 = vmatpush.msra.mxu0 %v1592
      %3689 = vmatpush.msra.mxu0 %v1590
      %3690 = vmatpush.msra.mxu0 %v1588
      %3691 = vmatpush.msra.mxu0 %v1586
      %3692 = vmatpush.msra.mxu0 %v1584
      %3693 = vmatpush.msra.mxu0 %v1582
      %3694 = vmatpush.msra.mxu0 %v1580
      %3695 = vmatpush.msra.mxu0 %v1578
      %3696 = vmatpush.msra.mxu0 %v1576
      %3697 = vmatpush.msra.mxu0 %v1574
      %3698 = vmatpush.msra.mxu0 %v1572
      %3699 = vmatpush.msra.mxu0 %v1570
      %3700 = vmatmul.f32.gmra.mxu0 %v2382
      %v3701 = vpop.f32.mrf.mxu0
      %v3702 = vadd.f32 %v3679, %v3701
      %3703 = vmatmul.f32.gmra.mxu0 %v2384
      %v3704 = vpop.f32.mrf.mxu0
      %v3705 = vadd.f32 %v3682, %v3704
      %3706 = vdwg.mxu0
      %3707 = vmatpush.msra.mxu0 %v1569
      %3708 = vmatpush.msra.mxu0 %v1567
      %3709 = vmatpush.msra.mxu0 %v1565
      %3710 = vmatpush.msra.mxu0 %v1563
      %3711 = vmatpush.msra.mxu0 %v1561
      %3712 = vmatpush.msra.mxu0 %v1559
      %3713 = vmatpush.msra.mxu0 %v1557
      %3714 = vmatpush.msra.mxu0 %v1555
      %3715 = vmatpush.msra.mxu0 %v1553
      %3716 = vmatpush.msra.mxu0 %v1551
      %3717 = vmatpush.msra.mxu0 %v1549
      %3718 = vmatpush.msra.mxu0 %v1547
      %3719 = vmatpush.msra.mxu0 %v1545
      %3720 = vmatpush.msra.mxu0 %v1543
      %3721 = vmatpush.msra.mxu0 %v1541
      %3722 = vmatpush.msra.mxu0 %v1539
      %3723 = vmatmul.f32.gmra.mxu0 %v2381
      %v3724 = vpop.f32.mrf.mxu0
      %v3725 = vadd.f32 0.0, %v3724
      %3726 = vmatmul.f32.gmra.mxu0 %v2383
      %v3727 = vpop.f32.mrf.mxu0
      %v3728 = vadd.f32 0.0, %v3727
      %3729 = vdwg.mxu0
      %3730 = vmatpush.msra.mxu0 %v1601
      %3731 = vmatpush.msra.mxu0 %v1599
      %3732 = vmatpush.msra.mxu0 %v1597
      %3733 = vmatpush.msra.mxu0 %v1595
      %3734 = vmatpush.msra.mxu0 %v1593
      %3735 = vmatpush.msra.mxu0 %v1591
      %3736 = vmatpush.msra.mxu0 %v1589
      %3737 = vmatpush.msra.mxu0 %v1587
      %3738 = vmatpush.msra.mxu0 %v1585
      %3739 = vmatpush.msra.mxu0 %v1583
      %3740 = vmatpush.msra.mxu0 %v1581
      %3741 = vmatpush.msra.mxu0 %v1579
      %3742 = vmatpush.msra.mxu0 %v1577
      %3743 = vmatpush.msra.mxu0 %v1575
      %3744 = vmatpush.msra.mxu0 %v1573
      %3745 = vmatpush.msra.mxu0 %v1571
      %3746 = vmatmul.f32.gmra.mxu0 %v2382
      %v3747 = vpop.f32.mrf.mxu0
      %v3748 = vadd.f32 %v3725, %v3747
      %3749 = vmatmul.f32.gmra.mxu0 %v2384
      %v3750 = vpop.f32.mrf.mxu0
      %v3751 = vadd.f32 %v3728, %v3750
      %3752 = vdwg.mxu0
      %s3753 = scalar_lea.vmem %s13, 80
      %v3754 = vld [vmem:[%s3753] sm:$0xff]
      %v3755 = vld [vmem:[%s3753 + $0x8] sm:$0xff]
      %v3757 = vsel %vm2555, %v3754, 0
      %v3760 = vsel %vm2555, %v3755, 0
      %3762 = vmatpush.msra.mxu0 0.0
      %3763 = vmatpush.msra.mxu0 0.0
      %3764 = vmatpush.msra.mxu0 0.0
      %3765 = vmatpush.msra.mxu0 0.0
      %3766 = vmatpush.msra.mxu0 0.0
      %3767 = vmatpush.msra.mxu0 0.0
      %3768 = vmatpush.msra.mxu0 0.0
      %3769 = vmatpush.msra.mxu0 0.0
      %3770 = vmatpush.msra.mxu0 0.0
      %3771 = vmatpush.msra.mxu0 0.0
      %3772 = vmatpush.msra.mxu0 0.0
      %3773 = vmatpush.msra.mxu0 0.0
      %3774 = vmatpush.msra.mxu0 0.0
      %3775 = vmatpush.msra.mxu0 0.0
      %3776 = vmatpush.msra.mxu0 %v3705
      %3777 = vmatpush.msra.mxu0 %v3702
      %3778 = vmatmul.f32.gmra.mxu0 %v3757
      %v3779 = vpop.f32.mrf.mxu0
      %v3780 = vadd.f32 0.0, %v3779
      %3781 = vmatmul.f32.gmra.mxu0 %v3760
      %v3782 = vpop.f32.mrf.mxu0
      %v3783 = vadd.f32 0.0, %v3782
      %3784 = vdwg.mxu0
      %3785 = vmatpush.msra.mxu0 0.0
      %3786 = vmatpush.msra.mxu0 0.0
      %3787 = vmatpush.msra.mxu0 0.0
      %3788 = vmatpush.msra.mxu0 0.0
      %3789 = vmatpush.msra.mxu0 0.0
      %3790 = vmatpush.msra.mxu0 0.0
      %3791 = vmatpush.msra.mxu0 0.0
      %3792 = vmatpush.msra.mxu0 0.0
      %3793 = vmatpush.msra.mxu0 0.0
      %3794 = vmatpush.msra.mxu0 0.0
      %3795 = vmatpush.msra.mxu0 0.0
      %3796 = vmatpush.msra.mxu0 0.0
      %3797 = vmatpush.msra.mxu0 0.0
      %3798 = vmatpush.msra.mxu0 0.0
      %3799 = vmatpush.msra.mxu0 %v3751
      %3800 = vmatpush.msra.mxu0 %v3748
      %3801 = vmatmul.f32.gmra.mxu0 %v3757
      %v3802 = vpop.f32.mrf.mxu0
      %v3803 = vadd.f32 0.0, %v3802
      %3804 = vmatmul.f32.gmra.mxu0 %v3760
      %v3805 = vpop.f32.mrf.mxu0
      %v3806 = vadd.f32 0.0, %v3805
      %3807 = vdwg.mxu0
      %v3808 = vadd.f32 %v3657, %v3780
      %v3809 = vadd.f32 %v3658, %v3803
      %v3810 = vadd.f32 %v3659, %v3783
      %v3811 = vadd.f32 %v3660, %v3806
      %3812 = vmatpush.msra.mxu0 %v1772
      %3813 = vmatpush.msra.mxu0 %v1770
      %3814 = vmatpush.msra.mxu0 %v1768
      %3815 = vmatpush.msra.mxu0 %v1766
      %3816 = vmatpush.msra.mxu0 %v1764
      %3817 = vmatpush.msra.mxu0 %v1762
      %3818 = vmatpush.msra.mxu0 %v1760
      %3819 = vmatpush.msra.mxu0 %v1758
      %3820 = vmatpush.msra.mxu0 %v1756
      %3821 = vmatpush.msra.mxu0 %v1754
      %3822 = vmatpush.msra.mxu0 %v1752
      %3823 = vmatpush.msra.mxu0 %v1750
      %3824 = vmatpush.msra.mxu0 %v1748
      %3825 = vmatpush.msra.mxu0 %v1746
      %3826 = vmatpush.msra.mxu0 %v1744
      %3827 = vmatpush.msra.mxu0 %v1742
      %3828 = vmatmul.f32.gmra.mxu0 %v2381
      %v3829 = vpop.f32.mrf.mxu0
      %v3830 = vadd.f32 0.0, %v3829
      %3831 = vmatmul.f32.gmra.mxu0 %v2383
      %v3832 = vpop.f32.mrf.mxu0
      %v3833 = vadd.f32 0.0, %v3832
      %3834 = vdwg.mxu0
      %3835 = vmatpush.msra.mxu0 %v1804
      %3836 = vmatpush.msra.mxu0 %v1802
      %3837 = vmatpush.msra.mxu0 %v1800
      %3838 = vmatpush.msra.mxu0 %v1798
      %3839 = vmatpush.msra.mxu0 %v1796
      %3840 = vmatpush.msra.mxu0 %v1794
      %3841 = vmatpush.msra.mxu0 %v1792
      %3842 = vmatpush.msra.mxu0 %v1790
      %3843 = vmatpush.msra.mxu0 %v1788
      %3844 = vmatpush.msra.mxu0 %v1786
      %3845 = vmatpush.msra.mxu0 %v1784
      %3846 = vmatpush.msra.mxu0 %v1782
      %3847 = vmatpush.msra.mxu0 %v1780
      %3848 = vmatpush.msra.mxu0 %v1778
      %3849 = vmatpush.msra.mxu0 %v1776
      %3850 = vmatpush.msra.mxu0 %v1774
      %3851 = vmatmul.f32.gmra.mxu0 %v2382
      %v3852 = vpop.f32.mrf.mxu0
      %v3853 = vadd.f32 %v3830, %v3852
      %3854 = vmatmul.f32.gmra.mxu0 %v2384
      %v3855 = vpop.f32.mrf.mxu0
      %v3856 = vadd.f32 %v3833, %v3855
      %3857 = vdwg.mxu0
      %3858 = vmatpush.msra.mxu0 %v1773
      %3859 = vmatpush.msra.mxu0 %v1771
      %3860 = vmatpush.msra.mxu0 %v1769
      %3861 = vmatpush.msra.mxu0 %v1767
      %3862 = vmatpush.msra.mxu0 %v1765
      %3863 = vmatpush.msra.mxu0 %v1763
      %3864 = vmatpush.msra.mxu0 %v1761
      %3865 = vmatpush.msra.mxu0 %v1759
      %3866 = vmatpush.msra.mxu0 %v1757
      %3867 = vmatpush.msra.mxu0 %v1755
      %3868 = vmatpush.msra.mxu0 %v1753
      %3869 = vmatpush.msra.mxu0 %v1751
      %3870 = vmatpush.msra.mxu0 %v1749
      %3871 = vmatpush.msra.mxu0 %v1747
      %3872 = vmatpush.msra.mxu0 %v1745
      %3873 = vmatpush.msra.mxu0 %v1743
      %3874 = vmatmul.f32.gmra.mxu0 %v2381
      %v3875 = vpop.f32.mrf.mxu0
      %v3876 = vadd.f32 0.0, %v3875
      %3877 = vmatmul.f32.gmra.mxu0 %v2383
      %v3878 = vpop.f32.mrf.mxu0
      %v3879 = vadd.f32 0.0, %v3878
      %3880 = vdwg.mxu0
      %3881 = vmatpush.msra.mxu0 %v1805
      %3882 = vmatpush.msra.mxu0 %v1803
      %3883 = vmatpush.msra.mxu0 %v1801
      %3884 = vmatpush.msra.mxu0 %v1799
      %3885 = vmatpush.msra.mxu0 %v1797
      %3886 = vmatpush.msra.mxu0 %v1795
      %3887 = vmatpush.msra.mxu0 %v1793
      %3888 = vmatpush.msra.mxu0 %v1791
      %3889 = vmatpush.msra.mxu0 %v1789
      %3890 = vmatpush.msra.mxu0 %v1787
      %3891 = vmatpush.msra.mxu0 %v1785
      %3892 = vmatpush.msra.mxu0 %v1783
      %3893 = vmatpush.msra.mxu0 %v1781
      %3894 = vmatpush.msra.mxu0 %v1779
      %3895 = vmatpush.msra.mxu0 %v1777
      %3896 = vmatpush.msra.mxu0 %v1775
      %3897 = vmatmul.f32.gmra.mxu0 %v2382
      %v3898 = vpop.f32.mrf.mxu0
      %v3899 = vadd.f32 %v3876, %v3898
      %3900 = vmatmul.f32.gmra.mxu0 %v2384
      %v3901 = vpop.f32.mrf.mxu0
      %v3902 = vadd.f32 %v3879, %v3901
      %3903 = vdwg.mxu0
      %s3904 = scalar_lea.vmem %s13, 96
      %v3905 = vld [vmem:[%s3904] sm:$0xff]
      %v3906 = vld [vmem:[%s3904 + $0x8] sm:$0xff]
      %v3908 = vsel %vm2555, %v3905, 0
      %v3911 = vsel %vm2555, %v3906, 0
      %3913 = vmatpush.msra.mxu0 0.0
      %3914 = vmatpush.msra.mxu0 0.0
      %3915 = vmatpush.msra.mxu0 0.0
      %3916 = vmatpush.msra.mxu0 0.0
      %3917 = vmatpush.msra.mxu0 0.0
      %3918 = vmatpush.msra.mxu0 0.0
      %3919 = vmatpush.msra.mxu0 0.0
      %3920 = vmatpush.msra.mxu0 0.0
      %3921 = vmatpush.msra.mxu0 0.0
      %3922 = vmatpush.msra.mxu0 0.0
      %3923 = vmatpush.msra.mxu0 0.0
      %3924 = vmatpush.msra.mxu0 0.0
      %3925 = vmatpush.msra.mxu0 0.0
      %3926 = vmatpush.msra.mxu0 0.0
      %3927 = vmatpush.msra.mxu0 %v3856
      %3928 = vmatpush.msra.mxu0 %v3853
      %3929 = vmatmul.f32.gmra.mxu0 %v3908
      %v3930 = vpop.f32.mrf.mxu0
      %v3931 = vadd.f32 0.0, %v3930
      %3932 = vmatmul.f32.gmra.mxu0 %v3911
      %v3933 = vpop.f32.mrf.mxu0
      %v3934 = vadd.f32 0.0, %v3933
      %3935 = vdwg.mxu0
      %3936 = vmatpush.msra.mxu0 0.0
      %3937 = vmatpush.msra.mxu0 0.0
      %3938 = vmatpush.msra.mxu0 0.0
      %3939 = vmatpush.msra.mxu0 0.0
      %3940 = vmatpush.msra.mxu0 0.0
      %3941 = vmatpush.msra.mxu0 0.0
      %3942 = vmatpush.msra.mxu0 0.0
      %3943 = vmatpush.msra.mxu0 0.0
      %3944 = vmatpush.msra.mxu0 0.0
      %3945 = vmatpush.msra.mxu0 0.0
      %3946 = vmatpush.msra.mxu0 0.0
      %3947 = vmatpush.msra.mxu0 0.0
      %3948 = vmatpush.msra.mxu0 0.0
      %3949 = vmatpush.msra.mxu0 0.0
      %3950 = vmatpush.msra.mxu0 %v3902
      %3951 = vmatpush.msra.mxu0 %v3899
      %3952 = vmatmul.f32.gmra.mxu0 %v3908
      %v3953 = vpop.f32.mrf.mxu0
      %v3954 = vadd.f32 0.0, %v3953
      %3955 = vmatmul.f32.gmra.mxu0 %v3911
      %v3956 = vpop.f32.mrf.mxu0
      %v3957 = vadd.f32 0.0, %v3956
      %3958 = vdwg.mxu0
      %v3959 = vadd.f32 %v3808, %v3931
      %v3960 = vadd.f32 %v3809, %v3954
      %v3961 = vadd.f32 %v3810, %v3934
      %v3962 = vadd.f32 %v3811, %v3957
      %3963 = vmatpush.msra.mxu0 %v1976
      %3964 = vmatpush.msra.mxu0 %v1974
      %3965 = vmatpush.msra.mxu0 %v1972
      %3966 = vmatpush.msra.mxu0 %v1970
      %3967 = vmatpush.msra.mxu0 %v1968
      %3968 = vmatpush.msra.mxu0 %v1966
      %3969 = vmatpush.msra.mxu0 %v1964
      %3970 = vmatpush.msra.mxu0 %v1962
      %3971 = vmatpush.msra.mxu0 %v1960
      %3972 = vmatpush.msra.mxu0 %v1958
      %3973 = vmatpush.msra.mxu0 %v1956
      %3974 = vmatpush.msra.mxu0 %v1954
      %3975 = vmatpush.msra.mxu0 %v1952
      %3976 = vmatpush.msra.mxu0 %v1950
      %3977 = vmatpush.msra.mxu0 %v1948
      %3978 = vmatpush.msra.mxu0 %v1946
      %3979 = vmatmul.f32.gmra.mxu0 %v2381
      %v3980 = vpop.f32.mrf.mxu0
      %v3981 = vadd.f32 0.0, %v3980
      %3982 = vmatmul.f32.gmra.mxu0 %v2383
      %v3983 = vpop.f32.mrf.mxu0
      %v3984 = vadd.f32 0.0, %v3983
      %3985 = vdwg.mxu0
      %3986 = vmatpush.msra.mxu0 %v2008
      %3987 = vmatpush.msra.mxu0 %v2006
      %3988 = vmatpush.msra.mxu0 %v2004
      %3989 = vmatpush.msra.mxu0 %v2002
      %3990 = vmatpush.msra.mxu0 %v2000
      %3991 = vmatpush.msra.mxu0 %v1998
      %3992 = vmatpush.msra.mxu0 %v1996
      %3993 = vmatpush.msra.mxu0 %v1994
      %3994 = vmatpush.msra.mxu0 %v1992
      %3995 = vmatpush.msra.mxu0 %v1990
      %3996 = vmatpush.msra.mxu0 %v1988
      %3997 = vmatpush.msra.mxu0 %v1986
      %3998 = vmatpush.msra.mxu0 %v1984
      %3999 = vmatpush.msra.mxu0 %v1982
      %4000 = vmatpush.msra.mxu0 %v1980
      %4001 = vmatpush.msra.mxu0 %v1978
      %4002 = vmatmul.f32.gmra.mxu0 %v2382
      %v4003 = vpop.f32.mrf.mxu0
      %v4004 = vadd.f32 %v3981, %v4003
      %4005 = vmatmul.f32.gmra.mxu0 %v2384
      %v4006 = vpop.f32.mrf.mxu0
      %v4007 = vadd.f32 %v3984, %v4006
      %4008 = vdwg.mxu0
      %4009 = vmatpush.msra.mxu0 %v1977
      %4010 = vmatpush.msra.mxu0 %v1975
      %4011 = vmatpush.msra.mxu0 %v1973
      %4012 = vmatpush.msra.mxu0 %v1971
      %4013 = vmatpush.msra.mxu0 %v1969
      %4014 = vmatpush.msra.mxu0 %v1967
      %4015 = vmatpush.msra.mxu0 %v1965
      %4016 = vmatpush.msra.mxu0 %v1963
      %4017 = vmatpush.msra.mxu0 %v1961
      %4018 = vmatpush.msra.mxu0 %v1959
      %4019 = vmatpush.msra.mxu0 %v1957
      %4020 = vmatpush.msra.mxu0 %v1955
      %4021 = vmatpush.msra.mxu0 %v1953
      %4022 = vmatpush.msra.mxu0 %v1951
      %4023 = vmatpush.msra.mxu0 %v1949
      %4024 = vmatpush.msra.mxu0 %v1947
      %4025 = vmatmul.f32.gmra.mxu0 %v2381
      %v4026 = vpop.f32.mrf.mxu0
      %v4027 = vadd.f32 0.0, %v4026
      %4028 = vmatmul.f32.gmra.mxu0 %v2383
      %v4029 = vpop.f32.mrf.mxu0
      %v4030 = vadd.f32 0.0, %v4029
      %4031 = vdwg.mxu0
      %4032 = vmatpush.msra.mxu0 %v2009
      %4033 = vmatpush.msra.mxu0 %v2007
      %4034 = vmatpush.msra.mxu0 %v2005
      %4035 = vmatpush.msra.mxu0 %v2003
      %4036 = vmatpush.msra.mxu0 %v2001
      %4037 = vmatpush.msra.mxu0 %v1999
      %4038 = vmatpush.msra.mxu0 %v1997
      %4039 = vmatpush.msra.mxu0 %v1995
      %4040 = vmatpush.msra.mxu0 %v1993
      %4041 = vmatpush.msra.mxu0 %v1991
      %4042 = vmatpush.msra.mxu0 %v1989
      %4043 = vmatpush.msra.mxu0 %v1987
      %4044 = vmatpush.msra.mxu0 %v1985
      %4045 = vmatpush.msra.mxu0 %v1983
      %4046 = vmatpush.msra.mxu0 %v1981
      %4047 = vmatpush.msra.mxu0 %v1979
      %4048 = vmatmul.f32.gmra.mxu0 %v2382
      %v4049 = vpop.f32.mrf.mxu0
      %v4050 = vadd.f32 %v4027, %v4049
      %4051 = vmatmul.f32.gmra.mxu0 %v2384
      %v4052 = vpop.f32.mrf.mxu0
      %v4053 = vadd.f32 %v4030, %v4052
      %4054 = vdwg.mxu0
      %s4055 = scalar_lea.vmem %s13, 112
      %v4056 = vld [vmem:[%s4055] sm:$0xff]
      %v4057 = vld [vmem:[%s4055 + $0x8] sm:$0xff]
      %v4059 = vsel %vm2555, %v4056, 0
      %v4062 = vsel %vm2555, %v4057, 0
      %4064 = vmatpush.msra.mxu0 0.0
      %4065 = vmatpush.msra.mxu0 0.0
      %4066 = vmatpush.msra.mxu0 0.0
      %4067 = vmatpush.msra.mxu0 0.0
      %4068 = vmatpush.msra.mxu0 0.0
      %4069 = vmatpush.msra.mxu0 0.0
      %4070 = vmatpush.msra.mxu0 0.0
      %4071 = vmatpush.msra.mxu0 0.0
      %4072 = vmatpush.msra.mxu0 0.0
      %4073 = vmatpush.msra.mxu0 0.0
      %4074 = vmatpush.msra.mxu0 0.0
      %4075 = vmatpush.msra.mxu0 0.0
      %4076 = vmatpush.msra.mxu0 0.0
      %4077 = vmatpush.msra.mxu0 0.0
      %4078 = vmatpush.msra.mxu0 %v4007
      %4079 = vmatpush.msra.mxu0 %v4004
      %4080 = vmatmul.f32.gmra.mxu0 %v4059
      %v4081 = vpop.f32.mrf.mxu0
      %v4082 = vadd.f32 0.0, %v4081
      %4083 = vmatmul.f32.gmra.mxu0 %v4062
      %v4084 = vpop.f32.mrf.mxu0
      %v4085 = vadd.f32 0.0, %v4084
      %4086 = vdwg.mxu0
      %4087 = vmatpush.msra.mxu0 0.0
      %4088 = vmatpush.msra.mxu0 0.0
      %4089 = vmatpush.msra.mxu0 0.0
      %4090 = vmatpush.msra.mxu0 0.0
      %4091 = vmatpush.msra.mxu0 0.0
      %4092 = vmatpush.msra.mxu0 0.0
      %4093 = vmatpush.msra.mxu0 0.0
      %4094 = vmatpush.msra.mxu0 0.0
      %4095 = vmatpush.msra.mxu0 0.0
      %4096 = vmatpush.msra.mxu0 0.0
      %4097 = vmatpush.msra.mxu0 0.0
      %4098 = vmatpush.msra.mxu0 0.0
      %4099 = vmatpush.msra.mxu0 0.0
      %4100 = vmatpush.msra.mxu0 0.0
      %4101 = vmatpush.msra.mxu0 %v4053
      %4102 = vmatpush.msra.mxu0 %v4050
      %4103 = vmatmul.f32.gmra.mxu0 %v4059
      %v4104 = vpop.f32.mrf.mxu0
      %v4105 = vadd.f32 0.0, %v4104
      %4106 = vmatmul.f32.gmra.mxu0 %v4062
      %v4107 = vpop.f32.mrf.mxu0
      %v4108 = vadd.f32 0.0, %v4107
      %4109 = vdwg.mxu0
      %v4110 = vadd.f32 %v3959, %v4082
      %v4111 = vadd.f32 %v3960, %v4105
      %v4112 = vadd.f32 %v3961, %v4085
      %v4113 = vadd.f32 %v3962, %v4108
      %4114 = vmatpush.msra.mxu0 %v2180
      %4115 = vmatpush.msra.mxu0 %v2178
      %4116 = vmatpush.msra.mxu0 %v2176
      %4117 = vmatpush.msra.mxu0 %v2174
      %4118 = vmatpush.msra.mxu0 %v2172
      %4119 = vmatpush.msra.mxu0 %v2170
      %4120 = vmatpush.msra.mxu0 %v2168
      %4121 = vmatpush.msra.mxu0 %v2166
      %4122 = vmatpush.msra.mxu0 %v2164
      %4123 = vmatpush.msra.mxu0 %v2162
      %4124 = vmatpush.msra.mxu0 %v2160
      %4125 = vmatpush.msra.mxu0 %v2158
      %4126 = vmatpush.msra.mxu0 %v2156
      %4127 = vmatpush.msra.mxu0 %v2154
      %4128 = vmatpush.msra.mxu0 %v2152
      %4129 = vmatpush.msra.mxu0 %v2150
      %4130 = vmatmul.f32.gmra.mxu0 %v2381
      %v4131 = vpop.f32.mrf.mxu0
      %v4132 = vadd.f32 0.0, %v4131
      %4133 = vmatmul.f32.gmra.mxu0 %v2383
      %v4134 = vpop.f32.mrf.mxu0
      %v4135 = vadd.f32 0.0, %v4134
      %4136 = vdwg.mxu0
      %4137 = vmatpush.msra.mxu0 %v2212
      %4138 = vmatpush.msra.mxu0 %v2210
      %4139 = vmatpush.msra.mxu0 %v2208
      %4140 = vmatpush.msra.mxu0 %v2206
      %4141 = vmatpush.msra.mxu0 %v2204
      %4142 = vmatpush.msra.mxu0 %v2202
      %4143 = vmatpush.msra.mxu0 %v2200
      %4144 = vmatpush.msra.mxu0 %v2198
      %4145 = vmatpush.msra.mxu0 %v2196
      %4146 = vmatpush.msra.mxu0 %v2194
      %4147 = vmatpush.msra.mxu0 %v2192
      %4148 = vmatpush.msra.mxu0 %v2190
      %4149 = vmatpush.msra.mxu0 %v2188
      %4150 = vmatpush.msra.mxu0 %v2186
      %4151 = vmatpush.msra.mxu0 %v2184
      %4152 = vmatpush.msra.mxu0 %v2182
      %4153 = vmatmul.f32.gmra.mxu0 %v2382
      %v4154 = vpop.f32.mrf.mxu0
      %v4155 = vadd.f32 %v4132, %v4154
      %4156 = vmatmul.f32.gmra.mxu0 %v2384
      %v4157 = vpop.f32.mrf.mxu0
      %v4158 = vadd.f32 %v4135, %v4157
      %4159 = vdwg.mxu0
      %4160 = vmatpush.msra.mxu0 %v2181
      %4161 = vmatpush.msra.mxu0 %v2179
      %4162 = vmatpush.msra.mxu0 %v2177
      %4163 = vmatpush.msra.mxu0 %v2175
      %4164 = vmatpush.msra.mxu0 %v2173
      %4165 = vmatpush.msra.mxu0 %v2171
      %4166 = vmatpush.msra.mxu0 %v2169
      %4167 = vmatpush.msra.mxu0 %v2167
      %4168 = vmatpush.msra.mxu0 %v2165
      %4169 = vmatpush.msra.mxu0 %v2163
      %4170 = vmatpush.msra.mxu0 %v2161
      %4171 = vmatpush.msra.mxu0 %v2159
      %4172 = vmatpush.msra.mxu0 %v2157
      %4173 = vmatpush.msra.mxu0 %v2155
      %4174 = vmatpush.msra.mxu0 %v2153
      %4175 = vmatpush.msra.mxu0 %v2151
      %4176 = vmatmul.f32.gmra.mxu0 %v2381
      %v4177 = vpop.f32.mrf.mxu0
      %v4178 = vadd.f32 0.0, %v4177
      %4179 = vmatmul.f32.gmra.mxu0 %v2383
      %v4180 = vpop.f32.mrf.mxu0
      %v4181 = vadd.f32 0.0, %v4180
      %4182 = vdwg.mxu0
      %4183 = vmatpush.msra.mxu0 %v2213
      %4184 = vmatpush.msra.mxu0 %v2211
      %4185 = vmatpush.msra.mxu0 %v2209
      %4186 = vmatpush.msra.mxu0 %v2207
      %4187 = vmatpush.msra.mxu0 %v2205
      %4188 = vmatpush.msra.mxu0 %v2203
      %4189 = vmatpush.msra.mxu0 %v2201
      %4190 = vmatpush.msra.mxu0 %v2199
      %4191 = vmatpush.msra.mxu0 %v2197
      %4192 = vmatpush.msra.mxu0 %v2195
      %4193 = vmatpush.msra.mxu0 %v2193
      %4194 = vmatpush.msra.mxu0 %v2191
      %4195 = vmatpush.msra.mxu0 %v2189
      %4196 = vmatpush.msra.mxu0 %v2187
      %4197 = vmatpush.msra.mxu0 %v2185
      %4198 = vmatpush.msra.mxu0 %v2183
      %4199 = vmatmul.f32.gmra.mxu0 %v2382
      %v4200 = vpop.f32.mrf.mxu0
      %v4201 = vadd.f32 %v4178, %v4200
      %4202 = vmatmul.f32.gmra.mxu0 %v2384
      %v4203 = vpop.f32.mrf.mxu0
      %v4204 = vadd.f32 %v4181, %v4203
      %4205 = vdwg.mxu0
      %s4206 = scalar_lea.vmem %s13, 128
      %v4207 = vld [vmem:[%s4206] sm:$0xff]
      %v4208 = vld [vmem:[%s4206 + $0x8] sm:$0xff]
      %v4210 = vsel %vm2555, %v4207, 0
      %v4213 = vsel %vm2555, %v4208, 0
      %4215 = vmatpush.msra.mxu0 0.0
      %4216 = vmatpush.msra.mxu0 0.0
      %4217 = vmatpush.msra.mxu0 0.0
      %4218 = vmatpush.msra.mxu0 0.0
      %4219 = vmatpush.msra.mxu0 0.0
      %4220 = vmatpush.msra.mxu0 0.0
      %4221 = vmatpush.msra.mxu0 0.0
      %4222 = vmatpush.msra.mxu0 0.0
      %4223 = vmatpush.msra.mxu0 0.0
      %4224 = vmatpush.msra.mxu0 0.0
      %4225 = vmatpush.msra.mxu0 0.0
      %4226 = vmatpush.msra.mxu0 0.0
      %4227 = vmatpush.msra.mxu0 0.0
      %4228 = vmatpush.msra.mxu0 0.0
      %4229 = vmatpush.msra.mxu0 %v4158
      %4230 = vmatpush.msra.mxu0 %v4155
      %4231 = vmatmul.f32.gmra.mxu0 %v4210
      %v4232 = vpop.f32.mrf.mxu0
      %v4233 = vadd.f32 0.0, %v4232
      %4234 = vmatmul.f32.gmra.mxu0 %v4213
      %v4235 = vpop.f32.mrf.mxu0
      %v4236 = vadd.f32 0.0, %v4235
      %4237 = vdwg.mxu0
      %4238 = vmatpush.msra.mxu0 0.0
      %4239 = vmatpush.msra.mxu0 0.0
      %4240 = vmatpush.msra.mxu0 0.0
      %4241 = vmatpush.msra.mxu0 0.0
      %4242 = vmatpush.msra.mxu0 0.0
      %4243 = vmatpush.msra.mxu0 0.0
      %4244 = vmatpush.msra.mxu0 0.0
      %4245 = vmatpush.msra.mxu0 0.0
      %4246 = vmatpush.msra.mxu0 0.0
      %4247 = vmatpush.msra.mxu0 0.0
      %4248 = vmatpush.msra.mxu0 0.0
      %4249 = vmatpush.msra.mxu0 0.0
      %4250 = vmatpush.msra.mxu0 0.0
      %4251 = vmatpush.msra.mxu0 0.0
      %4252 = vmatpush.msra.mxu0 %v4204
      %4253 = vmatpush.msra.mxu0 %v4201
      %4254 = vmatmul.f32.gmra.mxu0 %v4210
      %v4255 = vpop.f32.mrf.mxu0
      %v4256 = vadd.f32 0.0, %v4255
      %4257 = vmatmul.f32.gmra.mxu0 %v4213
      %v4258 = vpop.f32.mrf.mxu0
      %v4259 = vadd.f32 0.0, %v4258
      %4260 = vdwg.mxu0
      %v4261 = vadd.f32 %v4110, %v4233
      %v4262 = vadd.f32 %v4111, %v4256
      %v4263 = vadd.f32 %v4112, %v4236
      %v4264 = vadd.f32 %v4113, %v4259
      %v4265 = vadd.f32 %v2889, %v2890
      %4266 = vadd.xlane.f32.xlu0 %v4265
      %v4267 = vpop.xlane.xlu0 %4266
      %v4268 = vadd.f32 %v2891, %v2892
      %4269 = vadd.xlane.f32.xlu0 %v4268
      %v4270 = vpop.xlane.xlu0 %4269
      %v4271 = vmul.f32 %v4267, %v2816
      %v4272 = vmul.f32 %v4270, %v2816
      %v4273 = vadd.f32 %v4261, %v4262
      %4274 = vadd.xlane.f32.xlu0 %v4273
      %v4275 = vpop.xlane.xlu0 %4274
      %v4276 = vadd.f32 %v4263, %v4264
      %4277 = vadd.xlane.f32.xlu0 %v4276
      %v4278 = vpop.xlane.xlu0 %4277
      %v4279 = vmul.f32 %v4275, %v2816
      %v4280 = vmul.f32 %v4278, %v2816
      %v4281 = vmax.f32 %v4271, %v4272
      %v4282 = vrot.slane %v4281, 4
      %v4283 = vmax.f32 %v4281, %v4282
      %v4284 = vrot.slane %v4283, 2
      %v4285 = vmax.f32 %v4283, %v4284
      %v4286 = vrot.slane %v4285, 1
      %v4287 = vmax.f32 %v4285, %v4286
      %v4288 = vsub.f32 %v4271, %v4287
      %v4289 = vsub.f32 %v4272, %v4287
      %v4290 = vmul.f32 %v4288, 1.442695
      %v4291 = vpow.pop %v4290
      %v4292 = vmul.f32 %v4289, 1.442695
      %v4293 = vpow.pop %v4292
      %v4294 = vmax.f32 %v4279, %v4280
      %v4295 = vrot.slane %v4294, 4
      %v4296 = vmax.f32 %v4294, %v4295
      %v4297 = vrot.slane %v4296, 2
      %v4298 = vmax.f32 %v4296, %v4297
      %v4299 = vrot.slane %v4298, 1
      %v4300 = vmax.f32 %v4298, %v4299
      %v4301 = vsub.f32 %v4279, %v4300
      %v4302 = vsub.f32 %v4280, %v4300
      %v4303 = vmul.f32 %v4301, 1.442695
      %v4304 = vpow.pop %v4303
      %v4305 = vmul.f32 %v4302, 1.442695
      %v4306 = vpow.pop %v4305
      %v4307 = vld [vmem:[%s15] sm:$0xff]
      %v4308 = vld [vmem:[%s15 + $0x8] sm:$0xff]
      %v4310 = vsel %vm2555, %v4307, 0
      %v4313 = vsel %vm2555, %v4308, 0
      %4315 = vmatpush.msra.mxu0 0.0
      %4316 = vmatpush.msra.mxu0 0.0
      %4317 = vmatpush.msra.mxu0 0.0
      %4318 = vmatpush.msra.mxu0 0.0
      %4319 = vmatpush.msra.mxu0 0.0
      %4320 = vmatpush.msra.mxu0 0.0
      %4321 = vmatpush.msra.mxu0 0.0
      %4322 = vmatpush.msra.mxu0 0.0
      %4323 = vmatpush.msra.mxu0 0.0
      %4324 = vmatpush.msra.mxu0 0.0
      %4325 = vmatpush.msra.mxu0 0.0
      %4326 = vmatpush.msra.mxu0 0.0
      %4327 = vmatpush.msra.mxu0 0.0
      %4328 = vmatpush.msra.mxu0 0.0
      %4329 = vmatpush.msra.mxu0 %v4293
      %4330 = vmatpush.msra.mxu0 %v4291
      %4331 = vmatmul.f32.gmra.mxu0 %v4310
      %v4332 = vpop.f32.mrf.mxu0
      %v4333 = vadd.f32 0.0, %v4332
      %4334 = vmatmul.f32.gmra.mxu0 %v4313
      %v4335 = vpop.f32.mrf.mxu0
      %v4336 = vadd.f32 0.0, %v4335
      %4337 = vdwg.mxu0
      %v4338 = vrcp.pop %v4333
      %v4339 = vmul.f32 %v4333, %v4338
      %v4340 = vsub.f32 1.0, %v4339
      %v4341 = vmul.f32 %v4338, %v4340
      %v4342 = vadd.f32 %v4338, %v4341
      %vm4343 = vweird.f32 %v4333
      %vm4344 = vweird.f32 %v4338
      %vm4345 = vmor %vm4343, %vm4344
      %v4346 = vsel %vm4345, %v4338, %v4342
      %v4347 = vand.u32 2147483647, %v4333
      %vm4348 = vcmp.eq.f32.partialorder %v4347, 8.507059e+37
      %v4349 = vand.u32 %v4333, 2147483648
      %v4350 = vor.u32 1.1754944e-38, %v4349
      %v4351 = vsel %vm4348, %v4350, %v4346
      %v4352 = vmul.f32 %v4291, %v4351
      %v4353 = vrcp.pop %v4336
      %v4354 = vmul.f32 %v4336, %v4353
      %v4355 = vsub.f32 1.0, %v4354
      %v4356 = vmul.f32 %v4353, %v4355
      %v4357 = vadd.f32 %v4353, %v4356
      %vm4358 = vweird.f32 %v4336
      %vm4359 = vweird.f32 %v4353
      %vm4360 = vmor %vm4358, %vm4359
      %v4361 = vsel %vm4360, %v4353, %v4357
      %v4362 = vand.u32 2147483647, %v4336
      %vm4363 = vcmp.eq.f32.partialorder %v4362, 8.507059e+37
      %v4364 = vand.u32 %v4336, 2147483648
      %v4365 = vor.u32 1.1754944e-38, %v4364
      %v4366 = vsel %vm4363, %v4365, %v4361
      %v4367 = vmul.f32 %v4293, %v4366
      %4368 = vmatpush.msra.mxu0 0.0
      %4369 = vmatpush.msra.mxu0 0.0
      %4370 = vmatpush.msra.mxu0 0.0
      %4371 = vmatpush.msra.mxu0 0.0
      %4372 = vmatpush.msra.mxu0 0.0
      %4373 = vmatpush.msra.mxu0 0.0
      %4374 = vmatpush.msra.mxu0 0.0
      %4375 = vmatpush.msra.mxu0 0.0
      %4376 = vmatpush.msra.mxu0 0.0
      %4377 = vmatpush.msra.mxu0 0.0
      %4378 = vmatpush.msra.mxu0 0.0
      %4379 = vmatpush.msra.mxu0 0.0
      %4380 = vmatpush.msra.mxu0 0.0
      %4381 = vmatpush.msra.mxu0 0.0
      %4382 = vmatpush.msra.mxu0 %v4306
      %4383 = vmatpush.msra.mxu0 %v4304
      %4384 = vmatmul.f32.gmra.mxu0 %v4310
      %v4385 = vpop.f32.mrf.mxu0
      %v4386 = vadd.f32 0.0, %v4385
      %4387 = vmatmul.f32.gmra.mxu0 %v4313
      %v4388 = vpop.f32.mrf.mxu0
      %v4389 = vadd.f32 0.0, %v4388
      %4390 = vdwg.mxu0
      %v4391 = vrcp.pop %v4386
      %v4392 = vmul.f32 %v4386, %v4391
      %v4393 = vsub.f32 1.0, %v4392
      %v4394 = vmul.f32 %v4391, %v4393
      %v4395 = vadd.f32 %v4391, %v4394
      %vm4396 = vweird.f32 %v4386
      %vm4397 = vweird.f32 %v4391
      %vm4398 = vmor %vm4396, %vm4397
      %v4399 = vsel %vm4398, %v4391, %v4395
      %v4400 = vand.u32 2147483647, %v4386
      %vm4401 = vcmp.eq.f32.partialorder %v4400, 8.507059e+37
      %v4402 = vand.u32 %v4386, 2147483648
      %v4403 = vor.u32 1.1754944e-38, %v4402
      %v4404 = vsel %vm4401, %v4403, %v4399
      %v4405 = vmul.f32 %v4304, %v4404
      %v4406 = vrcp.pop %v4389
      %v4407 = vmul.f32 %v4389, %v4406
      %v4408 = vsub.f32 1.0, %v4407
      %v4409 = vmul.f32 %v4406, %v4408
      %v4410 = vadd.f32 %v4406, %v4409
      %vm4411 = vweird.f32 %v4389
      %vm4412 = vweird.f32 %v4406
      %vm4413 = vmor %vm4411, %vm4412
      %v4414 = vsel %vm4413, %v4406, %v4410
      %v4415 = vand.u32 2147483647, %v4389
      %vm4416 = vcmp.eq.f32.partialorder %v4415, 8.507059e+37
      %v4417 = vand.u32 %v4389, 2147483648
      %v4418 = vor.u32 1.1754944e-38, %v4417
      %v4419 = vsel %vm4416, %v4418, %v4414
      %v4420 = vmul.f32 %v4306, %v4419
      %4422 = vset.pattern.permute.xlu0 0
      %4423 = vperm.xlu0 %4422, %v4352
      %v4424 = vpop.permute.xlu0 %4423
      %4427 = vset.pattern.permute.xlu0 0
      %4428 = vperm.xlu0 %4427, %v4367
      %v4429 = vpop.permute.xlu0 %4428
      %v4431 = vmul.f32 %v4424, %v4261
      %v4432 = vmul.f32 %v4424, %v4262
      %v4433 = vmul.f32 %v4429, %v4263
      %v4434 = vmul.f32 %v4429, %v4264
      %4436 = vset.pattern.permute.xlu0 0
      %4437 = vperm.xlu0 %4436, %v4405
      %v4438 = vpop.permute.xlu0 %4437
      %4441 = vset.pattern.permute.xlu0 0
      %4442 = vperm.xlu0 %4441, %v4420
      %v4443 = vpop.permute.xlu0 %4442
      %v4445 = vmul.f32 %v4438, %v2889
      %v4446 = vmul.f32 %v4438, %v2890
      %v4447 = vmul.f32 %v4443, %v2891
      %v4448 = vmul.f32 %v4443, %v2892
      %v4449 = vadd.f32 %v4431, %v4445
      %v4450 = vadd.f32 %v4432, %v4446
      %v4451 = vadd.f32 %v4433, %v4447
      %v4452 = vadd.f32 %v4434, %v4448
      %4453 = vmatpush.msra.mxu0 0.0
      %4454 = vmatpush.msra.mxu0 0.0
      %4455 = vmatpush.msra.mxu0 0.0
      %4456 = vmatpush.msra.mxu0 0.0
      %4457 = vmatpush.msra.mxu0 0.0
      %4458 = vmatpush.msra.mxu0 0.0
      %4459 = vmatpush.msra.mxu0 0.0
      %4460 = vmatpush.msra.mxu0 0.0
      %4461 = vmatpush.msra.mxu0 0.0
      %4462 = vmatpush.msra.mxu0 0.0
      %4463 = vmatpush.msra.mxu0 0.0
      %4464 = vmatpush.msra.mxu0 0.0
      %4465 = vmatpush.msra.mxu0 0.0
      %4466 = vmatpush.msra.mxu0 0.0
      %4467 = vmatpush.msra.mxu0 %v4451
      %4468 = vmatpush.msra.mxu0 %v4449
      %4469 = vmatmul.f32.gmra.mxu0 %v4310
      %v4470 = vpop.f32.mrf.mxu0
      %v4471 = vadd.f32 0.0, %v4470
      %4472 = vmatmul.f32.gmra.mxu0 %v4313
      %v4473 = vpop.f32.mrf.mxu0
      %v4474 = vadd.f32 0.0, %v4473
      %4475 = vdwg.mxu0
      %4476 = vmatpush.msra.mxu0 0.0
      %4477 = vmatpush.msra.mxu0 0.0
      %4478 = vmatpush.msra.mxu0 0.0
      %4479 = vmatpush.msra.mxu0 0.0
      %4480 = vmatpush.msra.mxu0 0.0
      %4481 = vmatpush.msra.mxu0 0.0
      %4482 = vmatpush.msra.mxu0 0.0
      %4483 = vmatpush.msra.mxu0 0.0
      %4484 = vmatpush.msra.mxu0 0.0
      %4485 = vmatpush.msra.mxu0 0.0
      %4486 = vmatpush.msra.mxu0 0.0
      %4487 = vmatpush.msra.mxu0 0.0
      %4488 = vmatpush.msra.mxu0 0.0
      %4489 = vmatpush.msra.mxu0 0.0
      %4490 = vmatpush.msra.mxu0 %v4452
      %4491 = vmatpush.msra.mxu0 %v4450
      %4492 = vmatmul.f32.gmra.mxu0 %v4310
      %v4493 = vpop.f32.mrf.mxu0
      %v4494 = vadd.f32 0.0, %v4493
      %4495 = vmatmul.f32.gmra.mxu0 %v4313
      %v4496 = vpop.f32.mrf.mxu0
      %v4497 = vadd.f32 0.0, %v4496
      %4498 = vdwg.mxu0
      %v4499 = vxor.u32 %v4471, 2147483648
      %v4500 = vxor.u32 %v4494, 2147483648
      %v4501 = vxor.u32 %v4474, 2147483648
      %v4502 = vxor.u32 %v4497, 2147483648
      %v4503 = vmul.f32 %v4499, 1.442695
      %v4504 = vpow.pop %v4503
      %v4505 = vmul.f32 %v4500, 1.442695
      %v4506 = vpow.pop %v4505
      %v4507 = vmul.f32 %v4501, 1.442695
      %v4508 = vpow.pop %v4507
      %v4509 = vmul.f32 %v4502, 1.442695
      %v4510 = vpow.pop %v4509
      %v4511 = vadd.f32 %v4504, 1.0
      %v4512 = vadd.f32 %v4506, 1.0
      %v4513 = vadd.f32 %v4508, 1.0
      %v4514 = vadd.f32 %v4510, 1.0
      %v4515 = vrcp.pop %v4511
      %v4516 = vmul.f32 %v4511, %v4515
      %v4517 = vsub.f32 1.0, %v4516
      %v4518 = vmul.f32 %v4515, %v4517
      %v4519 = vadd.f32 %v4515, %v4518
      %vm4520 = vweird.f32 %v4511
      %vm4521 = vweird.f32 %v4515
      %vm4522 = vmor %vm4520, %vm4521
      %v4523 = vsel %vm4522, %v4515, %v4519
      %v4524 = vand.u32 2147483647, %v4511
      %vm4525 = vcmp.eq.f32.partialorder %v4524, 8.507059e+37
      %v4526 = vand.u32 %v4511, 2147483648
      %v4527 = vor.u32 1.1754944e-38, %v4526
      %v4528 = vsel %vm4525, %v4527, %v4523
      %v4529 = vmul.f32 1.0, %v4528
      %v4530 = vrcp.pop %v4512
      %v4531 = vmul.f32 %v4512, %v4530
      %v4532 = vsub.f32 1.0, %v4531
      %v4533 = vmul.f32 %v4530, %v4532
      %v4534 = vadd.f32 %v4530, %v4533
      %vm4535 = vweird.f32 %v4512
      %vm4536 = vweird.f32 %v4530
      %vm4537 = vmor %vm4535, %vm4536
      %v4538 = vsel %vm4537, %v4530, %v4534
      %v4539 = vand.u32 2147483647, %v4512
      %vm4540 = vcmp.eq.f32.partialorder %v4539, 8.507059e+37
      %v4541 = vand.u32 %v4512, 2147483648
      %v4542 = vor.u32 1.1754944e-38, %v4541
      %v4543 = vsel %vm4540, %v4542, %v4538
      %v4544 = vmul.f32 1.0, %v4543
      %v4545 = vrcp.pop %v4513
      %v4546 = vmul.f32 %v4513, %v4545
      %v4547 = vsub.f32 1.0, %v4546
      %v4548 = vmul.f32 %v4545, %v4547
      %v4549 = vadd.f32 %v4545, %v4548
      %vm4550 = vweird.f32 %v4513
      %vm4551 = vweird.f32 %v4545
      %vm4552 = vmor %vm4550, %vm4551
      %v4553 = vsel %vm4552, %v4545, %v4549
      %v4554 = vand.u32 2147483647, %v4513
      %vm4555 = vcmp.eq.f32.partialorder %v4554, 8.507059e+37
      %v4556 = vand.u32 %v4513, 2147483648
      %v4557 = vor.u32 1.1754944e-38, %v4556
      %v4558 = vsel %vm4555, %v4557, %v4553
      %v4559 = vmul.f32 1.0, %v4558
      %v4560 = vrcp.pop %v4514
      %v4561 = vmul.f32 %v4514, %v4560
      %v4562 = vsub.f32 1.0, %v4561
      %v4563 = vmul.f32 %v4560, %v4562
      %v4564 = vadd.f32 %v4560, %v4563
      %vm4565 = vweird.f32 %v4514
      %vm4566 = vweird.f32 %v4560
      %vm4567 = vmor %vm4565, %vm4566
      %v4568 = vsel %vm4567, %v4560, %v4564
      %v4569 = vand.u32 2147483647, %v4514
      %vm4570 = vcmp.eq.f32.partialorder %v4569, 8.507059e+37
      %v4571 = vand.u32 %v4514, 2147483648
      %v4572 = vor.u32 1.1754944e-38, %v4571
      %v4573 = vsel %vm4570, %v4572, %v4568
      %v4574 = vmul.f32 1.0, %v4573
      %v4575 = vmul.f32 %v2381, %v4529
      %v4576 = vmul.f32 %v2382, %v4544
      %v4577 = vmul.f32 %v2383, %v4559
      %v4578 = vmul.f32 %v2384, %v4574
      %4579 = vst [vmem:[%s521] sm:$0xff] %v4575
      %4580 = vst [vmem:[%s521 + $0x8] sm:$0xff] %v4576
      %4581 = vst [vmem:[%s521 + $0x10] sm:$0xff] %v4577
      %4582 = vst [vmem:[%s521 + $0x18] sm:$0xff] %v4578
      %p4583 = scmp.lt.s32.totalorder %s27, 1
      %s4584 = scalar_select %p4583, %s27, 1
      %s4585 = smul.addr %s4584, 4
      %s4586 = smul.addr %s4585, 8
      %s4587 = scalar_lea.vmem %s16, %s4586
      // Predicated region
      $region85: #{maf_forward.1} parent=83 // pred_check
        %p4588 = pneg %p386
      $region86: #{maf_forward.1} parent=83 // pred_check_branch
        %4590 = sbr.rel (%p4588) target = $region88
      $region87: #{maf_forward.1} parent=83 // pred_region
        _
      $region88: #{maf_forward.1} parent=83 // pred_fallthru
        _
    $region84: #{maf_forward.1} parent=5 // pred_fallthru
      _
    %p4591 = scmp.le.s32.totalorder 2, %s22
    // Predicated region
    $region89: #{maf_forward.1} parent=5 // pred_check
      %p4592 = pneg %p4591
    $region90: #{maf_forward.1} parent=5 // pred_check_branch
      %4594 = sbr.rel (%p4592) target = $region92
    $region91: #{maf_forward.1} parent=5 // pred_region
      %s4595 = ssub.s32 %s22, 2
      // Predicated region
      $region93: #{maf_forward.1} parent=91 // pred_check
        %p4596 = pneg %p392
      $region94: #{maf_forward.1} parent=91 // pred_check_branch
        %4598 = sbr.rel (%p4596) target = $region96
      $region95: #{maf_forward.1} parent=91 // pred_region
        %p4599 = scmp.lt.s32.totalorder %s28, 1
        %s4600 = scalar_select %p4599, %s28, 1
        %s4601 = smul.addr %s4600, 4
        %s4602 = smul.addr %s4601, 8
        %s4603 = scalar_lea.vmem %s16, %s4602
      $region96: #{maf_forward.1} parent=91 // pred_fallthru
        _
    $region92: #{maf_forward.1} parent=5 // pred_fallthru
      _
  $region6: #{maf_forward.1} parent=0 // loop_footer
    %s26 = sadd.s32 1, %s22
  $region7: #{maf_forward.1} parent=0 // loop_footer_branch
    %21 = sbr.rel target = $region3
  $region8: #{maf_forward.1} parent=0 // loop_exit
    _

</llo_original>
